<compile_context>
chip_gen: v7x
topology: tpu7x:2x2x1
jax: 0.10.0
libtpu: 0.0.40
codegen_flags: <defaults>
</compile_context>

<pallas_src>
import functools

import jax
import jax.numpy as jnp
from jax.experimental import pallas as pl
from jax.experimental.pallas import tpu as pltpu

EPS_BN = 1e-5
EPS_LN = 1e-5


def _round_up(v, m):
    return ((v + m - 1) // m) * m


def _vmem_capacity_bytes():
    try:
        info = pltpu.get_tpu_info()
        for attr in ("vmem_capacity_bytes", "vmem_bytes", "vmem_size_bytes"):
            v = getattr(info, attr, None)
            if v:
                return int(v)
    except Exception:
        pass
    return 64 * 1024 * 1024  # conservative fallback (v7x per-core VMEM)


# ---------------------------------------------------------------------------
# Kernel 1: input projection (Linear, no bias) + per-batch-tile partial
# sum / sum-of-squares for BatchNorm statistics. Grid = (batch tiles
# [parallel], time tiles [arbitrary]); W.T stays resident in VMEM. The BN
# normalization itself is applied later, fused into the recurrent kernel, so
# only raw wx is written to HBM.
# ---------------------------------------------------------------------------
def _proj_stats_kernel(x_ref, wT_ref, wx_ref, s1_ref, s2_ref, *, bt, tt, f_p, two_h):
    @pl.when(pl.program_id(1) == 0)
    def _():
        s1_ref[...] = jnp.zeros_like(s1_ref)
        s2_ref[...] = jnp.zeros_like(s2_ref)

    # (bt, tt, F_p) -> (bt*tt, F_p): tt % 8 == 0 and F_p % 128 == 0, so this
    # merge follows native (8,128) tiling (no relayout).
    x2 = x_ref[...].reshape(bt * tt, f_p)
    wx = jnp.dot(x2, wT_ref[...], preferred_element_type=jnp.float32)
    wx_ref[...] = wx.reshape(bt, tt, two_h)

    # Keep 8 sublane residue classes separate; the final (tiny) reduction over
    # all tiles and sublanes happens in JAX.
    wx8 = wx.reshape(bt * tt // 8, 8, two_h)
    s1_ref[...] += jnp.sum(wx8, axis=0)
    s2_ref[...] += jnp.sum(wx8 * wx8, axis=0)


# ---------------------------------------------------------------------------
# Kernel 2: the recurrent LiGRU cell.
# Grid = (batch tiles [parallel], time chunks [arbitrary, sequential]).
# BN statistics are applied per timestep (fused), the hidden state lives in a
# persistent VMEM scratch, U.T and the BN row stay resident in VMEM.
# ---------------------------------------------------------------------------
def _ligru_recurrent_kernel(bn_ref, w_ref, uT_ref, o_ref, h_ref,
                            *, time_chunk, h_pad, ln_inv_n):
    @pl.when(pl.program_id(1) == 0)
    def _():
        h_ref[...] = jnp.zeros_like(h_ref)        # h_init is zeros

    mean = bn_ref[0]                              # (2H_p,)
    inv_std = bn_ref[1]                           # (2H_p,)
    u = uT_ref[...]                               # (H_p, 2H_p)

    h = h_ref[...]                                # (bt, H_p) f32
    for t in range(time_chunk):                   # fully unrolled
        # Fused BatchNorm apply on just this timestep (low vreg pressure).
        w_t = (w_ref[:, t, :] - mean) * inv_std   # (bt, 2H_p)
        uh = jnp.dot(h.astype(u.dtype), u, preferred_element_type=jnp.float32)
        # One-pass LayerNorm stats over the real 2H columns (padded cols = 0).
        s1 = jnp.sum(uh, axis=-1, keepdims=True)
        s2 = jnp.sum(uh * uh, axis=-1, keepdims=True)
        mu = s1 * ln_inv_n
        var = jnp.maximum(s2 * ln_inv_n - mu * mu, 0.0)
        uh_ln = (uh - mu) * jax.lax.rsqrt(var + EPS_LN)

        gates = w_t + uh_ln
        z = jax.nn.sigmoid(gates[:, h_pad:])      # lane-aligned halves
        hcand = jnp.maximum(gates[:, :h_pad], 0.0)
        h = hcand + z * (h - hcand)               # == z*h + (1-z)*hcand
        o_ref[:, t, :] = h                        # per-step lane-dense store

    h_ref[...] = h


# ---------------------------------------------------------------------------
# Wrapper
# ---------------------------------------------------------------------------
def ligru_layer_forward(x, W, U, *, time_chunk=8, batch_block=None,
                        matmul_dtype=jnp.bfloat16):
    """x: (B, T, F); W: (2H, F); U: (2H, H). Returns (B, T, H) float32."""
    B, T, F = x.shape
    H2, F_in = W.shape
    H = H2 // 2
    assert F_in == F and U.shape == (H2, H)
    assert time_chunk > 0 and time_chunk % 8 == 0

    f32 = jnp.float32
    mdt = jnp.dtype(matmul_dtype)
    msz = mdt.itemsize
    TC = time_chunk

    # ---- padded sizes (lane-aligned gate halves, 8-sublane batch tiles) ----
    H_p = _round_up(H, 128)
    F_p = _round_up(F, 128)
    two_h = 2 * H_p

    # Batch tile: at least 2 tiles whenever B allows it (keeps the second
    # TensorCore busy on v7x for the serial-in-time recurrence).
    if batch_block is None:
        bt = 8 if B <= 8 else min(128, _round_up((B + 1) // 2, 8))
    else:
        assert batch_block % 8 == 0
        bt = batch_block

    cap = _vmem_capacity_bytes()
    budget = max(16 << 20, min(int(cap * 0.7), cap - (16 << 20)))

    def plan(bt_):
        # Stage-1 time tile: grow toward ~512-1024 rows/tile without exceeding
        # the (padded) sequence length.
        t_ceil = _round_up(T, TC)
        k = 1
        while bt_ * TC * (2 * k) <= 1024 and TC * (2 * k) <= t_ceil:
            k *= 2
        tt1_ = TC * k
        T_p_ = _round_up(T, tt1_)
        B_p_ = _round_up(B, bt_)
        stage1 = (2 * bt_ * tt1_ * F_p * msz        # x blocks (double-buffered)
                  + 2 * F_p * two_h * msz           # resident W.T
                  + 2 * bt_ * tt1_ * two_h * 4      # wx blocks
                  + 4 * 8 * two_h * 4)              # s1/s2
        stage2 = (2 * 2 * two_h * 4                 # bn
                  + 2 * bt_ * TC * two_h * 4        # w blocks
                  + 2 * H_p * two_h * msz           # resident U.T
                  + 2 * bt_ * TC * H_p * 4          # output blocks
                  + bt_ * H_p * 4)                  # h scratch
        return tt1_, T_p_, B_p_, stage1, stage2

    tt1, T_p, B_p, s1_bytes, s2_bytes = plan(bt)
    while bt > 8 and max(s1_bytes, s2_bytes) > budget:
        bt = max(8, _round_up(bt // 2, 8))
        tt1, T_p, B_p, s1_bytes, s2_bytes = plan(bt)
    # TODO(synk): for extreme H/F even bt=8 can exceed the v7x budget; that
    # needs pl.Buffered(1) on the resident-weight specs or K-tiling of U.T.

    def vmem_limit(needed):
        return int(min(max(needed + (4 << 20), 32 << 20),
                       max(cap - (8 << 20), 32 << 20)))

    nb = B_p // bt
    nt1 = T_p // tt1
    nt2 = T_p // TC

    # ---- padded, pre-transposed weights. Gate halves are padded
    # independently so the a/z split lands on a 128-lane boundary; padded
    # rows/cols are zero, so BN/LN statistics of real channels are unaffected.
    # Built as a single fused pad/concat each (no standalone HBM transpose
    # feeding the kernels).
    def pad_gates_t(Mt, in_dim, in_dim_p):        # Mt: (in_dim, 2H)
        Ma = jnp.pad(Mt[:, :H], ((0, in_dim_p - in_dim), (0, H_p - H)))
        Mz = jnp.pad(Mt[:, H:], ((0, in_dim_p - in_dim), (0, H_p - H)))
        return jnp.concatenate([Ma, Mz], axis=1)  # (in_dim_p, 2*H_p)

    WT_p = pad_gates_t(W.astype(f32).T, F, F_p).astype(mdt)   # (F_p, 2H_p)
    UT_p = pad_gates_t(U.astype(f32).T, H, H_p).astype(mdt)   # (H_p, 2H_p)
    x_p = jnp.pad(x, ((0, B_p - B), (0, T_p - T), (0, F_p - F))).astype(mdt)

    # ---- stage 1: wx = x @ W.T (+ BN partial statistics) ----
    proj = functools.partial(_proj_stats_kernel, bt=bt, tt=tt1, f_p=F_p, two_h=two_h)
    wx, s1, s2 = pl.pallas_call(
        proj,
        out_shape=(
            jax.ShapeDtypeStruct((B_p, T_p, two_h), f32),
            jax.ShapeDtypeStruct((nb * 8, two_h), f32),
            jax.ShapeDtypeStruct((nb * 8, two_h), f32),
        ),
        grid_spec=pltpu.PrefetchScalarGridSpec(
            num_scalar_prefetch=0,
            grid=(nb, nt1),
            in_specs=[
                pl.BlockSpec((bt, tt1, F_p), lambda i, j: (i, j, 0)),
                pl.BlockSpec((F_p, two_h), lambda i, j: (0, 0)),
            ],
            out_specs=[
                pl.BlockSpec((bt, tt1, two_h), lambda i, j: (i, j, 0)),
                pl.BlockSpec((8, two_h), lambda i, j: (i, 0)),
                pl.BlockSpec((8, two_h), lambda i, j: (i, 0)),
            ],
        ),
        compiler_params=pltpu.CompilerParams(
            dimension_semantics=("parallel", "arbitrary"),
            vmem_limit_bytes=vmem_limit(s1_bytes),
        ),
    )(x_p, WT_p)

    # ---- finalize BatchNorm statistics (tiny; real B*T rows only, since
    # padded rows produce wx == 0 and contribute nothing to the sums) ----
    n_real = jnp.float32(B * T)
    total1 = jnp.sum(s1, axis=0)
    total2 = jnp.sum(s2, axis=0)
    mean = total1 / n_real
    var = jnp.maximum(total2 / n_real - mean * mean, 0.0)
    inv_std = jax.lax.rsqrt(var + EPS_BN)
    bn = jnp.stack([mean, inv_std], axis=0)       # (2, 2H_p)

    # ---- stage 2: recurrent cell over time chunks ----
    rec = functools.partial(_ligru_recurrent_kernel, time_chunk=TC, h_pad=H_p,
                            ln_inv_n=1.0 / float(2 * H))
    h_out = pl.pallas_call(
        rec,
        out_shape=jax.ShapeDtypeStruct((B_p, T_p, H_p), f32),
        grid_spec=pltpu.PrefetchScalarGridSpec(
            num_scalar_prefetch=0,
            grid=(nb, nt2),
            in_specs=[
                pl.BlockSpec((2, two_h), lambda b, t: (0, 0)),
                pl.BlockSpec((bt, TC, two_h), lambda b, t: (b, t, 0)),
                pl.BlockSpec((H_p, two_h), lambda b, t: (0, 0)),
            ],
            out_specs=pl.BlockSpec((bt, TC, H_p), lambda b, t: (b, t, 0)),
            scratch_shapes=[pltpu.VMEM((bt, H_p), f32)],
        ),
        compiler_params=pltpu.CompilerParams(
            dimension_semantics=("parallel", "arbitrary"),
            vmem_limit_bytes=vmem_limit(s2_bytes),
        ),
    )(bn, wx, UT_p)

    return h_out[:B, :T, :H]


# ---------------------------------------------------------------------------
# Pure-JAX reference (mirror of the PyTorch _ligru_cell_cpu path).
# ---------------------------------------------------------------------------
def ligru_reference(x, W, U):
    B, T, F = x.shape
    H = W.shape[0] // 2
    wx = x.reshape(B * T, F) @ W.T
    mean = wx.mean(axis=0)
    var = ((wx - mean) ** 2).mean(axis=0)
    wx = (wx - mean) / jnp.sqrt(var + EPS_BN)
    w = wx.reshape(B, T, 2 * H)

    ht = jnp.zeros((B, H), jnp.float32)
    hs = []
    for k in range(T):
        uh = ht @ U.T
        mu = uh.mean(axis=-1, keepdims=True)
        v = ((uh - mu) ** 2).mean(axis=-1, keepdims=True)
        uh = (uh - mu) / jnp.sqrt(v + EPS_LN)
        gates = w[:, k] + uh
        at, ztr = gates[:, :H], gates[:, H:]
        zt = jax.nn.sigmoid(ztr)
        hcand = jnp.maximum(at, 0.0)
        ht = zt * ht + (1.0 - zt) * hcand
        hs.append(ht)
    return jnp.stack(hs, axis=1)


if __name__ == "__main__":
    # Small deterministic setup: B=2, T=8, input_size=16, hidden_size=32.
    B, T, F, H = 2, 8, 16, 32
    key = jax.random.PRNGKey(0)
    kx, kw, ku = jax.random.split(key, 3)

    x = jax.random.normal(kx, (B, T, F), dtype=jnp.float32)
    # nn.Linear(input_size, 2*hidden) / nn.Linear(hidden, 2*hidden) weights
    # (deterministic synthetic init, not a checkpoint load).
    W = 0.1 * jax.random.normal(kw, (2 * H, F), dtype=jnp.float32)
    U = 0.1 * jax.random.normal(ku, (2 * H, H), dtype=jnp.float32)

    ref = ligru_reference(x, W, U)

    # Exact-numerics path (f32 matmuls): strict check.
    fwd_f32 = jax.jit(functools.partial(ligru_layer_forward, matmul_dtype=jnp.float32))
    out = jax.block_until_ready(fwd_f32(x, W, U))
    assert out.shape == (B, T, H)
    err_f32 = float(jnp.max(jnp.abs(out - ref)))
    assert jnp.allclose(out, ref, atol=1e-3, rtol=1e-3), f"f32 mismatch: {err_f32}"

    # Default fast path (bf16 MXU inputs, f32 accumulation): loose check.
    fwd_bf16 = jax.jit(ligru_layer_forward)
    out_bf16 = jax.block_until_ready(fwd_bf16(x, W, U))
    err_bf16 = float(jnp.max(jnp.abs(out_bf16 - ref)))
    assert jnp.allclose(out_bf16, ref, atol=1e-1, rtol=1e-1), f"bf16 mismatch: {err_bf16}"

    print("KERNEL_OK")
</pallas_src>

<mosaic_0001>
module attributes {stable_mosaic.version = 11 : i64} {
  func.func @_proj_stats_kernel(%arg0: i32, %arg1: i32, %arg2: memref<8x8x128xf32, #tpu.memory_space<vmem>>, %arg3: memref<128x256xf32, #tpu.memory_space<vmem>>, %arg4: memref<8x8x256xf32, #tpu.memory_space<vmem>>, %arg5: memref<8x256xf32, #tpu.memory_space<vmem>>, %arg6: memref<8x256xf32, #tpu.memory_space<vmem>>) attributes {dimension_semantics = [#tpu.dimension_semantics<parallel>, #tpu.dimension_semantics<arbitrary>], iteration_bounds = array<i64: 1, 1>, scalar_prefetch = 0 : i64, scratch_operands = 0 : i64, tpu.core_type = #tpu.core_type<tc>, window_params = [{transform_indices = @transform_0, window_bounds = array<i64: 8, 8, 128>}, {pipeline_mode = #tpu.pipeline_mode<synchronous>, transform_indices = @transform_1, window_bounds = array<i64: 128, 256>}, {transform_indices = @transform_2, window_bounds = array<i64: 8, 8, 256>}, {transform_indices = @transform_3, window_bounds = array<i64: 8, 256>}, {transform_indices = @transform_4, window_bounds = array<i64: 8, 256>}]} {
    %c0_i32 = arith.constant 0 : i32
    %0 = arith.cmpi eq, %arg1, %c0_i32 : i32
    %1 = arith.extui %0 : i1 to i32
    %c0_i32_0 = arith.constant 0 : i32
    %2 = arith.cmpi ne, %1, %c0_i32_0 : i32
    scf.if %2 {
      %cst_18 = arith.constant 0.000000e+00 : f32
      %19 = vector.broadcast %cst_18 : f32 to vector<8x256xf32>
      %c0_19 = arith.constant 0 : index
      %c0_20 = arith.constant 0 : index
      %20 = vector.load %arg5[%c0_19, %c0_20] : memref<8x256xf32, #tpu.memory_space<vmem>>, vector<8x256xf32>
      tpu.vector_store %arg5[%c0_19, %c0_20], %19 {strides = array<i32>} : memref<8x256xf32, #tpu.memory_space<vmem>>, vector<8x256xf32>,
      %cst_21 = arith.constant 0.000000e+00 : f32
      %21 = vector.broadcast %cst_21 : f32 to vector<8x256xf32>
      %c0_22 = arith.constant 0 : index
      %c0_23 = arith.constant 0 : index
      %22 = vector.load %arg6[%c0_22, %c0_23] : memref<8x256xf32, #tpu.memory_space<vmem>>, vector<8x256xf32>
      tpu.vector_store %arg6[%c0_22, %c0_23], %21 {strides = array<i32>} : memref<8x256xf32, #tpu.memory_space<vmem>>, vector<8x256xf32>,
    } else {
    }
    %c0 = arith.constant 0 : index
    %c0_1 = arith.constant 0 : index
    %c0_2 = arith.constant 0 : index
    %3 = vector.load %arg2[%c0, %c0_1, %c0_2] : memref<8x8x128xf32, #tpu.memory_space<vmem>>, vector<8x8x128xf32>
    %4 = vector.shape_cast %3 : vector<8x8x128xf32> to vector<64x128xf32>
    %c0_3 = arith.constant 0 : index
    %c0_4 = arith.constant 0 : index
    %5 = vector.load %arg3[%c0_3, %c0_4] : memref<128x256xf32, #tpu.memory_space<vmem>>, vector<128x256xf32>
    %cst = arith.constant dense<0.000000e+00> : vector<64x256xf32>
    %6 = tpu.matmul %4, %5, %cst {dimension_numbers = #tpu.dot_dimension_numbers<[1], [0], [0], [1], [0, 0, 1, 1], [], []>} : vector<64x128xf32>, vector<128x256xf32>, vector<64x256xf32> -> vector<64x256xf32>
    %7 = vector.shape_cast %6 : vector<64x256xf32> to vector<8x8x256xf32>
    %c0_5 = arith.constant 0 : index
    %c0_6 = arith.constant 0 : index
    %c0_7 = arith.constant 0 : index
    %8 = vector.load %arg4[%c0_5, %c0_6, %c0_7] : memref<8x8x256xf32, #tpu.memory_space<vmem>>, vector<8x8x256xf32>
    tpu.vector_store %arg4[%c0_5, %c0_6, %c0_7], %7 {strides = array<i32>} : memref<8x8x256xf32, #tpu.memory_space<vmem>>, vector<8x8x256xf32>,
    %9 = vector.shape_cast %6 : vector<64x256xf32> to vector<8x8x256xf32>
    %c0_8 = arith.constant 0 : index
    %c0_9 = arith.constant 0 : index
    %10 = vector.load %arg5[%c0_8, %c0_9] : memref<8x256xf32, #tpu.memory_space<vmem>>, vector<8x256xf32>
    %cst_10 = arith.constant dense<0.000000e+00> : vector<8x256xf32>
    %11 = vector.multi_reduction <add>, %9, %cst_10 [0] : vector<8x8x256xf32> to vector<8x256xf32>
    %12 = arith.addf %10, %11 : vector<8x256xf32>
    %c0_11 = arith.constant 0 : index
    %c0_12 = arith.constant 0 : index
    %13 = vector.load %arg5[%c0_11, %c0_12] : memref<8x256xf32, #tpu.memory_space<vmem>>, vector<8x256xf32>
    tpu.vector_store %arg5[%c0_11, %c0_12], %12 {strides = array<i32>} : memref<8x256xf32, #tpu.memory_space<vmem>>, vector<8x256xf32>,
    %c0_13 = arith.constant 0 : index
    %c0_14 = arith.constant 0 : index
    %14 = vector.load %arg6[%c0_13, %c0_14] : memref<8x256xf32, #tpu.memory_space<vmem>>, vector<8x256xf32>
    %15 = arith.mulf %9, %9 : vector<8x8x256xf32>
    %cst_15 = arith.constant dense<0.000000e+00> : vector<8x256xf32>
    %16 = vector.multi_reduction <add>, %15, %cst_15 [0] : vector<8x8x256xf32> to vector<8x256xf32>
    %17 = arith.addf %14, %16 : vector<8x256xf32>
    %c0_16 = arith.constant 0 : index
    %c0_17 = arith.constant 0 : index
    %18 = vector.load %arg6[%c0_16, %c0_17] : memref<8x256xf32, #tpu.memory_space<vmem>>, vector<8x256xf32>
    tpu.vector_store %arg6[%c0_16, %c0_17], %17 {strides = array<i32>} : memref<8x256xf32, #tpu.memory_space<vmem>>, vector<8x256xf32>,
    return
  }
  func.func @transform_0(%arg0: i32, %arg1: i32) -> (i32, i32, i32) {
    %c0_i32 = arith.constant 0 : i32
    %c0_i32_0 = arith.constant 0 : i32
    return %arg0, %arg1, %c0_i32 : i32, i32, i32
  }
  func.func @transform_1(%arg0: i32, %arg1: i32) -> (i32, i32) {
    %c0_i32 = arith.constant 0 : i32
    %c0_i32_0 = arith.constant 0 : i32
    %c0_i32_1 = arith.constant 0 : i32
    return %c0_i32, %c0_i32_0 : i32, i32
  }
  func.func @transform_2(%arg0: i32, %arg1: i32) -> (i32, i32, i32) {
    %c0_i32 = arith.constant 0 : i32
    %c0_i32_0 = arith.constant 0 : i32
    return %arg0, %arg1, %c0_i32 : i32, i32, i32
  }
  func.func @transform_3(%arg0: i32, %arg1: i32) -> (i32, i32) {
    %c0_i32 = arith.constant 0 : i32
    %c0_i32_0 = arith.constant 0 : i32
    return %arg0, %c0_i32 : i32, i32
  }
  func.func @transform_4(%arg0: i32, %arg1: i32) -> (i32, i32) {
    %c0_i32 = arith.constant 0 : i32
    %c0_i32_0 = arith.constant 0 : i32
    return %arg0, %c0_i32 : i32, i32
  }
}

module attributes {stable_mosaic.version = 11 : i64} {
  func.func @_ligru_recurrent_kernel(%arg0: i32, %arg1: i32, %arg2: memref<2x256xf32, #tpu.memory_space<vmem>>, %arg3: memref<8x8x256xf32, #tpu.memory_space<vmem>>, %arg4: memref<128x256xf32, #tpu.memory_space<vmem>>, %arg5: memref<8x8x128xf32, #tpu.memory_space<vmem>>, %arg6: memref<8x128xf32, #tpu.memory_space<vmem>>) attributes {dimension_semantics = [#tpu.dimension_semantics<parallel>, #tpu.dimension_semantics<arbitrary>], iteration_bounds = array<i64: 1, 1>, scalar_prefetch = 0 : i64, scratch_operands = 1 : i64, tpu.core_type = #tpu.core_type<tc>, window_params = [{pipeline_mode = #tpu.pipeline_mode<synchronous>, transform_indices = @transform_0, window_bounds = array<i64: 2, 256>}, {transform_indices = @transform_1, window_bounds = array<i64: 8, 8, 256>}, {pipeline_mode = #tpu.pipeline_mode<synchronous>, transform_indices = @transform_2, window_bounds = array<i64: 128, 256>}, {transform_indices = @transform_3, window_bounds = array<i64: 8, 8, 128>}]} {
    %c0_i32 = arith.constant 0 : i32
    %0 = arith.cmpi eq, %arg1, %c0_i32 : i32
    %1 = arith.extui %0 : i1 to i32
    %c0_i32_0 = arith.constant 0 : i32
    %2 = arith.cmpi ne, %1, %c0_i32_0 : i32
    scf.if %2 {
      %cst_122 = arith.constant 0.000000e+00 : f32
      %370 = vector.broadcast %cst_122 : f32 to vector<8x128xf32>
      %c0_123 = arith.constant 0 : index
      %c0_124 = arith.constant 0 : index
      %371 = vector.load %arg6[%c0_123, %c0_124] : memref<8x128xf32, #tpu.memory_space<vmem>>, vector<8x128xf32>
      tpu.vector_store %arg6[%c0_123, %c0_124], %370 {strides = array<i32>} : memref<8x128xf32, #tpu.memory_space<vmem>>, vector<8x128xf32>,
    } else {
    }
    %c0 = arith.constant 0 : index
    %c0_1 = arith.constant 0 : index
    %3 = vector.load %arg2[%c0, %c0_1] : memref<2x256xf32, #tpu.memory_space<vmem>>, vector<1x256xf32>
    %4 = vector.shape_cast %3 : vector<1x256xf32> to vector<256xf32>
    %c1 = arith.constant 1 : index
    %c0_2 = arith.constant 0 : index
    %5 = vector.load %arg2[%c1, %c0_2] : memref<2x256xf32, #tpu.memory_space<vmem>>, vector<1x256xf32>
    %6 = vector.shape_cast %5 : vector<1x256xf32> to vector<256xf32>
    %c0_3 = arith.constant 0 : index
    %c0_4 = arith.constant 0 : index
    %7 = vector.load %arg4[%c0_3, %c0_4] : memref<128x256xf32, #tpu.memory_space<vmem>>, vector<128x256xf32>
    %c0_5 = arith.constant 0 : index
    %c0_6 = arith.constant 0 : index
    %8 = vector.load %arg6[%c0_5, %c0_6] : memref<8x128xf32, #tpu.memory_space<vmem>>, vector<8x128xf32>
    %c0_7 = arith.constant 0 : index
    %c0_8 = arith.constant 0 : index
    %c0_9 = arith.constant 0 : index
    %9 = vector.load %arg3[%c0_7, %c0_8, %c0_9] : memref<8x8x256xf32, #tpu.memory_space<vmem>>, vector<8x1x256xf32>
    %10 = vector.shape_cast %9 : vector<8x1x256xf32> to vector<8x256xf32>
    %11 = vector.shape_cast %4 : vector<256xf32> to vector<1x256xf32>
    %12 = vector.broadcast %11 : vector<1x256xf32> to vector<8x256xf32>
    %13 = arith.subf %10, %12 : vector<8x256xf32>
    %14 = vector.shape_cast %6 : vector<256xf32> to vector<1x256xf32>
    %15 = vector.broadcast %14 : vector<1x256xf32> to vector<8x256xf32>
    %16 = arith.mulf %13, %15 : vector<8x256xf32>
    %cst = arith.constant dense<0.000000e+00> : vector<8x256xf32>
    %17 = tpu.matmul %8, %7, %cst {dimension_numbers = #tpu.dot_dimension_numbers<[1], [0], [0], [1], [0, 0, 1, 1], [], []>} : vector<8x128xf32>, vector<128x256xf32>, vector<8x256xf32> -> vector<8x256xf32>
    %cst_10 = arith.constant dense<0.000000e+00> : vector<8xf32>
    %18 = vector.multi_reduction <add>, %17, %cst_10 [1] : vector<8x256xf32> to vector<8xf32>
    %19 = vector.shape_cast %18 : vector<8xf32> to vector<8x1xf32>
    %20 = arith.mulf %17, %17 : vector<8x256xf32>
    %cst_11 = arith.constant dense<0.000000e+00> : vector<8xf32>
    %21 = vector.multi_reduction <add>, %20, %cst_11 [1] : vector<8x256xf32> to vector<8xf32>
    %22 = vector.shape_cast %21 : vector<8xf32> to vector<8x1xf32>
    %cst_12 = arith.constant 1.562500e-02 : f32
    %23 = vector.broadcast %cst_12 : f32 to vector<8x1xf32>
    %24 = arith.mulf %19, %23 : vector<8x1xf32>
    %cst_13 = arith.constant 1.562500e-02 : f32
    %25 = vector.broadcast %cst_13 : f32 to vector<8x1xf32>
    %26 = arith.mulf %22, %25 : vector<8x1xf32>
    %27 = arith.mulf %24, %24 : vector<8x1xf32>
    %28 = arith.subf %26, %27 : vector<8x1xf32>
    %cst_14 = arith.constant 0.000000e+00 : f32
    %29 = vector.broadcast %cst_14 : f32 to vector<8x1xf32>
    %30 = arith.maximumf %28, %29 : vector<8x1xf32>
    %31 = vector.broadcast %24 : vector<8x1xf32> to vector<8x256xf32>
    %32 = arith.subf %17, %31 : vector<8x256xf32>
    %cst_15 = arith.constant 9.99999974E-6 : f32
    %33 = vector.broadcast %cst_15 : f32 to vector<8x1xf32>
    %34 = arith.addf %30, %33 : vector<8x1xf32>
    %35 = math.rsqrt %34 : vector<8x1xf32>
    %36 = vector.broadcast %35 : vector<8x1xf32> to vector<8x256xf32>
    %37 = arith.mulf %32, %36 : vector<8x256xf32>
    %38 = arith.addf %16, %37 : vector<8x256xf32>
    %39 = vector.extract_strided_slice %38 {offsets = [0, 128], sizes = [8, 128], strides = [1, 1]} : vector<8x256xf32> to vector<8x128xf32>
    %40 = arith.negf %39 : vector<8x128xf32>
    %41 = math.exp %40 : vector<8x128xf32>
    %cst_16 = arith.constant 1.000000e+00 : f32
    %42 = vector.broadcast %cst_16 : f32 to vector<8x128xf32>
    %43 = arith.addf %42, %41 : vector<8x128xf32>
    %44 = arith.divf %42, %43 : vector<8x128xf32>
    %45 = vector.extract_strided_slice %38 {offsets = [0, 0], sizes = [8, 128], strides = [1, 1]} : vector<8x256xf32> to vector<8x128xf32>
    %cst_17 = arith.constant 0.000000e+00 : f32
    %46 = vector.broadcast %cst_17 : f32 to vector<8x128xf32>
    %47 = arith.maximumf %45, %46 : vector<8x128xf32>
    %48 = arith.subf %8, %47 : vector<8x128xf32>
    %49 = arith.mulf %44, %48 : vector<8x128xf32>
    %50 = arith.addf %47, %49 : vector<8x128xf32>
    %c0_18 = arith.constant 0 : index
    %c0_19 = arith.constant 0 : index
    %c0_20 = arith.constant 0 : index
    %51 = vector.load %arg5[%c0_18, %c0_19, %c0_20] : memref<8x8x128xf32, #tpu.memory_space<vmem>>, vector<8x1x128xf32>
    %52 = vector.shape_cast %51 : vector<8x1x128xf32> to vector<8x128xf32>
    %53 = vector.shape_cast %50 : vector<8x128xf32> to vector<8x1x128xf32>
    tpu.vector_store %arg5[%c0_18, %c0_19, %c0_20], %53 {strides = array<i32>} : memref<8x8x128xf32, #tpu.memory_space<vmem>>, vector<8x1x128xf32>,
    %c0_21 = arith.constant 0 : index
    %c1_22 = arith.constant 1 : index
    %c0_23 = arith.constant 0 : index
    %54 = vector.load %arg3[%c0_21, %c1_22, %c0_23] : memref<8x8x256xf32, #tpu.memory_space<vmem>>, vector<8x1x256xf32>
    %55 = vector.shape_cast %54 : vector<8x1x256xf32> to vector<8x256xf32>
    %56 = vector.shape_cast %4 : vector<256xf32> to vector<1x256xf32>
    %57 = vector.broadcast %56 : vector<1x256xf32> to vector<8x256xf32>
    %58 = arith.subf %55, %57 : vector<8x256xf32>
    %59 = vector.shape_cast %6 : vector<256xf32> to vector<1x256xf32>
    %60 = vector.broadcast %59 : vector<1x256xf32> to vector<8x256xf32>
    %61 = arith.mulf %58, %60 : vector<8x256xf32>
    %cst_24 = arith.constant dense<0.000000e+00> : vector<8x256xf32>
    %62 = tpu.matmul %50, %7, %cst_24 {dimension_numbers = #tpu.dot_dimension_numbers<[1], [0], [0], [1], [0, 0, 1, 1], [], []>} : vector<8x128xf32>, vector<128x256xf32>, vector<8x256xf32> -> vector<8x256xf32>
    %cst_25 = arith.constant dense<0.000000e+00> : vector<8xf32>
    %63 = vector.multi_reduction <add>, %62, %cst_25 [1] : vector<8x256xf32> to vector<8xf32>
    %64 = vector.shape_cast %63 : vector<8xf32> to vector<8x1xf32>
    %65 = arith.mulf %62, %62 : vector<8x256xf32>
    %cst_26 = arith.constant dense<0.000000e+00> : vector<8xf32>
    %66 = vector.multi_reduction <add>, %65, %cst_26 [1] : vector<8x256xf32> to vector<8xf32>
    %67 = vector.shape_cast %66 : vector<8xf32> to vector<8x1xf32>
    %cst_27 = arith.constant 1.562500e-02 : f32
    %68 = vector.broadcast %cst_27 : f32 to vector<8x1xf32>
    %69 = arith.mulf %64, %68 : vector<8x1xf32>
    %cst_28 = arith.constant 1.562500e-02 : f32
    %70 = vector.broadcast %cst_28 : f32 to vector<8x1xf32>
    %71 = arith.mulf %67, %70 : vector<8x1xf32>
    %72 = arith.mulf %69, %69 : vector<8x1xf32>
    %73 = arith.subf %71, %72 : vector<8x1xf32>
    %cst_29 = arith.constant 0.000000e+00 : f32
    %74 = vector.broadcast %cst_29 : f32 to vector<8x1xf32>
    %75 = arith.maximumf %73, %74 : vector<8x1xf32>
    %76 = vector.broadcast %69 : vector<8x1xf32> to vector<8x256xf32>
    %77 = arith.subf %62, %76 : vector<8x256xf32>
    %cst_30 = arith.constant 9.99999974E-6 : f32
    %78 = vector.broadcast %cst_30 : f32 to vector<8x1xf32>
    %79 = arith.addf %75, %78 : vector<8x1xf32>
    %80 = math.rsqrt %79 : vector<8x1xf32>
    %81 = vector.broadcast %80 : vector<8x1xf32> to vector<8x256xf32>
    %82 = arith.mulf %77, %81 : vector<8x256xf32>
    %83 = arith.addf %61, %82 : vector<8x256xf32>
    %84 = vector.extract_strided_slice %83 {offsets = [0, 128], sizes = [8, 128], strides = [1, 1]} : vector<8x256xf32> to vector<8x128xf32>
    %85 = arith.negf %84 : vector<8x128xf32>
    %86 = math.exp %85 : vector<8x128xf32>
    %cst_31 = arith.constant 1.000000e+00 : f32
    %87 = vector.broadcast %cst_31 : f32 to vector<8x128xf32>
    %88 = arith.addf %87, %86 : vector<8x128xf32>
    %89 = arith.divf %87, %88 : vector<8x128xf32>
    %90 = vector.extract_strided_slice %83 {offsets = [0, 0], sizes = [8, 128], strides = [1, 1]} : vector<8x256xf32> to vector<8x128xf32>
    %cst_32 = arith.constant 0.000000e+00 : f32
    %91 = vector.broadcast %cst_32 : f32 to vector<8x128xf32>
    %92 = arith.maximumf %90, %91 : vector<8x128xf32>
    %93 = arith.subf %50, %92 : vector<8x128xf32>
    %94 = arith.mulf %89, %93 : vector<8x128xf32>
    %95 = arith.addf %92, %94 : vector<8x128xf32>
    %c0_33 = arith.constant 0 : index
    %c1_34 = arith.constant 1 : index
    %c0_35 = arith.constant 0 : index
    %96 = vector.load %arg5[%c0_33, %c1_34, %c0_35] : memref<8x8x128xf32, #tpu.memory_space<vmem>>, vector<8x1x128xf32>
    %97 = vector.shape_cast %96 : vector<8x1x128xf32> to vector<8x128xf32>
    %98 = vector.shape_cast %95 : vector<8x128xf32> to vector<8x1x128xf32>
    tpu.vector_store %arg5[%c0_33, %c1_34, %c0_35], %98 {strides = array<i32>} : memref<8x8x128xf32, #tpu.memory_space<vmem>>, vector<8x1x128xf32>,
    %c0_36 = arith.constant 0 : index
    %c2 = arith.constant 2 : index
    %c0_37 = arith.constant 0 : index
    %99 = vector.load %arg3[%c0_36, %c2, %c0_37] : memref<8x8x256xf32, #tpu.memory_space<vmem>>, vector<8x1x256xf32>
    %100 = vector.shape_cast %99 : vector<8x1x256xf32> to vector<8x256xf32>
    %101 = vector.shape_cast %4 : vector<256xf32> to vector<1x256xf32>
    %102 = vector.broadcast %101 : vector<1x256xf32> to vector<8x256xf32>
    %103 = arith.subf %100, %102 : vector<8x256xf32>
    %104 = vector.shape_cast %6 : vector<256xf32> to vector<1x256xf32>
    %105 = vector.broadcast %104 : vector<1x256xf32> to vector<8x256xf32>
    %106 = arith.mulf %103, %105 : vector<8x256xf32>
    %cst_38 = arith.constant dense<0.000000e+00> : vector<8x256xf32>
    %107 = tpu.matmul %95, %7, %cst_38 {dimension_numbers = #tpu.dot_dimension_numbers<[1], [0], [0], [1], [0, 0, 1, 1], [], []>} : vector<8x128xf32>, vector<128x256xf32>, vector<8x256xf32> -> vector<8x256xf32>
    %cst_39 = arith.constant dense<0.000000e+00> : vector<8xf32>
    %108 = vector.multi_reduction <add>, %107, %cst_39 [1] : vector<8x256xf32> to vector<8xf32>
    %109 = vector.shape_cast %108 : vector<8xf32> to vector<8x1xf32>
    %110 = arith.mulf %107, %107 : vector<8x256xf32>
    %cst_40 = arith.constant dense<0.000000e+00> : vector<8xf32>
    %111 = vector.multi_reduction <add>, %110, %cst_40 [1] : vector<8x256xf32> to vector<8xf32>
    %112 = vector.shape_cast %111 : vector<8xf32> to vector<8x1xf32>
    %cst_41 = arith.constant 1.562500e-02 : f32
    %113 = vector.broadcast %cst_41 : f32 to vector<8x1xf32>
    %114 = arith.mulf %109, %113 : vector<8x1xf32>
    %cst_42 = arith.constant 1.562500e-02 : f32
    %115 = vector.broadcast %cst_42 : f32 to vector<8x1xf32>
    %116 = arith.mulf %112, %115 : vector<8x1xf32>
    %117 = arith.mulf %114, %114 : vector<8x1xf32>
    %118 = arith.subf %116, %117 : vector<8x1xf32>
    %cst_43 = arith.constant 0.000000e+00 : f32
    %119 = vector.broadcast %cst_43 : f32 to vector<8x1xf32>
    %120 = arith.maximumf %118, %119 : vector<8x1xf32>
    %121 = vector.broadcast %114 : vector<8x1xf32> to vector<8x256xf32>
    %122 = arith.subf %107, %121 : vector<8x256xf32>
    %cst_44 = arith.constant 9.99999974E-6 : f32
    %123 = vector.broadcast %cst_44 : f32 to vector<8x1xf32>
    %124 = arith.addf %120, %123 : vector<8x1xf32>
    %125 = math.rsqrt %124 : vector<8x1xf32>
    %126 = vector.broadcast %125 : vector<8x1xf32> to vector<8x256xf32>
    %127 = arith.mulf %122, %126 : vector<8x256xf32>
    %128 = arith.addf %106, %127 : vector<8x256xf32>
    %129 = vector.extract_strided_slice %128 {offsets = [0, 128], sizes = [8, 128], strides = [1, 1]} : vector<8x256xf32> to vector<8x128xf32>
    %130 = arith.negf %129 : vector<8x128xf32>
    %131 = math.exp %130 : vector<8x128xf32>
    %cst_45 = arith.constant 1.000000e+00 : f32
    %132 = vector.broadcast %cst_45 : f32 to vector<8x128xf32>
    %133 = arith.addf %132, %131 : vector<8x128xf32>
    %134 = arith.divf %132, %133 : vector<8x128xf32>
    %135 = vector.extract_strided_slice %128 {offsets = [0, 0], sizes = [8, 128], strides = [1, 1]} : vector<8x256xf32> to vector<8x128xf32>
    %cst_46 = arith.constant 0.000000e+00 : f32
    %136 = vector.broadcast %cst_46 : f32 to vector<8x128xf32>
    %137 = arith.maximumf %135, %136 : vector<8x128xf32>
    %138 = arith.subf %95, %137 : vector<8x128xf32>
    %139 = arith.mulf %134, %138 : vector<8x128xf32>
    %140 = arith.addf %137, %139 : vector<8x128xf32>
    %c0_47 = arith.constant 0 : index
    %c2_48 = arith.constant 2 : index
    %c0_49 = arith.constant 0 : index
    %141 = vector.load %arg5[%c0_47, %c2_48, %c0_49] : memref<8x8x128xf32, #tpu.memory_space<vmem>>, vector<8x1x128xf32>
    %142 = vector.shape_cast %141 : vector<8x1x128xf32> to vector<8x128xf32>
    %143 = vector.shape_cast %140 : vector<8x128xf32> to vector<8x1x128xf32>
    tpu.vector_store %arg5[%c0_47, %c2_48, %c0_49], %143 {strides = array<i32>} : memref<8x8x128xf32, #tpu.memory_space<vmem>>, vector<8x1x128xf32>,
    %c0_50 = arith.constant 0 : index
    %c3 = arith.constant 3 : index
    %c0_51 = arith.constant 0 : index
    %144 = vector.load %arg3[%c0_50, %c3, %c0_51] : memref<8x8x256xf32, #tpu.memory_space<vmem>>, vector<8x1x256xf32>
    %145 = vector.shape_cast %144 : vector<8x1x256xf32> to vector<8x256xf32>
    %146 = vector.shape_cast %4 : vector<256xf32> to vector<1x256xf32>
    %147 = vector.broadcast %146 : vector<1x256xf32> to vector<8x256xf32>
    %148 = arith.subf %145, %147 : vector<8x256xf32>
    %149 = vector.shape_cast %6 : vector<256xf32> to vector<1x256xf32>
    %150 = vector.broadcast %149 : vector<1x256xf32> to vector<8x256xf32>
    %151 = arith.mulf %148, %150 : vector<8x256xf32>
    %cst_52 = arith.constant dense<0.000000e+00> : vector<8x256xf32>
    %152 = tpu.matmul %140, %7, %cst_52 {dimension_numbers = #tpu.dot_dimension_numbers<[1], [0], [0], [1], [0, 0, 1, 1], [], []>} : vector<8x128xf32>, vector<128x256xf32>, vector<8x256xf32> -> vector<8x256xf32>
    %cst_53 = arith.constant dense<0.000000e+00> : vector<8xf32>
    %153 = vector.multi_reduction <add>, %152, %cst_53 [1] : vector<8x256xf32> to vector<8xf32>
    %154 = vector.shape_cast %153 : vector<8xf32> to vector<8x1xf32>
    %155 = arith.mulf %152, %152 : vector<8x256xf32>
    %cst_54 = arith.constant dense<0.000000e+00> : vector<8xf32>
    %156 = vector.multi_reduction <add>, %155, %cst_54 [1] : vector<8x256xf32> to vector<8xf32>
    %157 = vector.shape_cast %156 : vector<8xf32> to vector<8x1xf32>
    %cst_55 = arith.constant 1.562500e-02 : f32
    %158 = vector.broadcast %cst_55 : f32 to vector<8x1xf32>
    %159 = arith.mulf %154, %158 : vector<8x1xf32>
    %cst_56 = arith.constant 1.562500e-02 : f32
    %160 = vector.broadcast %cst_56 : f32 to vector<8x1xf32>
    %161 = arith.mulf %157, %160 : vector<8x1xf32>
    %162 = arith.mulf %159, %159 : vector<8x1xf32>
    %163 = arith.subf %161, %162 : vector<8x1xf32>
    %cst_57 = arith.constant 0.000000e+00 : f32
    %164 = vector.broadcast %cst_57 : f32 to vector<8x1xf32>
    %165 = arith.maximumf %163, %164 : vector<8x1xf32>
    %166 = vector.broadcast %159 : vector<8x1xf32> to vector<8x256xf32>
    %167 = arith.subf %152, %166 : vector<8x256xf32>
    %cst_58 = arith.constant 9.99999974E-6 : f32
    %168 = vector.broadcast %cst_58 : f32 to vector<8x1xf32>
    %169 = arith.addf %165, %168 : vector<8x1xf32>
    %170 = math.rsqrt %169 : vector<8x1xf32>
    %171 = vector.broadcast %170 : vector<8x1xf32> to vector<8x256xf32>
    %172 = arith.mulf %167, %171 : vector<8x256xf32>
    %173 = arith.addf %151, %172 : vector<8x256xf32>
    %174 = vector.extract_strided_slice %173 {offsets = [0, 128], sizes = [8, 128], strides = [1, 1]} : vector<8x256xf32> to vector<8x128xf32>
    %175 = arith.negf %174 : vector<8x128xf32>
    %176 = math.exp %175 : vector<8x128xf32>
    %cst_59 = arith.constant 1.000000e+00 : f32
    %177 = vector.broadcast %cst_59 : f32 to vector<8x128xf32>
    %178 = arith.addf %177, %176 : vector<8x128xf32>
    %179 = arith.divf %177, %178 : vector<8x128xf32>
    %180 = vector.extract_strided_slice %173 {offsets = [0, 0], sizes = [8, 128], strides = [1, 1]} : vector<8x256xf32> to vector<8x128xf32>
    %cst_60 = arith.constant 0.000000e+00 : f32
    %181 = vector.broadcast %cst_60 : f32 to vector<8x128xf32>
    %182 = arith.maximumf %180, %181 : vector<8x128xf32>
    %183 = arith.subf %140, %182 : vector<8x128xf32>
    %184 = arith.mulf %179, %183 : vector<8x128xf32>
    %185 = arith.addf %182, %184 : vector<8x128xf32>
    %c0_61 = arith.constant 0 : index
    %c3_62 = arith.constant 3 : index
    %c0_63 = arith.constant 0 : index
    %186 = vector.load %arg5[%c0_61, %c3_62, %c0_63] : memref<8x8x128xf32, #tpu.memory_space<vmem>>, vector<8x1x128xf32>
    %187 = vector.shape_cast %186 : vector<8x1x128xf32> to vector<8x128xf32>
    %188 = vector.shape_cast %185 : vector<8x128xf32> to vector<8x1x128xf32>
    tpu.vector_store %arg5[%c0_61, %c3_62, %c0_63], %188 {strides = array<i32>} : memref<8x8x128xf32, #tpu.memory_space<vmem>>, vector<8x1x128xf32>,
    %c0_64 = arith.constant 0 : index
    %c4 = arith.constant 4 : index
    %c0_65 = arith.constant 0 : index
    %189 = vector.load %arg3[%c0_64, %c4, %c0_65] : memref<8x8x256xf32, #tpu.memory_space<vmem>>, vector<8x1x256xf32>
    %190 = vector.shape_cast %189 : vector<8x1x256xf32> to vector<8x256xf32>
    %191 = vector.shape_cast %4 : vector<256xf32> to vector<1x256xf32>
    %192 = vector.broadcast %191 : vector<1x256xf32> to vector<8x256xf32>
    %193 = arith.subf %190, %192 : vector<8x256xf32>
    %194 = vector.shape_cast %6 : vector<256xf32> to vector<1x256xf32>
    %195 = vector.broadcast %194 : vector<1x256xf32> to vector<8x256xf32>
    %196 = arith.mulf %193, %195 : vector<8x256xf32>
    %cst_66 = arith.constant dense<0.000000e+00> : vector<8x256xf32>
    %197 = tpu.matmul %185, %7, %cst_66 {dimension_numbers = #tpu.dot_dimension_numbers<[1], [0], [0], [1], [0, 0, 1, 1], [], []>} : vector<8x128xf32>, vector<128x256xf32>, vector<8x256xf32> -> vector<8x256xf32>
    %cst_67 = arith.constant dense<0.000000e+00> : vector<8xf32>
    %198 = vector.multi_reduction <add>, %197, %cst_67 [1] : vector<8x256xf32> to vector<8xf32>
    %199 = vector.shape_cast %198 : vector<8xf32> to vector<8x1xf32>
    %200 = arith.mulf %197, %197 : vector<8x256xf32>
    %cst_68 = arith.constant dense<0.000000e+00> : vector<8xf32>
    %201 = vector.multi_reduction <add>, %200, %cst_68 [1] : vector<8x256xf32> to vector<8xf32>
    %202 = vector.shape_cast %201 : vector<8xf32> to vector<8x1xf32>
    %cst_69 = arith.constant 1.562500e-02 : f32
    %203 = vector.broadcast %cst_69 : f32 to vector<8x1xf32>
    %204 = arith.mulf %199, %203 : vector<8x1xf32>
    %cst_70 = arith.constant 1.562500e-02 : f32
    %205 = vector.broadcast %cst_70 : f32 to vector<8x1xf32>
    %206 = arith.mulf %202, %205 : vector<8x1xf32>
    %207 = arith.mulf %204, %204 : vector<8x1xf32>
    %208 = arith.subf %206, %207 : vector<8x1xf32>
    %cst_71 = arith.constant 0.000000e+00 : f32
    %209 = vector.broadcast %cst_71 : f32 to vector<8x1xf32>
    %210 = arith.maximumf %208, %209 : vector<8x1xf32>
    %211 = vector.broadcast %204 : vector<8x1xf32> to vector<8x256xf32>
    %212 = arith.subf %197, %211 : vector<8x256xf32>
    %cst_72 = arith.constant 9.99999974E-6 : f32
    %213 = vector.broadcast %cst_72 : f32 to vector<8x1xf32>
    %214 = arith.addf %210, %213 : vector<8x1xf32>
    %215 = math.rsqrt %214 : vector<8x1xf32>
    %216 = vector.broadcast %215 : vector<8x1xf32> to vector<8x256xf32>
    %217 = arith.mulf %212, %216 : vector<8x256xf32>
    %218 = arith.addf %196, %217 : vector<8x256xf32>
    %219 = vector.extract_strided_slice %218 {offsets = [0, 128], sizes = [8, 128], strides = [1, 1]} : vector<8x256xf32> to vector<8x128xf32>
    %220 = arith.negf %219 : vector<8x128xf32>
    %221 = math.exp %220 : vector<8x128xf32>
    %cst_73 = arith.constant 1.000000e+00 : f32
    %222 = vector.broadcast %cst_73 : f32 to vector<8x128xf32>
    %223 = arith.addf %222, %221 : vector<8x128xf32>
    %224 = arith.divf %222, %223 : vector<8x128xf32>
    %225 = vector.extract_strided_slice %218 {offsets = [0, 0], sizes = [8, 128], strides = [1, 1]} : vector<8x256xf32> to vector<8x128xf32>
    %cst_74 = arith.constant 0.000000e+00 : f32
    %226 = vector.broadcast %cst_74 : f32 to vector<8x128xf32>
    %227 = arith.maximumf %225, %226 : vector<8x128xf32>
    %228 = arith.subf %185, %227 : vector<8x128xf32>
    %229 = arith.mulf %224, %228 : vector<8x128xf32>
    %230 = arith.addf %227, %229 : vector<8x128xf32>
    %c0_75 = arith.constant 0 : index
    %c4_76 = arith.constant 4 : index
    %c0_77 = arith.constant 0 : index
    %231 = vector.load %arg5[%c0_75, %c4_76, %c0_77] : memref<8x8x128xf32, #tpu.memory_space<vmem>>, vector<8x1x128xf32>
    %232 = vector.shape_cast %231 : vector<8x1x128xf32> to vector<8x128xf32>
    %233 = vector.shape_cast %230 : vector<8x128xf32> to vector<8x1x128xf32>
    tpu.vector_store %arg5[%c0_75, %c4_76, %c0_77], %233 {strides = array<i32>} : memref<8x8x128xf32, #tpu.memory_space<vmem>>, vector<8x1x128xf32>,
    %c0_78 = arith.constant 0 : index
    %c5 = arith.constant 5 : index
    %c0_79 = arith.constant 0 : index
    %234 = vector.load %arg3[%c0_78, %c5, %c0_79] : memref<8x8x256xf32, #tpu.memory_space<vmem>>, vector<8x1x256xf32>
    %235 = vector.shape_cast %234 : vector<8x1x256xf32> to vector<8x256xf32>
    %236 = vector.shape_cast %4 : vector<256xf32> to vector<1x256xf32>
    %237 = vector.broadcast %236 : vector<1x256xf32> to vector<8x256xf32>
    %238 = arith.subf %235, %237 : vector<8x256xf32>
    %239 = vector.shape_cast %6 : vector<256xf32> to vector<1x256xf32>
    %240 = vector.broadcast %239 : vector<1x256xf32> to vector<8x256xf32>
    %241 = arith.mulf %238, %240 : vector<8x256xf32>
    %cst_80 = arith.constant dense<0.000000e+00> : vector<8x256xf32>
    %242 = tpu.matmul %230, %7, %cst_80 {dimension_numbers = #tpu.dot_dimension_numbers<[1], [0], [0], [1], [0, 0, 1, 1], [], []>} : vector<8x128xf32>, vector<128x256xf32>, vector<8x256xf32> -> vector<8x256xf32>
    %cst_81 = arith.constant dense<0.000000e+00> : vector<8xf32>
    %243 = vector.multi_reduction <add>, %242, %cst_81 [1] : vector<8x256xf32> to vector<8xf32>
    %244 = vector.shape_cast %243 : vector<8xf32> to vector<8x1xf32>
    %245 = arith.mulf %242, %242 : vector<8x256xf32>
    %cst_82 = arith.constant dense<0.000000e+00> : vector<8xf32>
    %246 = vector.multi_reduction <add>, %245, %cst_82 [1] : vector<8x256xf32> to vector<8xf32>
    %247 = vector.shape_cast %246 : vector<8xf32> to vector<8x1xf32>
    %cst_83 = arith.constant 1.562500e-02 : f32
    %248 = vector.broadcast %cst_83 : f32 to vector<8x1xf32>
    %249 = arith.mulf %244, %248 : vector<8x1xf32>
    %cst_84 = arith.constant 1.562500e-02 : f32
    %250 = vector.broadcast %cst_84 : f32 to vector<8x1xf32>
    %251 = arith.mulf %247, %250 : vector<8x1xf32>
    %252 = arith.mulf %249, %249 : vector<8x1xf32>
    %253 = arith.subf %251, %252 : vector<8x1xf32>
    %cst_85 = arith.constant 0.000000e+00 : f32
    %254 = vector.broadcast %cst_85 : f32 to vector<8x1xf32>
    %255 = arith.maximumf %253, %254 : vector<8x1xf32>
    %256 = vector.broadcast %249 : vector<8x1xf32> to vector<8x256xf32>
    %257 = arith.subf %242, %256 : vector<8x256xf32>
    %cst_86 = arith.constant 9.99999974E-6 : f32
    %258 = vector.broadcast %cst_86 : f32 to vector<8x1xf32>
    %259 = arith.addf %255, %258 : vector<8x1xf32>
    %260 = math.rsqrt %259 : vector<8x1xf32>
    %261 = vector.broadcast %260 : vector<8x1xf32> to vector<8x256xf32>
    %262 = arith.mulf %257, %261 : vector<8x256xf32>
    %263 = arith.addf %241, %262 : vector<8x256xf32>
    %264 = vector.extract_strided_slice %263 {offsets = [0, 128], sizes = [8, 128], strides = [1, 1]} : vector<8x256xf32> to vector<8x128xf32>
    %265 = arith.negf %264 : vector<8x128xf32>
    %266 = math.exp %265 : vector<8x128xf32>
    %cst_87 = arith.constant 1.000000e+00 : f32
    %267 = vector.broadcast %cst_87 : f32 to vector<8x128xf32>
    %268 = arith.addf %267, %266 : vector<8x128xf32>
    %269 = arith.divf %267, %268 : vector<8x128xf32>
    %270 = vector.extract_strided_slice %263 {offsets = [0, 0], sizes = [8, 128], strides = [1, 1]} : vector<8x256xf32> to vector<8x128xf32>
    %cst_88 = arith.constant 0.000000e+00 : f32
    %271 = vector.broadcast %cst_88 : f32 to vector<8x128xf32>
    %272 = arith.maximumf %270, %271 : vector<8x128xf32>
    %273 = arith.subf %230, %272 : vector<8x128xf32>
    %274 = arith.mulf %269, %273 : vector<8x128xf32>
    %275 = arith.addf %272, %274 : vector<8x128xf32>
    %c0_89 = arith.constant 0 : index
    %c5_90 = arith.constant 5 : index
    %c0_91 = arith.constant 0 : index
    %276 = vector.load %arg5[%c0_89, %c5_90, %c0_91] : memref<8x8x128xf32, #tpu.memory_space<vmem>>, vector<8x1x128xf32>
    %277 = vector.shape_cast %276 : vector<8x1x128xf32> to vector<8x128xf32>
    %278 = vector.shape_cast %275 : vector<8x128xf32> to vector<8x1x128xf32>
    tpu.vector_store %arg5[%c0_89, %c5_90, %c0_91], %278 {strides = array<i32>} : memref<8x8x128xf32, #tpu.memory_space<vmem>>, vector<8x1x128xf32>,
    %c0_92 = arith.constant 0 : index
    %c6 = arith.constant 6 : index
    %c0_93 = arith.constant 0 : index
    %279 = vector.load %arg3[%c0_92, %c6, %c0_93] : memref<8x8x256xf32, #tpu.memory_space<vmem>>, vector<8x1x256xf32>
    %280 = vector.shape_cast %279 : vector<8x1x256xf32> to vector<8x256xf32>
    %281 = vector.shape_cast %4 : vector<256xf32> to vector<1x256xf32>
    %282 = vector.broadcast %281 : vector<1x256xf32> to vector<8x256xf32>
    %283 = arith.subf %280, %282 : vector<8x256xf32>
    %284 = vector.shape_cast %6 : vector<256xf32> to vector<1x256xf32>
    %285 = vector.broadcast %284 : vector<1x256xf32> to vector<8x256xf32>
    %286 = arith.mulf %283, %285 : vector<8x256xf32>
    %cst_94 = arith.constant dense<0.000000e+00> : vector<8x256xf32>
    %287 = tpu.matmul %275, %7, %cst_94 {dimension_numbers = #tpu.dot_dimension_numbers<[1], [0], [0], [1], [0, 0, 1, 1], [], []>} : vector<8x128xf32>, vector<128x256xf32>, vector<8x256xf32> -> vector<8x256xf32>
    %cst_95 = arith.constant dense<0.000000e+00> : vector<8xf32>
    %288 = vector.multi_reduction <add>, %287, %cst_95 [1] : vector<8x256xf32> to vector<8xf32>
    %289 = vector.shape_cast %288 : vector<8xf32> to vector<8x1xf32>
    %290 = arith.mulf %287, %287 : vector<8x256xf32>
    %cst_96 = arith.constant dense<0.000000e+00> : vector<8xf32>
    %291 = vector.multi_reduction <add>, %290, %cst_96 [1] : vector<8x256xf32> to vector<8xf32>
    %292 = vector.shape_cast %291 : vector<8xf32> to vector<8x1xf32>
    %cst_97 = arith.constant 1.562500e-02 : f32
    %293 = vector.broadcast %cst_97 : f32 to vector<8x1xf32>
    %294 = arith.mulf %289, %293 : vector<8x1xf32>
    %cst_98 = arith.constant 1.562500e-02 : f32
    %295 = vector.broadcast %cst_98 : f32 to vector<8x1xf32>
    %296 = arith.mulf %292, %295 : vector<8x1xf32>
    %297 = arith.mulf %294, %294 : vector<8x1xf32>
    %298 = arith.subf %296, %297 : vector<8x1xf32>
    %cst_99 = arith.constant 0.000000e+00 : f32
    %299 = vector.broadcast %cst_99 : f32 to vector<8x1xf32>
    %300 = arith.maximumf %298, %299 : vector<8x1xf32>
    %301 = vector.broadcast %294 : vector<8x1xf32> to vector<8x256xf32>
    %302 = arith.subf %287, %301 : vector<8x256xf32>
    %cst_100 = arith.constant 9.99999974E-6 : f32
    %303 = vector.broadcast %cst_100 : f32 to vector<8x1xf32>
    %304 = arith.addf %300, %303 : vector<8x1xf32>
    %305 = math.rsqrt %304 : vector<8x1xf32>
    %306 = vector.broadcast %305 : vector<8x1xf32> to vector<8x256xf32>
    %307 = arith.mulf %302, %306 : vector<8x256xf32>
    %308 = arith.addf %286, %307 : vector<8x256xf32>
    %309 = vector.extract_strided_slice %308 {offsets = [0, 128], sizes = [8, 128], strides = [1, 1]} : vector<8x256xf32> to vector<8x128xf32>
    %310 = arith.negf %309 : vector<8x128xf32>
    %311 = math.exp %310 : vector<8x128xf32>
    %cst_101 = arith.constant 1.000000e+00 : f32
    %312 = vector.broadcast %cst_101 : f32 to vector<8x128xf32>
    %313 = arith.addf %312, %311 : vector<8x128xf32>
    %314 = arith.divf %312, %313 : vector<8x128xf32>
    %315 = vector.extract_strided_slice %308 {offsets = [0, 0], sizes = [8, 128], strides = [1, 1]} : vector<8x256xf32> to vector<8x128xf32>
    %cst_102 = arith.constant 0.000000e+00 : f32
    %316 = vector.broadcast %cst_102 : f32 to vector<8x128xf32>
    %317 = arith.maximumf %315, %316 : vector<8x128xf32>
    %318 = arith.subf %275, %317 : vector<8x128xf32>
    %319 = arith.mulf %314, %318 : vector<8x128xf32>
    %320 = arith.addf %317, %319 : vector<8x128xf32>
    %c0_103 = arith.constant 0 : index
    %c6_104 = arith.constant 6 : index
    %c0_105 = arith.constant 0 : index
    %321 = vector.load %arg5[%c0_103, %c6_104, %c0_105] : memref<8x8x128xf32, #tpu.memory_space<vmem>>, vector<8x1x128xf32>
    %322 = vector.shape_cast %321 : vector<8x1x128xf32> to vector<8x128xf32>
    %323 = vector.shape_cast %320 : vector<8x128xf32> to vector<8x1x128xf32>
    tpu.vector_store %arg5[%c0_103, %c6_104, %c0_105], %323 {strides = array<i32>} : memref<8x8x128xf32, #tpu.memory_space<vmem>>, vector<8x1x128xf32>,
    %c0_106 = arith.constant 0 : index
    %c7 = arith.constant 7 : index
    %c0_107 = arith.constant 0 : index
    %324 = vector.load %arg3[%c0_106, %c7, %c0_107] : memref<8x8x256xf32, #tpu.memory_space<vmem>>, vector<8x1x256xf32>
    %325 = vector.shape_cast %324 : vector<8x1x256xf32> to vector<8x256xf32>
    %326 = vector.shape_cast %4 : vector<256xf32> to vector<1x256xf32>
    %327 = vector.broadcast %326 : vector<1x256xf32> to vector<8x256xf32>
    %328 = arith.subf %325, %327 : vector<8x256xf32>
    %329 = vector.shape_cast %6 : vector<256xf32> to vector<1x256xf32>
    %330 = vector.broadcast %329 : vector<1x256xf32> to vector<8x256xf32>
    %331 = arith.mulf %328, %330 : vector<8x256xf32>
    %cst_108 = arith.constant dense<0.000000e+00> : vector<8x256xf32>
    %332 = tpu.matmul %320, %7, %cst_108 {dimension_numbers = #tpu.dot_dimension_numbers<[1], [0], [0], [1], [0, 0, 1, 1], [], []>} : vector<8x128xf32>, vector<128x256xf32>, vector<8x256xf32> -> vector<8x256xf32>
    %cst_109 = arith.constant dense<0.000000e+00> : vector<8xf32>
    %333 = vector.multi_reduction <add>, %332, %cst_109 [1] : vector<8x256xf32> to vector<8xf32>
    %334 = vector.shape_cast %333 : vector<8xf32> to vector<8x1xf32>
    %335 = arith.mulf %332, %332 : vector<8x256xf32>
    %cst_110 = arith.constant dense<0.000000e+00> : vector<8xf32>
    %336 = vector.multi_reduction <add>, %335, %cst_110 [1] : vector<8x256xf32> to vector<8xf32>
    %337 = vector.shape_cast %336 : vector<8xf32> to vector<8x1xf32>
    %cst_111 = arith.constant 1.562500e-02 : f32
    %338 = vector.broadcast %cst_111 : f32 to vector<8x1xf32>
    %339 = arith.mulf %334, %338 : vector<8x1xf32>
    %cst_112 = arith.constant 1.562500e-02 : f32
    %340 = vector.broadcast %cst_112 : f32 to vector<8x1xf32>
    %341 = arith.mulf %337, %340 : vector<8x1xf32>
    %342 = arith.mulf %339, %339 : vector<8x1xf32>
    %343 = arith.subf %341, %342 : vector<8x1xf32>
    %cst_113 = arith.constant 0.000000e+00 : f32
    %344 = vector.broadcast %cst_113 : f32 to vector<8x1xf32>
    %345 = arith.maximumf %343, %344 : vector<8x1xf32>
    %346 = vector.broadcast %339 : vector<8x1xf32> to vector<8x256xf32>
    %347 = arith.subf %332, %346 : vector<8x256xf32>
    %cst_114 = arith.constant 9.99999974E-6 : f32
    %348 = vector.broadcast %cst_114 : f32 to vector<8x1xf32>
    %349 = arith.addf %345, %348 : vector<8x1xf32>
    %350 = math.rsqrt %349 : vector<8x1xf32>
    %351 = vector.broadcast %350 : vector<8x1xf32> to vector<8x256xf32>
    %352 = arith.mulf %347, %351 : vector<8x256xf32>
    %353 = arith.addf %331, %352 : vector<8x256xf32>
    %354 = vector.extract_strided_slice %353 {offsets = [0, 128], sizes = [8, 128], strides = [1, 1]} : vector<8x256xf32> to vector<8x128xf32>
    %355 = arith.negf %354 : vector<8x128xf32>
    %356 = math.exp %355 : vector<8x128xf32>
    %cst_115 = arith.constant 1.000000e+00 : f32
    %357 = vector.broadcast %cst_115 : f32 to vector<8x128xf32>
    %358 = arith.addf %357, %356 : vector<8x128xf32>
    %359 = arith.divf %357, %358 : vector<8x128xf32>
    %360 = vector.extract_strided_slice %353 {offsets = [0, 0], sizes = [8, 128], strides = [1, 1]} : vector<8x256xf32> to vector<8x128xf32>
    %cst_116 = arith.constant 0.000000e+00 : f32
    %361 = vector.broadcast %cst_116 : f32 to vector<8x128xf32>
    %362 = arith.maximumf %360, %361 : vector<8x128xf32>
    %363 = arith.subf %320, %362 : vector<8x128xf32>
    %364 = arith.mulf %359, %363 : vector<8x128xf32>
    %365 = arith.addf %362, %364 : vector<8x128xf32>
    %c0_117 = arith.constant 0 : index
    %c7_118 = arith.constant 7 : index
    %c0_119 = arith.constant 0 : index
    %366 = vector.load %arg5[%c0_117, %c7_118, %c0_119] : memref<8x8x128xf32, #tpu.memory_space<vmem>>, vector<8x1x128xf32>
    %367 = vector.shape_cast %366 : vector<8x1x128xf32> to vector<8x128xf32>
    %368 = vector.shape_cast %365 : vector<8x128xf32> to vector<8x1x128xf32>
    tpu.vector_store %arg5[%c0_117, %c7_118, %c0_119], %368 {strides = array<i32>} : memref<8x8x128xf32, #tpu.memory_space<vmem>>, vector<8x1x128xf32>,
    %c0_120 = arith.constant 0 : index
    %c0_121 = arith.constant 0 : index
    %369 = vector.load %arg6[%c0_120, %c0_121] : memref<8x128xf32, #tpu.memory_space<vmem>>, vector<8x128xf32>
    tpu.vector_store %arg6[%c0_120, %c0_121], %365 {strides = array<i32>} : memref<8x128xf32, #tpu.memory_space<vmem>>, vector<8x128xf32>,
    return
  }
  func.func @transform_0(%arg0: i32, %arg1: i32) -> (i32, i32) {
    %c0_i32 = arith.constant 0 : i32
    %c0_i32_0 = arith.constant 0 : i32
    %c0_i32_1 = arith.constant 0 : i32
    return %c0_i32, %c0_i32_0 : i32, i32
  }
  func.func @transform_1(%arg0: i32, %arg1: i32) -> (i32, i32, i32) {
    %c0_i32 = arith.constant 0 : i32
    %c0_i32_0 = arith.constant 0 : i32
    return %arg0, %arg1, %c0_i32 : i32, i32, i32
  }
  func.func @transform_2(%arg0: i32, %arg1: i32) -> (i32, i32) {
    %c0_i32 = arith.constant 0 : i32
    %c0_i32_0 = arith.constant 0 : i32
    %c0_i32_1 = arith.constant 0 : i32
    return %c0_i32, %c0_i32_0 : i32, i32
  }
  func.func @transform_3(%arg0: i32, %arg1: i32) -> (i32, i32, i32) {
    %c0_i32 = arith.constant 0 : i32
    %c0_i32_0 = arith.constant 0 : i32
    return %arg0, %arg1, %c0_i32 : i32, i32, i32
  }
}

</mosaic_0001>

<llo_original>
// kernel: ligru_layer_forward.2
$region0: #{ligru_layer_forward.2}
  #allocation0 [shape = 'u32[]', space=smem, size = 0x4, offset = 0x4, fixed_abs, tag = 'smem constant byte address 0x4 - core index']
  #allocation1 [shape = 'u32[144,128]{1,0:T(1,128)}', space=vmem, size = 0x12000, scoped, tag = 'internal scratch']
  %s0 = inlined_call_operand.vmem [shape: f32[8,8,128], index: 0, kind: input, shape index: {}]
  %s1 = inlined_call_operand.vmem [shape: f32[128,256], index: 1, kind: input, shape index: {}]
  %s2 = inlined_call_operand.vmem [shape: f32[8,8,256], index: 2, kind: output, shape index: {0}]
  %s3 = inlined_call_operand.vmem [shape: f32[8,256], index: 3, kind: output, shape index: {1}]
  %s4 = inlined_call_operand.vmem [shape: f32[8,256], index: 4, kind: output, shape index: {2}]
  %5 = xla_tuple %s2, %s3, %s4
  %s6 = sld [smem:[#allocation0]]
  $region38: #{ligru_layer_forward.2} parent=0
    _
  %s8 = ssub.s32 1, %s6
  %s9 = scalar_select 0, %s8, %s6
  // Predicated region
  $region2: #{ligru_layer_forward.2} parent=0 // pred_check
    _
  $region3: #{ligru_layer_forward.2} parent=0 // pred_check_branch
    %11 = sbr.rel (0) target = $region5
  $region4: #{ligru_layer_forward.2} parent=0 // pred_region
    _
  $region5: #{ligru_layer_forward.2} parent=0 // pred_fallthru
    _
  // Predicated region
  $region6: #{ligru_layer_forward.2} parent=0 // pred_check
    _
  $region7: #{ligru_layer_forward.2} parent=0 // pred_check_branch
    %13 = sbr.rel (0) target = $region9
  $region8: #{ligru_layer_forward.2} parent=0 // pred_region
    _
  $region9: #{ligru_layer_forward.2} parent=0 // pred_fallthru
    _
  %p14 = scmp.eq.s32.totalorder 0, 0
  // Predicated region
  $region10: #{ligru_layer_forward.2} parent=0 // pred_check
    %p15 = pneg %p14
  $region11: #{ligru_layer_forward.2} parent=0 // pred_check_branch
    %17 = sbr.rel (%p15) target = $region13
  $region12: #{ligru_layer_forward.2} parent=0 // pred_region
    %18 = vst [vmem:[%s3] sm:$0xff] 0.0
    %19 = vst [vmem:[%s3 + $0x8] sm:$0xff] 0.0
    %20 = vst [vmem:[%s4] sm:$0xff] 0.0
    %21 = vst [vmem:[%s4 + $0x8] sm:$0xff] 0.0
  $region13: #{ligru_layer_forward.2} parent=0 // pred_fallthru
    _
  %v22 = vld [vmem:[%s0] sm:$0xff]
  %v23 = vld [vmem:[%s0 + $0x8] sm:$0xff]
  %v24 = vld [vmem:[%s0 + $0x10] sm:$0xff]
  %v25 = vld [vmem:[%s0 + $0x18] sm:$0xff]
  %v26 = vld [vmem:[%s0 + $0x20] sm:$0xff]
  %v27 = vld [vmem:[%s0 + $0x28] sm:$0xff]
  %v28 = vld [vmem:[%s0 + $0x30] sm:$0xff]
  %v29 = vld [vmem:[%s0 + $0x38] sm:$0xff]
  %v30 = vld [vmem:[%s1] sm:$0xff]
  %v31 = vld [vmem:[%s1 + $0x8] sm:$0xff]
  %v32 = vld [vmem:[%s1 + $0x10] sm:$0xff]
  %v33 = vld [vmem:[%s1 + $0x18] sm:$0xff]
  %v34 = vld [vmem:[%s1 + $0x20] sm:$0xff]
  %v35 = vld [vmem:[%s1 + $0x28] sm:$0xff]
  %v36 = vld [vmem:[%s1 + $0x30] sm:$0xff]
  %v37 = vld [vmem:[%s1 + $0x38] sm:$0xff]
  %v38 = vld [vmem:[%s1 + $0x40] sm:$0xff]
  %v39 = vld [vmem:[%s1 + $0x48] sm:$0xff]
  %v40 = vld [vmem:[%s1 + $0x50] sm:$0xff]
  %v41 = vld [vmem:[%s1 + $0x58] sm:$0xff]
  %v42 = vld [vmem:[%s1 + $0x60] sm:$0xff]
  %v43 = vld [vmem:[%s1 + $0x68] sm:$0xff]
  %v44 = vld [vmem:[%s1 + $0x70] sm:$0xff]
  %v45 = vld [vmem:[%s1 + $0x78] sm:$0xff]
  %v46 = vld [vmem:[%s1 + $0x80] sm:$0xff]
  %v47 = vld [vmem:[%s1 + $0x88] sm:$0xff]
  %v48 = vld [vmem:[%s1 + $0x90] sm:$0xff]
  %v49 = vld [vmem:[%s1 + $0x98] sm:$0xff]
  %v50 = vld [vmem:[%s1 + $0xa0] sm:$0xff]
  %v51 = vld [vmem:[%s1 + $0xa8] sm:$0xff]
  %v52 = vld [vmem:[%s1 + $0xb0] sm:$0xff]
  %v53 = vld [vmem:[%s1 + $0xb8] sm:$0xff]
  %v54 = vld [vmem:[%s1 + $0xc0] sm:$0xff]
  %v55 = vld [vmem:[%s1 + $0xc8] sm:$0xff]
  %v56 = vld [vmem:[%s1 + $0xd0] sm:$0xff]
  %v57 = vld [vmem:[%s1 + $0xd8] sm:$0xff]
  %v58 = vld [vmem:[%s1 + $0xe0] sm:$0xff]
  %v59 = vld [vmem:[%s1 + $0xe8] sm:$0xff]
  %v60 = vld [vmem:[%s1 + $0xf0] sm:$0xff]
  %v61 = vld [vmem:[%s1 + $0xf8] sm:$0xff]
  %62 = vmatprep.subr.mxu0 %v31
  %63 = vmatpush1.msra.mxu0 %v30
  %64 = vmatprep.subr.mxu0 %v33
  %65 = vmatpush1.msra.mxu0 %v32
  %66 = vmatprep.subr.mxu0 %v35
  %67 = vmatpush1.msra.mxu0 %v34
  %68 = vmatprep.subr.mxu0 %v37
  %69 = vmatpush1.msra.mxu0 %v36
  %70 = vmatprep.subr.mxu0 %v39
  %71 = vmatpush1.msra.mxu0 %v38
  %72 = vmatprep.subr.mxu0 %v41
  %73 = vmatpush1.msra.mxu0 %v40
  %74 = vmatprep.subr.mxu0 %v43
  %75 = vmatpush1.msra.mxu0 %v42
  %76 = vmatprep.subr.mxu0 %v45
  %77 = vmatpush1.msra.mxu0 %v44
  %78 = vmatprep.subr.mxu0 %v47
  %79 = vmatpush1.msra.mxu0 %v46
  %80 = vmatprep.subr.mxu0 %v49
  %81 = vmatpush1.msra.mxu0 %v48
  %82 = vmatprep.subr.mxu0 %v51
  %83 = vmatpush1.msra.mxu0 %v50
  %84 = vmatprep.subr.mxu0 %v53
  %85 = vmatpush1.msra.mxu0 %v52
  %86 = vmatprep.subr.mxu0 %v55
  %87 = vmatpush1.msra.mxu0 %v54
  %88 = vmatprep.subr.mxu0 %v57
  %89 = vmatpush1.msra.mxu0 %v56
  %90 = vmatprep.subr.mxu0 %v59
  %91 = vmatpush1.msra.mxu0 %v58
  %92 = vmatprep.subr.mxu0 %v61
  %93 = vmatpush1.msra.mxu0 %v60
  %94 = vmatprep.subr.mxu0 0.0
  %95 = vmatpush1.msra.mxu0 0.0
  %96 = vmatprep.subr.mxu0 0.0
  %97 = vmatpush1.msra.mxu0 0.0
  %98 = vmatprep.subr.mxu0 0.0
  %99 = vmatpush1.msra.mxu0 0.0
  %100 = vmatprep.subr.mxu0 0.0
  %101 = vmatpush1.msra.mxu0 0.0
  %102 = vmatprep.subr.mxu0 0.0
  %103 = vmatpush1.msra.mxu0 0.0
  %104 = vmatprep.subr.mxu0 0.0
  %105 = vmatpush1.msra.mxu0 0.0
  %106 = vmatprep.subr.mxu0 0.0
  %107 = vmatpush1.msra.mxu0 0.0
  %108 = vmatprep.subr.mxu0 0.0
  %109 = vmatpush1.msra.mxu0 0.0
  %110 = vmatprep.subr.mxu0 0.0
  %111 = vmatpush1.msra.mxu0 0.0
  %112 = vmatprep.subr.mxu0 0.0
  %113 = vmatpush1.msra.mxu0 0.0
  %114 = vmatprep.subr.mxu0 0.0
  %115 = vmatpush1.msra.mxu0 0.0
  %116 = vmatprep.subr.mxu0 0.0
  %117 = vmatpush1.msra.mxu0 0.0
  %118 = vmatprep.subr.mxu0 0.0
  %119 = vmatpush1.msra.mxu0 0.0
  %120 = vmatprep.subr.mxu0 0.0
  %121 = vmatpush1.msra.mxu0 0.0
  %122 = vmatprep.subr.mxu0 0.0
  %123 = vmatpush1.msra.mxu0 0.0
  %124 = vmatprep.subr.mxu0 0.0
  %125 = vmatpush1.msra.mxu0 0.0
  %126 = vmatprep.mubr.f32.mxu0 0.0
  %127 = vmatmul.mubr.f32.gmra.mrb[0].mxu0 %v22
  %v128 = vpop.f32.mrb[0].mxu0
  %v129 = vadd.f32 0.0, %v128
  %v130 = vpop.f32.mrb[0].mxu0
  %v131 = vadd.f32 0.0, %v130
  %132 = vmatprep.mubr.f32.mxu0 0.0
  %133 = vmatmul.mubr.f32.gmra.mrb[0].mxu0 %v23
  %v134 = vpop.f32.mrb[0].mxu0
  %v135 = vadd.f32 0.0, %v134
  %v136 = vpop.f32.mrb[0].mxu0
  %v137 = vadd.f32 0.0, %v136
  %138 = vmatprep.mubr.f32.mxu0 0.0
  %139 = vmatmul.mubr.f32.gmra.mrb[0].mxu0 %v24
  %v140 = vpop.f32.mrb[0].mxu0
  %v141 = vadd.f32 0.0, %v140
  %v142 = vpop.f32.mrb[0].mxu0
  %v143 = vadd.f32 0.0, %v142
  %144 = vmatprep.mubr.f32.mxu0 0.0
  %145 = vmatmul.mubr.f32.gmra.mrb[0].mxu0 %v25
  %v146 = vpop.f32.mrb[0].mxu0
  %v147 = vadd.f32 0.0, %v146
  %v148 = vpop.f32.mrb[0].mxu0
  %v149 = vadd.f32 0.0, %v148
  %150 = vmatprep.mubr.f32.mxu0 0.0
  %151 = vmatmul.mubr.f32.gmra.mrb[0].mxu0 %v26
  %v152 = vpop.f32.mrb[0].mxu0
  %v153 = vadd.f32 0.0, %v152
  %v154 = vpop.f32.mrb[0].mxu0
  %v155 = vadd.f32 0.0, %v154
  %156 = vmatprep.mubr.f32.mxu0 0.0
  %157 = vmatmul.mubr.f32.gmra.mrb[0].mxu0 %v27
  %v158 = vpop.f32.mrb[0].mxu0
  %v159 = vadd.f32 0.0, %v158
  %v160 = vpop.f32.mrb[0].mxu0
  %v161 = vadd.f32 0.0, %v160
  %162 = vmatprep.mubr.f32.mxu0 0.0
  %163 = vmatmul.mubr.f32.gmra.mrb[0].mxu0 %v28
  %v164 = vpop.f32.mrb[0].mxu0
  %v165 = vadd.f32 0.0, %v164
  %v166 = vpop.f32.mrb[0].mxu0
  %v167 = vadd.f32 0.0, %v166
  %168 = vmatprep.mubr.f32.mxu0 0.0
  %169 = vmatmul.mubr.f32.gmra.mrb[0].mxu0 %v29
  %v170 = vpop.f32.mrb[0].mxu0
  %v171 = vadd.f32 0.0, %v170
  %v172 = vpop.f32.mrb[0].mxu0
  %v173 = vadd.f32 0.0, %v172
  %174 = vdwg.mxu0
  %175 = vst [vmem:[%s2] sm:$0xff] %v129
  %176 = vst [vmem:[%s2 + $0x8] sm:$0xff] %v131
  %177 = vst [vmem:[%s2 + $0x10] sm:$0xff] %v135
  %178 = vst [vmem:[%s2 + $0x18] sm:$0xff] %v137
  %179 = vst [vmem:[%s2 + $0x20] sm:$0xff] %v141
  %180 = vst [vmem:[%s2 + $0x28] sm:$0xff] %v143
  %181 = vst [vmem:[%s2 + $0x30] sm:$0xff] %v147
  %182 = vst [vmem:[%s2 + $0x38] sm:$0xff] %v149
  %183 = vst [vmem:[%s2 + $0x40] sm:$0xff] %v153
  %184 = vst [vmem:[%s2 + $0x48] sm:$0xff] %v155
  %185 = vst [vmem:[%s2 + $0x50] sm:$0xff] %v159
  %186 = vst [vmem:[%s2 + $0x58] sm:$0xff] %v161
  %187 = vst [vmem:[%s2 + $0x60] sm:$0xff] %v165
  %188 = vst [vmem:[%s2 + $0x68] sm:$0xff] %v167
  %189 = vst [vmem:[%s2 + $0x70] sm:$0xff] %v171
  %190 = vst [vmem:[%s2 + $0x78] sm:$0xff] %v173
  %v191 = vld [vmem:[%s3] sm:$0xff]
  %v192 = vld [vmem:[%s3 + $0x8] sm:$0xff]
  %v193 = vadd.f32 %v129, %v135
  %v194 = vadd.f32 %v193, %v141
  %v195 = vadd.f32 %v194, %v147
  %v196 = vadd.f32 %v195, %v153
  %v197 = vadd.f32 %v196, %v159
  %v198 = vadd.f32 %v197, %v165
  %v199 = vadd.f32 %v198, %v171
  %v200 = vadd.f32 %v131, %v137
  %v201 = vadd.f32 %v200, %v143
  %v202 = vadd.f32 %v201, %v149
  %v203 = vadd.f32 %v202, %v155
  %v204 = vadd.f32 %v203, %v161
  %v205 = vadd.f32 %v204, %v167
  %v206 = vadd.f32 %v205, %v173
  %v207 = vadd.f32 %v191, %v199
  %v208 = vadd.f32 %v192, %v206
  %209 = vst [vmem:[%s3] sm:$0xff] %v207
  %210 = vst [vmem:[%s3 + $0x8] sm:$0xff] %v208
  %v211 = vld [vmem:[%s4] sm:$0xff]
  %v212 = vld [vmem:[%s4 + $0x8] sm:$0xff]
  %v213 = vmul.f32 %v129, %v129
  %v214 = vmul.f32 %v131, %v131
  %v215 = vmul.f32 %v135, %v135
  %v216 = vmul.f32 %v137, %v137
  %v217 = vmul.f32 %v141, %v141
  %v218 = vmul.f32 %v143, %v143
  %v219 = vmul.f32 %v147, %v147
  %v220 = vmul.f32 %v149, %v149
  %v221 = vmul.f32 %v153, %v153
  %v222 = vmul.f32 %v155, %v155
  %v223 = vmul.f32 %v159, %v159
  %v224 = vmul.f32 %v161, %v161
  %v225 = vmul.f32 %v165, %v165
  %v226 = vmul.f32 %v167, %v167
  %v227 = vmul.f32 %v171, %v171
  %v228 = vmul.f32 %v173, %v173
  %v229 = vadd.f32 %v213, %v215
  %v230 = vadd.f32 %v229, %v217
  %v231 = vadd.f32 %v230, %v219
  %v232 = vadd.f32 %v231, %v221
  %v233 = vadd.f32 %v232, %v223
  %v234 = vadd.f32 %v233, %v225
  %v235 = vadd.f32 %v234, %v227
  %v236 = vadd.f32 %v214, %v216
  %v237 = vadd.f32 %v236, %v218
  %v238 = vadd.f32 %v237, %v220
  %v239 = vadd.f32 %v238, %v222
  %v240 = vadd.f32 %v239, %v224
  %v241 = vadd.f32 %v240, %v226
  %v242 = vadd.f32 %v241, %v228
  %v243 = vadd.f32 %v211, %v235
  %v244 = vadd.f32 %v212, %v242
  %245 = vst [vmem:[%s4] sm:$0xff] %v243
  %246 = vst [vmem:[%s4 + $0x8] sm:$0xff] %v244
  // Predicated region
  $region14: #{ligru_layer_forward.2} parent=0 // pred_check
    _
  $region15: #{ligru_layer_forward.2} parent=0 // pred_check_branch
    %248 = sbr.rel (0) target = $region17
  $region16: #{ligru_layer_forward.2} parent=0 // pred_region
    _
  $region17: #{ligru_layer_forward.2} parent=0 // pred_fallthru
    _
  // Predicated region
  $region18: #{ligru_layer_forward.2} parent=0 // pred_check
    _
  $region19: #{ligru_layer_forward.2} parent=0 // pred_check_branch
    %250 = sbr.rel (0) target = $region21
  $region20: #{ligru_layer_forward.2} parent=0 // pred_region
    _
  $region21: #{ligru_layer_forward.2} parent=0 // pred_fallthru
    _
  // Predicated region
  $region22: #{ligru_layer_forward.2} parent=0 // pred_check
    _
  $region23: #{ligru_layer_forward.2} parent=0 // pred_check_branch
    %252 = sbr.rel (0) target = $region25
  $region24: #{ligru_layer_forward.2} parent=0 // pred_region
    _
  $region25: #{ligru_layer_forward.2} parent=0 // pred_fallthru
    _
  // Predicated region
  $region26: #{ligru_layer_forward.2} parent=0 // pred_check
    _
  $region27: #{ligru_layer_forward.2} parent=0 // pred_check_branch
    %254 = sbr.rel (0) target = $region29
  $region28: #{ligru_layer_forward.2} parent=0 // pred_region
    _
  $region29: #{ligru_layer_forward.2} parent=0 // pred_fallthru
    _
  // Predicated region
  $region30: #{ligru_layer_forward.2} parent=0 // pred_check
    _
  $region31: #{ligru_layer_forward.2} parent=0 // pred_check_branch
    %256 = sbr.rel (0) target = $region33
  $region32: #{ligru_layer_forward.2} parent=0 // pred_region
    _
  $region33: #{ligru_layer_forward.2} parent=0 // pred_fallthru
    _
  // Predicated region
  $region34: #{ligru_layer_forward.2} parent=0 // pred_check
    _
  $region35: #{ligru_layer_forward.2} parent=0 // pred_check_branch
    %258 = sbr.rel (0) target = $region37
  $region36: #{ligru_layer_forward.2} parent=0 // pred_region
    _
  $region37: #{ligru_layer_forward.2} parent=0 // pred_fallthru
    _

// kernel: ligru_layer_forward.3
$region0: #{ligru_layer_forward.3}
  #allocation0 [shape = 'u32[]', space=smem, size = 0x4, offset = 0x4, fixed_abs, tag = 'smem constant byte address 0x4 - core index']
  #allocation1 [shape = 'u32[144,128]{1,0:T(1,128)}', space=vmem, size = 0x12000, scoped, tag = 'internal scratch']
  #allocation2 [shape = 'f32[8,128]{1,0:T(8,128)}', space=vmem, size = 0x1000, scoped, tag = 'scratch operand']
  %s0 = inlined_call_operand.vmem [shape: f32[2,256], index: 0, kind: input, shape index: {}]
  %s1 = inlined_call_operand.vmem [shape: f32[8,8,256], index: 1, kind: input, shape index: {}]
  %s2 = inlined_call_operand.vmem [shape: f32[128,256], index: 2, kind: input, shape index: {}]
  %s3 = inlined_call_operand.vmem [shape: f32[8,8,128], index: 3, kind: output, shape index: {}]
  %s4 = sld [smem:[#allocation0]]
  $region26: #{ligru_layer_forward.3} parent=0
    _
  %s6 = ssub.s32 1, %s4
  %s7 = scalar_select 0, %s6, %s4
  // Predicated region
  $region2: #{ligru_layer_forward.3} parent=0 // pred_check
    _
  $region3: #{ligru_layer_forward.3} parent=0 // pred_check_branch
    %9 = sbr.rel (0) target = $region5
  $region4: #{ligru_layer_forward.3} parent=0 // pred_region
    _
  $region5: #{ligru_layer_forward.3} parent=0 // pred_fallthru
    _
  // Predicated region
  $region6: #{ligru_layer_forward.3} parent=0 // pred_check
    _
  $region7: #{ligru_layer_forward.3} parent=0 // pred_check_branch
    %11 = sbr.rel (0) target = $region9
  $region8: #{ligru_layer_forward.3} parent=0 // pred_region
    _
  $region9: #{ligru_layer_forward.3} parent=0 // pred_fallthru
    _
  // Predicated region
  $region10: #{ligru_layer_forward.3} parent=0 // pred_check
    _
  $region11: #{ligru_layer_forward.3} parent=0 // pred_check_branch
    %13 = sbr.rel (0) target = $region13
  $region12: #{ligru_layer_forward.3} parent=0 // pred_region
    _
  $region13: #{ligru_layer_forward.3} parent=0 // pred_fallthru
    _
  %p14 = scmp.eq.s32.totalorder 0, 0
  // Predicated region
  $region14: #{ligru_layer_forward.3} parent=0 // pred_check
    %p15 = pneg %p14
  $region15: #{ligru_layer_forward.3} parent=0 // pred_check_branch
    %17 = sbr.rel (%p15) target = $region17
  $region16: #{ligru_layer_forward.3} parent=0 // pred_region
    %18 = vst [vmem:[#allocation2] sm:$0xff] 0.0
  $region17: #{ligru_layer_forward.3} parent=0 // pred_fallthru
    _
  %v19 = vld [vmem:[%s0] ss:$2 sm:$0x3]
  %s20 = scalar_lea.vmem %s0, 1
  %v21 = vld [vmem:[%s20] ss:$2 sm:$0x3]
  %v22 = vld [vmem:[%s2] sm:$0xff]
  %v23 = vld [vmem:[%s2 + $0x8] sm:$0xff]
  %v24 = vld [vmem:[%s2 + $0x10] sm:$0xff]
  %v25 = vld [vmem:[%s2 + $0x18] sm:$0xff]
  %v26 = vld [vmem:[%s2 + $0x20] sm:$0xff]
  %v27 = vld [vmem:[%s2 + $0x28] sm:$0xff]
  %v28 = vld [vmem:[%s2 + $0x30] sm:$0xff]
  %v29 = vld [vmem:[%s2 + $0x38] sm:$0xff]
  %v30 = vld [vmem:[%s2 + $0x40] sm:$0xff]
  %v31 = vld [vmem:[%s2 + $0x48] sm:$0xff]
  %v32 = vld [vmem:[%s2 + $0x50] sm:$0xff]
  %v33 = vld [vmem:[%s2 + $0x58] sm:$0xff]
  %v34 = vld [vmem:[%s2 + $0x60] sm:$0xff]
  %v35 = vld [vmem:[%s2 + $0x68] sm:$0xff]
  %v36 = vld [vmem:[%s2 + $0x70] sm:$0xff]
  %v37 = vld [vmem:[%s2 + $0x78] sm:$0xff]
  %v38 = vld [vmem:[%s2 + $0x80] sm:$0xff]
  %v39 = vld [vmem:[%s2 + $0x88] sm:$0xff]
  %v40 = vld [vmem:[%s2 + $0x90] sm:$0xff]
  %v41 = vld [vmem:[%s2 + $0x98] sm:$0xff]
  %v42 = vld [vmem:[%s2 + $0xa0] sm:$0xff]
  %v43 = vld [vmem:[%s2 + $0xa8] sm:$0xff]
  %v44 = vld [vmem:[%s2 + $0xb0] sm:$0xff]
  %v45 = vld [vmem:[%s2 + $0xb8] sm:$0xff]
  %v46 = vld [vmem:[%s2 + $0xc0] sm:$0xff]
  %v47 = vld [vmem:[%s2 + $0xc8] sm:$0xff]
  %v48 = vld [vmem:[%s2 + $0xd0] sm:$0xff]
  %v49 = vld [vmem:[%s2 + $0xd8] sm:$0xff]
  %v50 = vld [vmem:[%s2 + $0xe0] sm:$0xff]
  %v51 = vld [vmem:[%s2 + $0xe8] sm:$0xff]
  %v52 = vld [vmem:[%s2 + $0xf0] sm:$0xff]
  %v53 = vld [vmem:[%s2 + $0xf8] sm:$0xff]
  %v54 = vld [vmem:[#allocation2] sm:$0xff]
  %v55 = vld [vmem:[%s1] ss:$8 sm:$0x3]
  %s56 = scalar_lea.vmem %s1, 16
  %v57 = vld [vmem:[%s56] ss:$8 sm:$0x3]
  %s58 = scalar_lea.vmem %s1, 32
  %v59 = vld [vmem:[%s58] ss:$8 sm:$0x3]
  %s60 = scalar_lea.vmem %s1, 48
  %v61 = vld [vmem:[%s60] ss:$8 sm:$0x3]
  %s62 = scalar_lea.vmem %s1, 64
  %v63 = vld [vmem:[%s62] ss:$8 sm:$0x3]
  %s64 = scalar_lea.vmem %s1, 80
  %v65 = vld [vmem:[%s64] ss:$8 sm:$0x3]
  %s66 = scalar_lea.vmem %s1, 96
  %v67 = vld [vmem:[%s66] ss:$8 sm:$0x3]
  %s68 = scalar_lea.vmem %s1, 112
  %v69 = vld [vmem:[%s68] ss:$8 sm:$0x3]
  %v71 = vlaneseq
  %v72 = vshrl.u32 %v71, 7
  %v73 = vsub.s32 0, %v72
  %v74 = vrot.slane %v19, %v73
  %v75 = vlaneseq
  %v76 = vshrl.u32 %v75, 7
  %v77 = vsub.s32 1, %v76
  %v78 = vrot.slane %v19, %v77
  %v79 = vcombine.low %v74, %v78
  %v80 = vcombine.high %v74, %v78
  %v82 = vunpack.c.l.s4 1966171168
  %v83 = vunpack.c.0.s8 %v82
  %v84 = vlaneseq
  %v85 = vshrl.u32 %v84, 7
  %v86 = vsub.s32 %v83, %v85
  %v87 = vrot.slane %v79, %v86
  %v89 = vunpack.c.l.s4 1966171168
  %v90 = vunpack.c.0.s8 %v89
  %v91 = vlaneseq
  %v92 = vshrl.u32 %v91, 7
  %v93 = vsub.s32 %v90, %v92
  %v94 = vrot.slane %v80, %v93
  %v95 = vcombine.high %v87, %v87
  %v96 = vcombine.high %v94, %v94
  %v98 = vunpack.c.l.s4 1966171168
  %v99 = vunpack.c.0.s8 %v98
  %v100 = vlaneseq
  %v101 = vshrl.u32 %v100, 7
  %v102 = vsub.s32 %v99, %v101
  %v103 = vrot.slane %v87, %v102
  %v105 = vunpack.c.l.s4 1966171168
  %v106 = vunpack.c.0.s8 %v105
  %v107 = vlaneseq
  %v108 = vshrl.u32 %v107, 7
  %v109 = vsub.s32 %v106, %v108
  %v110 = vrot.slane %v94, %v109
  %v112 = vunpack.c.l.s4 1966171168
  %v113 = vunpack.c.0.s8 %v112
  %v114 = vlaneseq
  %v115 = vshrl.u32 %v114, 7
  %v116 = vsub.s32 %v113, %v115
  %v117 = vrot.slane %v95, %v116
  %v119 = vunpack.c.l.s4 1966171168
  %v120 = vunpack.c.0.s8 %v119
  %v121 = vlaneseq
  %v122 = vshrl.u32 %v121, 7
  %v123 = vsub.s32 %v120, %v122
  %v124 = vrot.slane %v96, %v123
  %v125 = vcombine.high %v103, %v103
  %v126 = vcombine.high %v110, %v110
  %v127 = vcombine.high %v117, %v117
  %v128 = vcombine.high %v124, %v124
  %v137 = vsub.f32 %v55, %v103
  %v138 = vsub.f32 %v57, %v117
  %v139 = vsub.f32 %v59, %v125
  %v140 = vsub.f32 %v61, %v127
  %v141 = vsub.f32 %v63, %v110
  %v142 = vsub.f32 %v65, %v124
  %v143 = vsub.f32 %v67, %v126
  %v144 = vsub.f32 %v69, %v128
  %v146 = vlaneseq
  %v147 = vshrl.u32 %v146, 7
  %v148 = vsub.s32 0, %v147
  %v149 = vrot.slane %v21, %v148
  %v150 = vlaneseq
  %v151 = vshrl.u32 %v150, 7
  %v152 = vsub.s32 1, %v151
  %v153 = vrot.slane %v21, %v152
  %v154 = vcombine.low %v149, %v153
  %v155 = vcombine.high %v149, %v153
  %v157 = vunpack.c.l.s4 1966171168
  %v158 = vunpack.c.0.s8 %v157
  %v159 = vlaneseq
  %v160 = vshrl.u32 %v159, 7
  %v161 = vsub.s32 %v158, %v160
  %v162 = vrot.slane %v154, %v161
  %v164 = vunpack.c.l.s4 1966171168
  %v165 = vunpack.c.0.s8 %v164
  %v166 = vlaneseq
  %v167 = vshrl.u32 %v166, 7
  %v168 = vsub.s32 %v165, %v167
  %v169 = vrot.slane %v155, %v168
  %v170 = vcombine.high %v162, %v162
  %v171 = vcombine.high %v169, %v169
  %v173 = vunpack.c.l.s4 1966171168
  %v174 = vunpack.c.0.s8 %v173
  %v175 = vlaneseq
  %v176 = vshrl.u32 %v175, 7
  %v177 = vsub.s32 %v174, %v176
  %v178 = vrot.slane %v162, %v177
  %v180 = vunpack.c.l.s4 1966171168
  %v181 = vunpack.c.0.s8 %v180
  %v182 = vlaneseq
  %v183 = vshrl.u32 %v182, 7
  %v184 = vsub.s32 %v181, %v183
  %v185 = vrot.slane %v169, %v184
  %v187 = vunpack.c.l.s4 1966171168
  %v188 = vunpack.c.0.s8 %v187
  %v189 = vlaneseq
  %v190 = vshrl.u32 %v189, 7
  %v191 = vsub.s32 %v188, %v190
  %v192 = vrot.slane %v170, %v191
  %v194 = vunpack.c.l.s4 1966171168
  %v195 = vunpack.c.0.s8 %v194
  %v196 = vlaneseq
  %v197 = vshrl.u32 %v196, 7
  %v198 = vsub.s32 %v195, %v197
  %v199 = vrot.slane %v171, %v198
  %v200 = vcombine.high %v178, %v178
  %v201 = vcombine.high %v185, %v185
  %v202 = vcombine.high %v192, %v192
  %v203 = vcombine.high %v199, %v199
  %v212 = vmul.f32 %v137, %v178
  %v213 = vmul.f32 %v138, %v192
  %v214 = vmul.f32 %v139, %v200
  %v215 = vmul.f32 %v140, %v202
  %v216 = vmul.f32 %v141, %v185
  %v217 = vmul.f32 %v142, %v199
  %v218 = vmul.f32 %v143, %v201
  %v219 = vmul.f32 %v144, %v203
  %220 = vmatprep.subr.mxu0 %v23
  %221 = vmatpush1.msra.mxu0 %v22
  %222 = vmatprep.subr.mxu0 %v25
  %223 = vmatpush1.msra.mxu0 %v24
  %224 = vmatprep.subr.mxu0 %v27
  %225 = vmatpush1.msra.mxu0 %v26
  %226 = vmatprep.subr.mxu0 %v29
  %227 = vmatpush1.msra.mxu0 %v28
  %228 = vmatprep.subr.mxu0 %v31
  %229 = vmatpush1.msra.mxu0 %v30
  %230 = vmatprep.subr.mxu0 %v33
  %231 = vmatpush1.msra.mxu0 %v32
  %232 = vmatprep.subr.mxu0 %v35
  %233 = vmatpush1.msra.mxu0 %v34
  %234 = vmatprep.subr.mxu0 %v37
  %235 = vmatpush1.msra.mxu0 %v36
  %236 = vmatprep.subr.mxu0 %v39
  %237 = vmatpush1.msra.mxu0 %v38
  %238 = vmatprep.subr.mxu0 %v41
  %239 = vmatpush1.msra.mxu0 %v40
  %240 = vmatprep.subr.mxu0 %v43
  %241 = vmatpush1.msra.mxu0 %v42
  %242 = vmatprep.subr.mxu0 %v45
  %243 = vmatpush1.msra.mxu0 %v44
  %244 = vmatprep.subr.mxu0 %v47
  %245 = vmatpush1.msra.mxu0 %v46
  %246 = vmatprep.subr.mxu0 %v49
  %247 = vmatpush1.msra.mxu0 %v48
  %248 = vmatprep.subr.mxu0 %v51
  %249 = vmatpush1.msra.mxu0 %v50
  %250 = vmatprep.subr.mxu0 %v53
  %251 = vmatpush1.msra.mxu0 %v52
  %252 = vmatprep.subr.mxu0 0.0
  %253 = vmatpush1.msra.mxu0 0.0
  %254 = vmatprep.subr.mxu0 0.0
  %255 = vmatpush1.msra.mxu0 0.0
  %256 = vmatprep.subr.mxu0 0.0
  %257 = vmatpush1.msra.mxu0 0.0
  %258 = vmatprep.subr.mxu0 0.0
  %259 = vmatpush1.msra.mxu0 0.0
  %260 = vmatprep.subr.mxu0 0.0
  %261 = vmatpush1.msra.mxu0 0.0
  %262 = vmatprep.subr.mxu0 0.0
  %263 = vmatpush1.msra.mxu0 0.0
  %264 = vmatprep.subr.mxu0 0.0
  %265 = vmatpush1.msra.mxu0 0.0
  %266 = vmatprep.subr.mxu0 0.0
  %267 = vmatpush1.msra.mxu0 0.0
  %268 = vmatprep.subr.mxu0 0.0
  %269 = vmatpush1.msra.mxu0 0.0
  %270 = vmatprep.subr.mxu0 0.0
  %271 = vmatpush1.msra.mxu0 0.0
  %272 = vmatprep.subr.mxu0 0.0
  %273 = vmatpush1.msra.mxu0 0.0
  %274 = vmatprep.subr.mxu0 0.0
  %275 = vmatpush1.msra.mxu0 0.0
  %276 = vmatprep.subr.mxu0 0.0
  %277 = vmatpush1.msra.mxu0 0.0
  %278 = vmatprep.subr.mxu0 0.0
  %279 = vmatpush1.msra.mxu0 0.0
  %280 = vmatprep.subr.mxu0 0.0
  %281 = vmatpush1.msra.mxu0 0.0
  %282 = vmatprep.subr.mxu0 0.0
  %283 = vmatpush1.msra.mxu0 0.0
  %284 = vmatprep.mubr.f32.mxu0 0.0
  %285 = vmatmul.mubr.f32.gmra.mrb[0].mxu0 %v54
  %v286 = vpop.f32.mrb[0].mxu0
  %v287 = vadd.f32 0.0, %v286
  %v288 = vpop.f32.mrb[0].mxu0
  %v289 = vadd.f32 0.0, %v288
  %290 = vdwg.mxu0
  %v291 = vadd.f32 %v287, %v289
  %292 = vadd.xlane.f32.xlu0 %v291
  %v293 = vpop.xlane.xlu0 %292
  %v294 = vmul.f32 %v287, %v287
  %v295 = vmul.f32 %v289, %v289
  %v296 = vadd.f32 %v294, %v295
  %297 = vadd.xlane.f32.xlu0 %v296
  %v298 = vpop.xlane.xlu0 %297
  %v299 = vmul.f32 %v293, 0.015625
  %v300 = vmul.f32 %v298, 0.015625
  %v301 = vmul.f32 %v299, %v299
  %v302 = vsub.f32 %v300, %v301
  %v303 = vmax.f32 %v302, 0.0
  %v304 = vsub.f32 %v287, %v299
  %v305 = vsub.f32 %v289, %v299
  %v306 = vadd.f32 %v303, 1e-05
  %v307 = vrsqrt.pop %v306
  %v308 = vmul.f32 %v304, %v307
  %v309 = vmul.f32 %v305, %v307
  %v312 = vcombine.low %v308, %v309
  %v313 = vcombine.high %v308, %v309
  %v315 = vunpack.c.l.s4 1966171168
  %v316 = vunpack.c.0.s8 %v315
  %v317 = vlaneseq
  %v318 = vshrl.u32 %v317, 7
  %v319 = vsub.s32 %v316, %v318
  %v320 = vrot.slane %v312, %v319
  %v322 = vunpack.c.l.s4 1966171168
  %v323 = vunpack.c.0.s8 %v322
  %v324 = vlaneseq
  %v325 = vshrl.u32 %v324, 7
  %v326 = vsub.s32 %v323, %v325
  %v327 = vrot.slane %v313, %v326
  %v328 = vcombine.high %v320, %v320
  %v329 = vcombine.high %v327, %v327
  %v331 = vunpack.c.l.s4 1966171168
  %v332 = vunpack.c.0.s8 %v331
  %v333 = vlaneseq
  %v334 = vshrl.u32 %v333, 7
  %v335 = vsub.s32 %v332, %v334
  %v336 = vrot.slane %v320, %v335
  %v338 = vunpack.c.l.s4 1966171168
  %v339 = vunpack.c.0.s8 %v338
  %v340 = vlaneseq
  %v341 = vshrl.u32 %v340, 7
  %v342 = vsub.s32 %v339, %v341
  %v343 = vrot.slane %v327, %v342
  %v345 = vunpack.c.l.s4 1966171168
  %v346 = vunpack.c.0.s8 %v345
  %v347 = vlaneseq
  %v348 = vshrl.u32 %v347, 7
  %v349 = vsub.s32 %v346, %v348
  %v350 = vrot.slane %v328, %v349
  %v352 = vunpack.c.l.s4 1966171168
  %v353 = vunpack.c.0.s8 %v352
  %v354 = vlaneseq
  %v355 = vshrl.u32 %v354, 7
  %v356 = vsub.s32 %v353, %v355
  %v357 = vrot.slane %v329, %v356
  %v358 = vcombine.high %v336, %v336
  %v359 = vcombine.high %v343, %v343
  %v360 = vcombine.high %v350, %v350
  %v361 = vcombine.high %v357, %v357
  %v370 = vadd.f32 %v212, %v336
  %v371 = vadd.f32 %v213, %v350
  %v372 = vadd.f32 %v214, %v358
  %v373 = vadd.f32 %v215, %v360
  %v374 = vadd.f32 %v216, %v343
  %v375 = vadd.f32 %v217, %v357
  %v376 = vadd.f32 %v218, %v359
  %v377 = vadd.f32 %v219, %v361
  %v386 = vrot.slane %v370, 1
  %v387 = vrot.slane %v371, 1
  %v388 = vrot.slane %v372, 1
  %v389 = vrot.slane %v373, 1
  %v390 = vrot.slane %v374, 1
  %v391 = vrot.slane %v375, 1
  %v392 = vrot.slane %v376, 1
  %v393 = vrot.slane %v377, 1
  %v402 = vxor.u32 %v386, 2147483648
  %v403 = vxor.u32 %v387, 2147483648
  %v404 = vxor.u32 %v388, 2147483648
  %v405 = vxor.u32 %v389, 2147483648
  %v406 = vxor.u32 %v390, 2147483648
  %v407 = vxor.u32 %v391, 2147483648
  %v408 = vxor.u32 %v392, 2147483648
  %v409 = vxor.u32 %v393, 2147483648
  %v410 = vmul.f32 %v402, 1.442695
  %v411 = vpow.pop %v410
  %v412 = vmul.f32 %v403, 1.442695
  %v413 = vpow.pop %v412
  %v414 = vmul.f32 %v404, 1.442695
  %v415 = vpow.pop %v414
  %v416 = vmul.f32 %v405, 1.442695
  %v417 = vpow.pop %v416
  %v418 = vmul.f32 %v406, 1.442695
  %v419 = vpow.pop %v418
  %v420 = vmul.f32 %v407, 1.442695
  %v421 = vpow.pop %v420
  %v422 = vmul.f32 %v408, 1.442695
  %v423 = vpow.pop %v422
  %v424 = vmul.f32 %v409, 1.442695
  %v425 = vpow.pop %v424
  %v426 = vadd.f32 %v411, 1.0
  %v427 = vadd.f32 %v413, 1.0
  %v428 = vadd.f32 %v415, 1.0
  %v429 = vadd.f32 %v417, 1.0
  %v430 = vadd.f32 %v419, 1.0
  %v431 = vadd.f32 %v421, 1.0
  %v432 = vadd.f32 %v423, 1.0
  %v433 = vadd.f32 %v425, 1.0
  %v434 = vrcp.pop %v426
  %v435 = vmul.f32 1.0, %v434
  %v436 = vrcp.pop %v427
  %v437 = vmul.f32 1.0, %v436
  %v438 = vrcp.pop %v428
  %v439 = vmul.f32 1.0, %v438
  %v440 = vrcp.pop %v429
  %v441 = vmul.f32 1.0, %v440
  %v442 = vrcp.pop %v430
  %v443 = vmul.f32 1.0, %v442
  %v444 = vrcp.pop %v431
  %v445 = vmul.f32 1.0, %v444
  %v446 = vrcp.pop %v432
  %v447 = vmul.f32 1.0, %v446
  %v448 = vrcp.pop %v433
  %v449 = vmul.f32 1.0, %v448
  %v450 = vmax.f32 %v370, 0.0
  %v451 = vmax.f32 %v371, 0.0
  %v452 = vmax.f32 %v372, 0.0
  %v453 = vmax.f32 %v373, 0.0
  %v454 = vmax.f32 %v374, 0.0
  %v455 = vmax.f32 %v375, 0.0
  %v456 = vmax.f32 %v376, 0.0
  %v457 = vmax.f32 %v377, 0.0
  %v466 = vcombine.low %v450, %v451
  %v467 = vcombine.low %v452, %v453
  %v468 = vcombine.low %v454, %v455
  %v469 = vcombine.low %v456, %v457
  %v471 = vunpack.c.l.s4 1966171168
  %v472 = vunpack.c.0.s8 %v471
  %v473 = vlaneseq
  %v474 = vshrl.u32 %v473, 7
  %v475 = vsub.s32 %v472, %v474
  %v476 = vrot.slane %v466, %v475
  %v478 = vunpack.c.l.s4 1966171168
  %v479 = vunpack.c.0.s8 %v478
  %v480 = vlaneseq
  %v481 = vshrl.u32 %v480, 7
  %v482 = vsub.s32 %v479, %v481
  %v483 = vrot.slane %v467, %v482
  %v485 = vunpack.c.l.s4 1966171168
  %v486 = vunpack.c.0.s8 %v485
  %v487 = vlaneseq
  %v488 = vshrl.u32 %v487, 7
  %v489 = vsub.s32 %v486, %v488
  %v490 = vrot.slane %v468, %v489
  %v492 = vunpack.c.l.s4 1966171168
  %v493 = vunpack.c.0.s8 %v492
  %v494 = vlaneseq
  %v495 = vshrl.u32 %v494, 7
  %v496 = vsub.s32 %v493, %v495
  %v497 = vrot.slane %v469, %v496
  %v498 = vcombine.low %v476, %v483
  %v499 = vcombine.low %v490, %v497
  %v501 = vunpack.c.l.s4 1966171168
  %v502 = vunpack.c.0.s8 %v501
  %v503 = vlaneseq
  %v504 = vshrl.u32 %v503, 7
  %v505 = vsub.s32 %v502, %v504
  %v506 = vrot.slane %v498, %v505
  %v508 = vunpack.c.l.s4 1966171168
  %v509 = vunpack.c.0.s8 %v508
  %v510 = vlaneseq
  %v511 = vshrl.u32 %v510, 7
  %v512 = vsub.s32 %v509, %v511
  %v513 = vrot.slane %v499, %v512
  %v514 = vcombine.low %v506, %v513
  %v516 = vsub.f32 %v54, %v514
  %v518 = vcombine.high %v516, %v516
  %v520 = vunpack.c.l.s4 1966171168
  %v521 = vunpack.c.0.s8 %v520
  %v522 = vlaneseq
  %v523 = vshrl.u32 %v522, 7
  %v524 = vsub.s32 %v521, %v523
  %v525 = vrot.slane %v516, %v524
  %v527 = vunpack.c.l.s4 1966171168
  %v528 = vunpack.c.0.s8 %v527
  %v529 = vlaneseq
  %v530 = vshrl.u32 %v529, 7
  %v531 = vsub.s32 %v528, %v530
  %v532 = vrot.slane %v518, %v531
  %v533 = vcombine.high %v525, %v525
  %v534 = vcombine.high %v532, %v532
  %v536 = vunpack.c.l.s4 1966171168
  %v537 = vunpack.c.0.s8 %v536
  %v538 = vlaneseq
  %v539 = vshrl.u32 %v538, 7
  %v540 = vsub.s32 %v537, %v539
  %v541 = vrot.slane %v525, %v540
  %v543 = vunpack.c.l.s4 1966171168
  %v544 = vunpack.c.0.s8 %v543
  %v545 = vlaneseq
  %v546 = vshrl.u32 %v545, 7
  %v547 = vsub.s32 %v544, %v546
  %v548 = vrot.slane %v532, %v547
  %v550 = vunpack.c.l.s4 1966171168
  %v551 = vunpack.c.0.s8 %v550
  %v552 = vlaneseq
  %v553 = vshrl.u32 %v552, 7
  %v554 = vsub.s32 %v551, %v553
  %v555 = vrot.slane %v533, %v554
  %v557 = vunpack.c.l.s4 1966171168
  %v558 = vunpack.c.0.s8 %v557
  %v559 = vlaneseq
  %v560 = vshrl.u32 %v559, 7
  %v561 = vsub.s32 %v558, %v560
  %v562 = vrot.slane %v534, %v561
  %v563 = vcombine.high %v541, %v541
  %v564 = vcombine.high %v548, %v548
  %v565 = vcombine.high %v555, %v555
  %v566 = vcombine.high %v562, %v562
  %v575 = vmul.f32 %v435, %v541
  %v576 = vmul.f32 %v437, %v555
  %v577 = vmul.f32 %v439, %v563
  %v578 = vmul.f32 %v441, %v565
  %v579 = vmul.f32 %v443, %v548
  %v580 = vmul.f32 %v445, %v562
  %v581 = vmul.f32 %v447, %v564
  %v582 = vmul.f32 %v449, %v566
  %v583 = vadd.f32 %v450, %v575
  %v584 = vadd.f32 %v451, %v576
  %v585 = vadd.f32 %v452, %v577
  %v586 = vadd.f32 %v453, %v578
  %v587 = vadd.f32 %v454, %v579
  %v588 = vadd.f32 %v455, %v580
  %v589 = vadd.f32 %v456, %v581
  %v590 = vadd.f32 %v457, %v582
  %591 = vst [vmem:[%s3] sm:$0x1] %v583
  %592 = vst [vmem:[%s3 + $0x8] sm:$0x1] %v584
  %593 = vst [vmem:[%s3 + $0x10] sm:$0x1] %v585
  %594 = vst [vmem:[%s3 + $0x18] sm:$0x1] %v586
  %595 = vst [vmem:[%s3 + $0x20] sm:$0x1] %v587
  %596 = vst [vmem:[%s3 + $0x28] sm:$0x1] %v588
  %597 = vst [vmem:[%s3 + $0x30] sm:$0x1] %v589
  %598 = vst [vmem:[%s3 + $0x38] sm:$0x1] %v590
  %s599 = scalar_lea.vmem %s1, 1
  %v600 = vld [vmem:[%s599] ss:$8 sm:$0x3]
  %s601 = scalar_lea.vmem %s1, 17
  %v602 = vld [vmem:[%s601] ss:$8 sm:$0x3]
  %s603 = scalar_lea.vmem %s1, 33
  %v604 = vld [vmem:[%s603] ss:$8 sm:$0x3]
  %s605 = scalar_lea.vmem %s1, 49
  %v606 = vld [vmem:[%s605] ss:$8 sm:$0x3]
  %s607 = scalar_lea.vmem %s1, 65
  %v608 = vld [vmem:[%s607] ss:$8 sm:$0x3]
  %s609 = scalar_lea.vmem %s1, 81
  %v610 = vld [vmem:[%s609] ss:$8 sm:$0x3]
  %s611 = scalar_lea.vmem %s1, 97
  %v612 = vld [vmem:[%s611] ss:$8 sm:$0x3]
  %s613 = scalar_lea.vmem %s1, 113
  %v614 = vld [vmem:[%s613] ss:$8 sm:$0x3]
  %v615 = vsub.f32 %v600, %v103
  %v616 = vsub.f32 %v602, %v117
  %v617 = vsub.f32 %v604, %v125
  %v618 = vsub.f32 %v606, %v127
  %v619 = vsub.f32 %v608, %v110
  %v620 = vsub.f32 %v610, %v124
  %v621 = vsub.f32 %v612, %v126
  %v622 = vsub.f32 %v614, %v128
  %v623 = vmul.f32 %v615, %v178
  %v624 = vmul.f32 %v616, %v192
  %v625 = vmul.f32 %v617, %v200
  %v626 = vmul.f32 %v618, %v202
  %v627 = vmul.f32 %v619, %v185
  %v628 = vmul.f32 %v620, %v199
  %v629 = vmul.f32 %v621, %v201
  %v630 = vmul.f32 %v622, %v203
  %v639 = vcombine.low %v583, %v584
  %v640 = vcombine.low %v585, %v586
  %v641 = vcombine.low %v587, %v588
  %v642 = vcombine.low %v589, %v590
  %v644 = vunpack.c.l.s4 1966171168
  %v645 = vunpack.c.0.s8 %v644
  %v646 = vlaneseq
  %v647 = vshrl.u32 %v646, 7
  %v648 = vsub.s32 %v645, %v647
  %v649 = vrot.slane %v639, %v648
  %v651 = vunpack.c.l.s4 1966171168
  %v652 = vunpack.c.0.s8 %v651
  %v653 = vlaneseq
  %v654 = vshrl.u32 %v653, 7
  %v655 = vsub.s32 %v652, %v654
  %v656 = vrot.slane %v640, %v655
  %v658 = vunpack.c.l.s4 1966171168
  %v659 = vunpack.c.0.s8 %v658
  %v660 = vlaneseq
  %v661 = vshrl.u32 %v660, 7
  %v662 = vsub.s32 %v659, %v661
  %v663 = vrot.slane %v641, %v662
  %v665 = vunpack.c.l.s4 1966171168
  %v666 = vunpack.c.0.s8 %v665
  %v667 = vlaneseq
  %v668 = vshrl.u32 %v667, 7
  %v669 = vsub.s32 %v666, %v668
  %v670 = vrot.slane %v642, %v669
  %v671 = vcombine.low %v649, %v656
  %v672 = vcombine.low %v663, %v670
  %v674 = vunpack.c.l.s4 1966171168
  %v675 = vunpack.c.0.s8 %v674
  %v676 = vlaneseq
  %v677 = vshrl.u32 %v676, 7
  %v678 = vsub.s32 %v675, %v677
  %v679 = vrot.slane %v671, %v678
  %v681 = vunpack.c.l.s4 1966171168
  %v682 = vunpack.c.0.s8 %v681
  %v683 = vlaneseq
  %v684 = vshrl.u32 %v683, 7
  %v685 = vsub.s32 %v682, %v684
  %v686 = vrot.slane %v672, %v685
  %v687 = vcombine.low %v679, %v686
  %689 = vmatprep.subr.mxu0 %v23
  %690 = vmatpush1.msra.mxu0 %v22
  %691 = vmatprep.subr.mxu0 %v25
  %692 = vmatpush1.msra.mxu0 %v24
  %693 = vmatprep.subr.mxu0 %v27
  %694 = vmatpush1.msra.mxu0 %v26
  %695 = vmatprep.subr.mxu0 %v29
  %696 = vmatpush1.msra.mxu0 %v28
  %697 = vmatprep.subr.mxu0 %v31
  %698 = vmatpush1.msra.mxu0 %v30
  %699 = vmatprep.subr.mxu0 %v33
  %700 = vmatpush1.msra.mxu0 %v32
  %701 = vmatprep.subr.mxu0 %v35
  %702 = vmatpush1.msra.mxu0 %v34
  %703 = vmatprep.subr.mxu0 %v37
  %704 = vmatpush1.msra.mxu0 %v36
  %705 = vmatprep.subr.mxu0 %v39
  %706 = vmatpush1.msra.mxu0 %v38
  %707 = vmatprep.subr.mxu0 %v41
  %708 = vmatpush1.msra.mxu0 %v40
  %709 = vmatprep.subr.mxu0 %v43
  %710 = vmatpush1.msra.mxu0 %v42
  %711 = vmatprep.subr.mxu0 %v45
  %712 = vmatpush1.msra.mxu0 %v44
  %713 = vmatprep.subr.mxu0 %v47
  %714 = vmatpush1.msra.mxu0 %v46
  %715 = vmatprep.subr.mxu0 %v49
  %716 = vmatpush1.msra.mxu0 %v48
  %717 = vmatprep.subr.mxu0 %v51
  %718 = vmatpush1.msra.mxu0 %v50
  %719 = vmatprep.subr.mxu0 %v53
  %720 = vmatpush1.msra.mxu0 %v52
  %721 = vmatprep.subr.mxu0 0.0
  %722 = vmatpush1.msra.mxu0 0.0
  %723 = vmatprep.subr.mxu0 0.0
  %724 = vmatpush1.msra.mxu0 0.0
  %725 = vmatprep.subr.mxu0 0.0
  %726 = vmatpush1.msra.mxu0 0.0
  %727 = vmatprep.subr.mxu0 0.0
  %728 = vmatpush1.msra.mxu0 0.0
  %729 = vmatprep.subr.mxu0 0.0
  %730 = vmatpush1.msra.mxu0 0.0
  %731 = vmatprep.subr.mxu0 0.0
  %732 = vmatpush1.msra.mxu0 0.0
  %733 = vmatprep.subr.mxu0 0.0
  %734 = vmatpush1.msra.mxu0 0.0
  %735 = vmatprep.subr.mxu0 0.0
  %736 = vmatpush1.msra.mxu0 0.0
  %737 = vmatprep.subr.mxu0 0.0
  %738 = vmatpush1.msra.mxu0 0.0
  %739 = vmatprep.subr.mxu0 0.0
  %740 = vmatpush1.msra.mxu0 0.0
  %741 = vmatprep.subr.mxu0 0.0
  %742 = vmatpush1.msra.mxu0 0.0
  %743 = vmatprep.subr.mxu0 0.0
  %744 = vmatpush1.msra.mxu0 0.0
  %745 = vmatprep.subr.mxu0 0.0
  %746 = vmatpush1.msra.mxu0 0.0
  %747 = vmatprep.subr.mxu0 0.0
  %748 = vmatpush1.msra.mxu0 0.0
  %749 = vmatprep.subr.mxu0 0.0
  %750 = vmatpush1.msra.mxu0 0.0
  %751 = vmatprep.subr.mxu0 0.0
  %752 = vmatpush1.msra.mxu0 0.0
  %753 = vmatprep.mubr.f32.mxu0 0.0
  %754 = vmatmul.mubr.f32.gmra.mrb[0].mxu0 %v687
  %v755 = vpop.f32.mrb[0].mxu0
  %v756 = vadd.f32 0.0, %v755
  %v757 = vpop.f32.mrb[0].mxu0
  %v758 = vadd.f32 0.0, %v757
  %759 = vdwg.mxu0
  %v760 = vadd.f32 %v756, %v758
  %761 = vadd.xlane.f32.xlu0 %v760
  %v762 = vpop.xlane.xlu0 %761
  %v763 = vmul.f32 %v756, %v756
  %v764 = vmul.f32 %v758, %v758
  %v765 = vadd.f32 %v763, %v764
  %766 = vadd.xlane.f32.xlu0 %v765
  %v767 = vpop.xlane.xlu0 %766
  %v768 = vmul.f32 %v762, 0.015625
  %v769 = vmul.f32 %v767, 0.015625
  %v770 = vmul.f32 %v768, %v768
  %v771 = vsub.f32 %v769, %v770
  %v772 = vmax.f32 %v771, 0.0
  %v773 = vsub.f32 %v756, %v768
  %v774 = vsub.f32 %v758, %v768
  %v775 = vadd.f32 %v772, 1e-05
  %v776 = vrsqrt.pop %v775
  %v777 = vmul.f32 %v773, %v776
  %v778 = vmul.f32 %v774, %v776
  %v781 = vcombine.low %v777, %v778
  %v782 = vcombine.high %v777, %v778
  %v784 = vunpack.c.l.s4 1966171168
  %v785 = vunpack.c.0.s8 %v784
  %v786 = vlaneseq
  %v787 = vshrl.u32 %v786, 7
  %v788 = vsub.s32 %v785, %v787
  %v789 = vrot.slane %v781, %v788
  %v791 = vunpack.c.l.s4 1966171168
  %v792 = vunpack.c.0.s8 %v791
  %v793 = vlaneseq
  %v794 = vshrl.u32 %v793, 7
  %v795 = vsub.s32 %v792, %v794
  %v796 = vrot.slane %v782, %v795
  %v797 = vcombine.high %v789, %v789
  %v798 = vcombine.high %v796, %v796
  %v800 = vunpack.c.l.s4 1966171168
  %v801 = vunpack.c.0.s8 %v800
  %v802 = vlaneseq
  %v803 = vshrl.u32 %v802, 7
  %v804 = vsub.s32 %v801, %v803
  %v805 = vrot.slane %v789, %v804
  %v807 = vunpack.c.l.s4 1966171168
  %v808 = vunpack.c.0.s8 %v807
  %v809 = vlaneseq
  %v810 = vshrl.u32 %v809, 7
  %v811 = vsub.s32 %v808, %v810
  %v812 = vrot.slane %v796, %v811
  %v814 = vunpack.c.l.s4 1966171168
  %v815 = vunpack.c.0.s8 %v814
  %v816 = vlaneseq
  %v817 = vshrl.u32 %v816, 7
  %v818 = vsub.s32 %v815, %v817
  %v819 = vrot.slane %v797, %v818
  %v821 = vunpack.c.l.s4 1966171168
  %v822 = vunpack.c.0.s8 %v821
  %v823 = vlaneseq
  %v824 = vshrl.u32 %v823, 7
  %v825 = vsub.s32 %v822, %v824
  %v826 = vrot.slane %v798, %v825
  %v827 = vcombine.high %v805, %v805
  %v828 = vcombine.high %v812, %v812
  %v829 = vcombine.high %v819, %v819
  %v830 = vcombine.high %v826, %v826
  %v839 = vadd.f32 %v623, %v805
  %v840 = vadd.f32 %v624, %v819
  %v841 = vadd.f32 %v625, %v827
  %v842 = vadd.f32 %v626, %v829
  %v843 = vadd.f32 %v627, %v812
  %v844 = vadd.f32 %v628, %v826
  %v845 = vadd.f32 %v629, %v828
  %v846 = vadd.f32 %v630, %v830
  %v855 = vrot.slane %v839, 1
  %v856 = vrot.slane %v840, 1
  %v857 = vrot.slane %v841, 1
  %v858 = vrot.slane %v842, 1
  %v859 = vrot.slane %v843, 1
  %v860 = vrot.slane %v844, 1
  %v861 = vrot.slane %v845, 1
  %v862 = vrot.slane %v846, 1
  %v871 = vxor.u32 %v855, 2147483648
  %v872 = vxor.u32 %v856, 2147483648
  %v873 = vxor.u32 %v857, 2147483648
  %v874 = vxor.u32 %v858, 2147483648
  %v875 = vxor.u32 %v859, 2147483648
  %v876 = vxor.u32 %v860, 2147483648
  %v877 = vxor.u32 %v861, 2147483648
  %v878 = vxor.u32 %v862, 2147483648
  %v879 = vmul.f32 %v871, 1.442695
  %v880 = vpow.pop %v879
  %v881 = vmul.f32 %v872, 1.442695
  %v882 = vpow.pop %v881
  %v883 = vmul.f32 %v873, 1.442695
  %v884 = vpow.pop %v883
  %v885 = vmul.f32 %v874, 1.442695
  %v886 = vpow.pop %v885
  %v887 = vmul.f32 %v875, 1.442695
  %v888 = vpow.pop %v887
  %v889 = vmul.f32 %v876, 1.442695
  %v890 = vpow.pop %v889
  %v891 = vmul.f32 %v877, 1.442695
  %v892 = vpow.pop %v891
  %v893 = vmul.f32 %v878, 1.442695
  %v894 = vpow.pop %v893
  %v895 = vadd.f32 %v880, 1.0
  %v896 = vadd.f32 %v882, 1.0
  %v897 = vadd.f32 %v884, 1.0
  %v898 = vadd.f32 %v886, 1.0
  %v899 = vadd.f32 %v888, 1.0
  %v900 = vadd.f32 %v890, 1.0
  %v901 = vadd.f32 %v892, 1.0
  %v902 = vadd.f32 %v894, 1.0
  %v903 = vrcp.pop %v895
  %v904 = vmul.f32 1.0, %v903
  %v905 = vrcp.pop %v896
  %v906 = vmul.f32 1.0, %v905
  %v907 = vrcp.pop %v897
  %v908 = vmul.f32 1.0, %v907
  %v909 = vrcp.pop %v898
  %v910 = vmul.f32 1.0, %v909
  %v911 = vrcp.pop %v899
  %v912 = vmul.f32 1.0, %v911
  %v913 = vrcp.pop %v900
  %v914 = vmul.f32 1.0, %v913
  %v915 = vrcp.pop %v901
  %v916 = vmul.f32 1.0, %v915
  %v917 = vrcp.pop %v902
  %v918 = vmul.f32 1.0, %v917
  %v919 = vmax.f32 %v839, 0.0
  %v920 = vmax.f32 %v840, 0.0
  %v921 = vmax.f32 %v841, 0.0
  %v922 = vmax.f32 %v842, 0.0
  %v923 = vmax.f32 %v843, 0.0
  %v924 = vmax.f32 %v844, 0.0
  %v925 = vmax.f32 %v845, 0.0
  %v926 = vmax.f32 %v846, 0.0
  %v927 = vsub.f32 %v583, %v919
  %v928 = vsub.f32 %v584, %v920
  %v929 = vsub.f32 %v585, %v921
  %v930 = vsub.f32 %v586, %v922
  %v931 = vsub.f32 %v587, %v923
  %v932 = vsub.f32 %v588, %v924
  %v933 = vsub.f32 %v589, %v925
  %v934 = vsub.f32 %v590, %v926
  %v935 = vmul.f32 %v904, %v927
  %v936 = vmul.f32 %v906, %v928
  %v937 = vmul.f32 %v908, %v929
  %v938 = vmul.f32 %v910, %v930
  %v939 = vmul.f32 %v912, %v931
  %v940 = vmul.f32 %v914, %v932
  %v941 = vmul.f32 %v916, %v933
  %v942 = vmul.f32 %v918, %v934
  %v943 = vadd.f32 %v919, %v935
  %v944 = vadd.f32 %v920, %v936
  %v945 = vadd.f32 %v921, %v937
  %v946 = vadd.f32 %v922, %v938
  %v947 = vadd.f32 %v923, %v939
  %v948 = vadd.f32 %v924, %v940
  %v949 = vadd.f32 %v925, %v941
  %v950 = vadd.f32 %v926, %v942
  %951 = vst [vmem:[%s3 + $0x1] sm:$0x1] %v943
  %952 = vst [vmem:[%s3 + $0x9] sm:$0x1] %v944
  %953 = vst [vmem:[%s3 + $0x11] sm:$0x1] %v945
  %954 = vst [vmem:[%s3 + $0x19] sm:$0x1] %v946
  %955 = vst [vmem:[%s3 + $0x21] sm:$0x1] %v947
  %956 = vst [vmem:[%s3 + $0x29] sm:$0x1] %v948
  %957 = vst [vmem:[%s3 + $0x31] sm:$0x1] %v949
  %958 = vst [vmem:[%s3 + $0x39] sm:$0x1] %v950
  %s959 = scalar_lea.vmem %s1, 2
  %v960 = vld [vmem:[%s959] ss:$8 sm:$0x3]
  %s961 = scalar_lea.vmem %s1, 18
  %v962 = vld [vmem:[%s961] ss:$8 sm:$0x3]
  %s963 = scalar_lea.vmem %s1, 34
  %v964 = vld [vmem:[%s963] ss:$8 sm:$0x3]
  %s965 = scalar_lea.vmem %s1, 50
  %v966 = vld [vmem:[%s965] ss:$8 sm:$0x3]
  %s967 = scalar_lea.vmem %s1, 66
  %v968 = vld [vmem:[%s967] ss:$8 sm:$0x3]
  %s969 = scalar_lea.vmem %s1, 82
  %v970 = vld [vmem:[%s969] ss:$8 sm:$0x3]
  %s971 = scalar_lea.vmem %s1, 98
  %v972 = vld [vmem:[%s971] ss:$8 sm:$0x3]
  %s973 = scalar_lea.vmem %s1, 114
  %v974 = vld [vmem:[%s973] ss:$8 sm:$0x3]
  %v975 = vsub.f32 %v960, %v103
  %v976 = vsub.f32 %v962, %v117
  %v977 = vsub.f32 %v964, %v125
  %v978 = vsub.f32 %v966, %v127
  %v979 = vsub.f32 %v968, %v110
  %v980 = vsub.f32 %v970, %v124
  %v981 = vsub.f32 %v972, %v126
  %v982 = vsub.f32 %v974, %v128
  %v983 = vmul.f32 %v975, %v178
  %v984 = vmul.f32 %v976, %v192
  %v985 = vmul.f32 %v977, %v200
  %v986 = vmul.f32 %v978, %v202
  %v987 = vmul.f32 %v979, %v185
  %v988 = vmul.f32 %v980, %v199
  %v989 = vmul.f32 %v981, %v201
  %v990 = vmul.f32 %v982, %v203
  %v999 = vcombine.low %v943, %v944
  %v1000 = vcombine.low %v945, %v946
  %v1001 = vcombine.low %v947, %v948
  %v1002 = vcombine.low %v949, %v950
  %v1004 = vunpack.c.l.s4 1966171168
  %v1005 = vunpack.c.0.s8 %v1004
  %v1006 = vlaneseq
  %v1007 = vshrl.u32 %v1006, 7
  %v1008 = vsub.s32 %v1005, %v1007
  %v1009 = vrot.slane %v999, %v1008
  %v1011 = vunpack.c.l.s4 1966171168
  %v1012 = vunpack.c.0.s8 %v1011
  %v1013 = vlaneseq
  %v1014 = vshrl.u32 %v1013, 7
  %v1015 = vsub.s32 %v1012, %v1014
  %v1016 = vrot.slane %v1000, %v1015
  %v1018 = vunpack.c.l.s4 1966171168
  %v1019 = vunpack.c.0.s8 %v1018
  %v1020 = vlaneseq
  %v1021 = vshrl.u32 %v1020, 7
  %v1022 = vsub.s32 %v1019, %v1021
  %v1023 = vrot.slane %v1001, %v1022
  %v1025 = vunpack.c.l.s4 1966171168
  %v1026 = vunpack.c.0.s8 %v1025
  %v1027 = vlaneseq
  %v1028 = vshrl.u32 %v1027, 7
  %v1029 = vsub.s32 %v1026, %v1028
  %v1030 = vrot.slane %v1002, %v1029
  %v1031 = vcombine.low %v1009, %v1016
  %v1032 = vcombine.low %v1023, %v1030
  %v1034 = vunpack.c.l.s4 1966171168
  %v1035 = vunpack.c.0.s8 %v1034
  %v1036 = vlaneseq
  %v1037 = vshrl.u32 %v1036, 7
  %v1038 = vsub.s32 %v1035, %v1037
  %v1039 = vrot.slane %v1031, %v1038
  %v1041 = vunpack.c.l.s4 1966171168
  %v1042 = vunpack.c.0.s8 %v1041
  %v1043 = vlaneseq
  %v1044 = vshrl.u32 %v1043, 7
  %v1045 = vsub.s32 %v1042, %v1044
  %v1046 = vrot.slane %v1032, %v1045
  %v1047 = vcombine.low %v1039, %v1046
  %1049 = vmatprep.subr.mxu0 %v23
  %1050 = vmatpush1.msra.mxu0 %v22
  %1051 = vmatprep.subr.mxu0 %v25
  %1052 = vmatpush1.msra.mxu0 %v24
  %1053 = vmatprep.subr.mxu0 %v27
  %1054 = vmatpush1.msra.mxu0 %v26
  %1055 = vmatprep.subr.mxu0 %v29
  %1056 = vmatpush1.msra.mxu0 %v28
  %1057 = vmatprep.subr.mxu0 %v31
  %1058 = vmatpush1.msra.mxu0 %v30
  %1059 = vmatprep.subr.mxu0 %v33
  %1060 = vmatpush1.msra.mxu0 %v32
  %1061 = vmatprep.subr.mxu0 %v35
  %1062 = vmatpush1.msra.mxu0 %v34
  %1063 = vmatprep.subr.mxu0 %v37
  %1064 = vmatpush1.msra.mxu0 %v36
  %1065 = vmatprep.subr.mxu0 %v39
  %1066 = vmatpush1.msra.mxu0 %v38
  %1067 = vmatprep.subr.mxu0 %v41
  %1068 = vmatpush1.msra.mxu0 %v40
  %1069 = vmatprep.subr.mxu0 %v43
  %1070 = vmatpush1.msra.mxu0 %v42
  %1071 = vmatprep.subr.mxu0 %v45
  %1072 = vmatpush1.msra.mxu0 %v44
  %1073 = vmatprep.subr.mxu0 %v47
  %1074 = vmatpush1.msra.mxu0 %v46
  %1075 = vmatprep.subr.mxu0 %v49
  %1076 = vmatpush1.msra.mxu0 %v48
  %1077 = vmatprep.subr.mxu0 %v51
  %1078 = vmatpush1.msra.mxu0 %v50
  %1079 = vmatprep.subr.mxu0 %v53
  %1080 = vmatpush1.msra.mxu0 %v52
  %1081 = vmatprep.subr.mxu0 0.0
  %1082 = vmatpush1.msra.mxu0 0.0
  %1083 = vmatprep.subr.mxu0 0.0
  %1084 = vmatpush1.msra.mxu0 0.0
  %1085 = vmatprep.subr.mxu0 0.0
  %1086 = vmatpush1.msra.mxu0 0.0
  %1087 = vmatprep.subr.mxu0 0.0
  %1088 = vmatpush1.msra.mxu0 0.0
  %1089 = vmatprep.subr.mxu0 0.0
  %1090 = vmatpush1.msra.mxu0 0.0
  %1091 = vmatprep.subr.mxu0 0.0
  %1092 = vmatpush1.msra.mxu0 0.0
  %1093 = vmatprep.subr.mxu0 0.0
  %1094 = vmatpush1.msra.mxu0 0.0
  %1095 = vmatprep.subr.mxu0 0.0
  %1096 = vmatpush1.msra.mxu0 0.0
  %1097 = vmatprep.subr.mxu0 0.0
  %1098 = vmatpush1.msra.mxu0 0.0
  %1099 = vmatprep.subr.mxu0 0.0
  %1100 = vmatpush1.msra.mxu0 0.0
  %1101 = vmatprep.subr.mxu0 0.0
  %1102 = vmatpush1.msra.mxu0 0.0
  %1103 = vmatprep.subr.mxu0 0.0
  %1104 = vmatpush1.msra.mxu0 0.0
  %1105 = vmatprep.subr.mxu0 0.0
  %1106 = vmatpush1.msra.mxu0 0.0
  %1107 = vmatprep.subr.mxu0 0.0
  %1108 = vmatpush1.msra.mxu0 0.0
  %1109 = vmatprep.subr.mxu0 0.0
  %1110 = vmatpush1.msra.mxu0 0.0
  %1111 = vmatprep.subr.mxu0 0.0
  %1112 = vmatpush1.msra.mxu0 0.0
  %1113 = vmatprep.mubr.f32.mxu0 0.0
  %1114 = vmatmul.mubr.f32.gmra.mrb[0].mxu0 %v1047
  %v1115 = vpop.f32.mrb[0].mxu0
  %v1116 = vadd.f32 0.0, %v1115
  %v1117 = vpop.f32.mrb[0].mxu0
  %v1118 = vadd.f32 0.0, %v1117
  %1119 = vdwg.mxu0
  %v1120 = vadd.f32 %v1116, %v1118
  %1121 = vadd.xlane.f32.xlu0 %v1120
  %v1122 = vpop.xlane.xlu0 %1121
  %v1123 = vmul.f32 %v1116, %v1116
  %v1124 = vmul.f32 %v1118, %v1118
  %v1125 = vadd.f32 %v1123, %v1124
  %1126 = vadd.xlane.f32.xlu0 %v1125
  %v1127 = vpop.xlane.xlu0 %1126
  %v1128 = vmul.f32 %v1122, 0.015625
  %v1129 = vmul.f32 %v1127, 0.015625
  %v1130 = vmul.f32 %v1128, %v1128
  %v1131 = vsub.f32 %v1129, %v1130
  %v1132 = vmax.f32 %v1131, 0.0
  %v1133 = vsub.f32 %v1116, %v1128
  %v1134 = vsub.f32 %v1118, %v1128
  %v1135 = vadd.f32 %v1132, 1e-05
  %v1136 = vrsqrt.pop %v1135
  %v1137 = vmul.f32 %v1133, %v1136
  %v1138 = vmul.f32 %v1134, %v1136
  %v1141 = vcombine.low %v1137, %v1138
  %v1142 = vcombine.high %v1137, %v1138
  %v1144 = vunpack.c.l.s4 1966171168
  %v1145 = vunpack.c.0.s8 %v1144
  %v1146 = vlaneseq
  %v1147 = vshrl.u32 %v1146, 7
  %v1148 = vsub.s32 %v1145, %v1147
  %v1149 = vrot.slane %v1141, %v1148
  %v1151 = vunpack.c.l.s4 1966171168
  %v1152 = vunpack.c.0.s8 %v1151
  %v1153 = vlaneseq
  %v1154 = vshrl.u32 %v1153, 7
  %v1155 = vsub.s32 %v1152, %v1154
  %v1156 = vrot.slane %v1142, %v1155
  %v1157 = vcombine.high %v1149, %v1149
  %v1158 = vcombine.high %v1156, %v1156
  %v1160 = vunpack.c.l.s4 1966171168
  %v1161 = vunpack.c.0.s8 %v1160
  %v1162 = vlaneseq
  %v1163 = vshrl.u32 %v1162, 7
  %v1164 = vsub.s32 %v1161, %v1163
  %v1165 = vrot.slane %v1149, %v1164
  %v1167 = vunpack.c.l.s4 1966171168
  %v1168 = vunpack.c.0.s8 %v1167
  %v1169 = vlaneseq
  %v1170 = vshrl.u32 %v1169, 7
  %v1171 = vsub.s32 %v1168, %v1170
  %v1172 = vrot.slane %v1156, %v1171
  %v1174 = vunpack.c.l.s4 1966171168
  %v1175 = vunpack.c.0.s8 %v1174
  %v1176 = vlaneseq
  %v1177 = vshrl.u32 %v1176, 7
  %v1178 = vsub.s32 %v1175, %v1177
  %v1179 = vrot.slane %v1157, %v1178
  %v1181 = vunpack.c.l.s4 1966171168
  %v1182 = vunpack.c.0.s8 %v1181
  %v1183 = vlaneseq
  %v1184 = vshrl.u32 %v1183, 7
  %v1185 = vsub.s32 %v1182, %v1184
  %v1186 = vrot.slane %v1158, %v1185
  %v1187 = vcombine.high %v1165, %v1165
  %v1188 = vcombine.high %v1172, %v1172
  %v1189 = vcombine.high %v1179, %v1179
  %v1190 = vcombine.high %v1186, %v1186
  %v1199 = vadd.f32 %v983, %v1165
  %v1200 = vadd.f32 %v984, %v1179
  %v1201 = vadd.f32 %v985, %v1187
  %v1202 = vadd.f32 %v986, %v1189
  %v1203 = vadd.f32 %v987, %v1172
  %v1204 = vadd.f32 %v988, %v1186
  %v1205 = vadd.f32 %v989, %v1188
  %v1206 = vadd.f32 %v990, %v1190
  %v1215 = vrot.slane %v1199, 1
  %v1216 = vrot.slane %v1200, 1
  %v1217 = vrot.slane %v1201, 1
  %v1218 = vrot.slane %v1202, 1
  %v1219 = vrot.slane %v1203, 1
  %v1220 = vrot.slane %v1204, 1
  %v1221 = vrot.slane %v1205, 1
  %v1222 = vrot.slane %v1206, 1
  %v1231 = vxor.u32 %v1215, 2147483648
  %v1232 = vxor.u32 %v1216, 2147483648
  %v1233 = vxor.u32 %v1217, 2147483648
  %v1234 = vxor.u32 %v1218, 2147483648
  %v1235 = vxor.u32 %v1219, 2147483648
  %v1236 = vxor.u32 %v1220, 2147483648
  %v1237 = vxor.u32 %v1221, 2147483648
  %v1238 = vxor.u32 %v1222, 2147483648
  %v1239 = vmul.f32 %v1231, 1.442695
  %v1240 = vpow.pop %v1239
  %v1241 = vmul.f32 %v1232, 1.442695
  %v1242 = vpow.pop %v1241
  %v1243 = vmul.f32 %v1233, 1.442695
  %v1244 = vpow.pop %v1243
  %v1245 = vmul.f32 %v1234, 1.442695
  %v1246 = vpow.pop %v1245
  %v1247 = vmul.f32 %v1235, 1.442695
  %v1248 = vpow.pop %v1247
  %v1249 = vmul.f32 %v1236, 1.442695
  %v1250 = vpow.pop %v1249
  %v1251 = vmul.f32 %v1237, 1.442695
  %v1252 = vpow.pop %v1251
  %v1253 = vmul.f32 %v1238, 1.442695
  %v1254 = vpow.pop %v1253
  %v1255 = vadd.f32 %v1240, 1.0
  %v1256 = vadd.f32 %v1242, 1.0
  %v1257 = vadd.f32 %v1244, 1.0
  %v1258 = vadd.f32 %v1246, 1.0
  %v1259 = vadd.f32 %v1248, 1.0
  %v1260 = vadd.f32 %v1250, 1.0
  %v1261 = vadd.f32 %v1252, 1.0
  %v1262 = vadd.f32 %v1254, 1.0
  %v1263 = vrcp.pop %v1255
  %v1264 = vmul.f32 1.0, %v1263
  %v1265 = vrcp.pop %v1256
  %v1266 = vmul.f32 1.0, %v1265
  %v1267 = vrcp.pop %v1257
  %v1268 = vmul.f32 1.0, %v1267
  %v1269 = vrcp.pop %v1258
  %v1270 = vmul.f32 1.0, %v1269
  %v1271 = vrcp.pop %v1259
  %v1272 = vmul.f32 1.0, %v1271
  %v1273 = vrcp.pop %v1260
  %v1274 = vmul.f32 1.0, %v1273
  %v1275 = vrcp.pop %v1261
  %v1276 = vmul.f32 1.0, %v1275
  %v1277 = vrcp.pop %v1262
  %v1278 = vmul.f32 1.0, %v1277
  %v1279 = vmax.f32 %v1199, 0.0
  %v1280 = vmax.f32 %v1200, 0.0
  %v1281 = vmax.f32 %v1201, 0.0
  %v1282 = vmax.f32 %v1202, 0.0
  %v1283 = vmax.f32 %v1203, 0.0
  %v1284 = vmax.f32 %v1204, 0.0
  %v1285 = vmax.f32 %v1205, 0.0
  %v1286 = vmax.f32 %v1206, 0.0
  %v1287 = vsub.f32 %v943, %v1279
  %v1288 = vsub.f32 %v944, %v1280
  %v1289 = vsub.f32 %v945, %v1281
  %v1290 = vsub.f32 %v946, %v1282
  %v1291 = vsub.f32 %v947, %v1283
  %v1292 = vsub.f32 %v948, %v1284
  %v1293 = vsub.f32 %v949, %v1285
  %v1294 = vsub.f32 %v950, %v1286
  %v1295 = vmul.f32 %v1264, %v1287
  %v1296 = vmul.f32 %v1266, %v1288
  %v1297 = vmul.f32 %v1268, %v1289
  %v1298 = vmul.f32 %v1270, %v1290
  %v1299 = vmul.f32 %v1272, %v1291
  %v1300 = vmul.f32 %v1274, %v1292
  %v1301 = vmul.f32 %v1276, %v1293
  %v1302 = vmul.f32 %v1278, %v1294
  %v1303 = vadd.f32 %v1279, %v1295
  %v1304 = vadd.f32 %v1280, %v1296
  %v1305 = vadd.f32 %v1281, %v1297
  %v1306 = vadd.f32 %v1282, %v1298
  %v1307 = vadd.f32 %v1283, %v1299
  %v1308 = vadd.f32 %v1284, %v1300
  %v1309 = vadd.f32 %v1285, %v1301
  %v1310 = vadd.f32 %v1286, %v1302
  %1311 = vst [vmem:[%s3 + $0x2] sm:$0x1] %v1303
  %1312 = vst [vmem:[%s3 + $0xa] sm:$0x1] %v1304
  %1313 = vst [vmem:[%s3 + $0x12] sm:$0x1] %v1305
  %1314 = vst [vmem:[%s3 + $0x1a] sm:$0x1] %v1306
  %1315 = vst [vmem:[%s3 + $0x22] sm:$0x1] %v1307
  %1316 = vst [vmem:[%s3 + $0x2a] sm:$0x1] %v1308
  %1317 = vst [vmem:[%s3 + $0x32] sm:$0x1] %v1309
  %1318 = vst [vmem:[%s3 + $0x3a] sm:$0x1] %v1310
  %s1319 = scalar_lea.vmem %s1, 3
  %v1320 = vld [vmem:[%s1319] ss:$8 sm:$0x3]
  %s1321 = scalar_lea.vmem %s1, 19
  %v1322 = vld [vmem:[%s1321] ss:$8 sm:$0x3]
  %s1323 = scalar_lea.vmem %s1, 35
  %v1324 = vld [vmem:[%s1323] ss:$8 sm:$0x3]
  %s1325 = scalar_lea.vmem %s1, 51
  %v1326 = vld [vmem:[%s1325] ss:$8 sm:$0x3]
  %s1327 = scalar_lea.vmem %s1, 67
  %v1328 = vld [vmem:[%s1327] ss:$8 sm:$0x3]
  %s1329 = scalar_lea.vmem %s1, 83
  %v1330 = vld [vmem:[%s1329] ss:$8 sm:$0x3]
  %s1331 = scalar_lea.vmem %s1, 99
  %v1332 = vld [vmem:[%s1331] ss:$8 sm:$0x3]
  %s1333 = scalar_lea.vmem %s1, 115
  %v1334 = vld [vmem:[%s1333] ss:$8 sm:$0x3]
  %v1335 = vsub.f32 %v1320, %v103
  %v1336 = vsub.f32 %v1322, %v117
  %v1337 = vsub.f32 %v1324, %v125
  %v1338 = vsub.f32 %v1326, %v127
  %v1339 = vsub.f32 %v1328, %v110
  %v1340 = vsub.f32 %v1330, %v124
  %v1341 = vsub.f32 %v1332, %v126
  %v1342 = vsub.f32 %v1334, %v128
  %v1343 = vmul.f32 %v1335, %v178
  %v1344 = vmul.f32 %v1336, %v192
  %v1345 = vmul.f32 %v1337, %v200
  %v1346 = vmul.f32 %v1338, %v202
  %v1347 = vmul.f32 %v1339, %v185
  %v1348 = vmul.f32 %v1340, %v199
  %v1349 = vmul.f32 %v1341, %v201
  %v1350 = vmul.f32 %v1342, %v203
  %v1359 = vcombine.low %v1303, %v1304
  %v1360 = vcombine.low %v1305, %v1306
  %v1361 = vcombine.low %v1307, %v1308
  %v1362 = vcombine.low %v1309, %v1310
  %v1364 = vunpack.c.l.s4 1966171168
  %v1365 = vunpack.c.0.s8 %v1364
  %v1366 = vlaneseq
  %v1367 = vshrl.u32 %v1366, 7
  %v1368 = vsub.s32 %v1365, %v1367
  %v1369 = vrot.slane %v1359, %v1368
  %v1371 = vunpack.c.l.s4 1966171168
  %v1372 = vunpack.c.0.s8 %v1371
  %v1373 = vlaneseq
  %v1374 = vshrl.u32 %v1373, 7
  %v1375 = vsub.s32 %v1372, %v1374
  %v1376 = vrot.slane %v1360, %v1375
  %v1378 = vunpack.c.l.s4 1966171168
  %v1379 = vunpack.c.0.s8 %v1378
  %v1380 = vlaneseq
  %v1381 = vshrl.u32 %v1380, 7
  %v1382 = vsub.s32 %v1379, %v1381
  %v1383 = vrot.slane %v1361, %v1382
  %v1385 = vunpack.c.l.s4 1966171168
  %v1386 = vunpack.c.0.s8 %v1385
  %v1387 = vlaneseq
  %v1388 = vshrl.u32 %v1387, 7
  %v1389 = vsub.s32 %v1386, %v1388
  %v1390 = vrot.slane %v1362, %v1389
  %v1391 = vcombine.low %v1369, %v1376
  %v1392 = vcombine.low %v1383, %v1390
  %v1394 = vunpack.c.l.s4 1966171168
  %v1395 = vunpack.c.0.s8 %v1394
  %v1396 = vlaneseq
  %v1397 = vshrl.u32 %v1396, 7
  %v1398 = vsub.s32 %v1395, %v1397
  %v1399 = vrot.slane %v1391, %v1398
  %v1401 = vunpack.c.l.s4 1966171168
  %v1402 = vunpack.c.0.s8 %v1401
  %v1403 = vlaneseq
  %v1404 = vshrl.u32 %v1403, 7
  %v1405 = vsub.s32 %v1402, %v1404
  %v1406 = vrot.slane %v1392, %v1405
  %v1407 = vcombine.low %v1399, %v1406
  %1409 = vmatprep.subr.mxu0 %v23
  %1410 = vmatpush1.msra.mxu0 %v22
  %1411 = vmatprep.subr.mxu0 %v25
  %1412 = vmatpush1.msra.mxu0 %v24
  %1413 = vmatprep.subr.mxu0 %v27
  %1414 = vmatpush1.msra.mxu0 %v26
  %1415 = vmatprep.subr.mxu0 %v29
  %1416 = vmatpush1.msra.mxu0 %v28
  %1417 = vmatprep.subr.mxu0 %v31
  %1418 = vmatpush1.msra.mxu0 %v30
  %1419 = vmatprep.subr.mxu0 %v33
  %1420 = vmatpush1.msra.mxu0 %v32
  %1421 = vmatprep.subr.mxu0 %v35
  %1422 = vmatpush1.msra.mxu0 %v34
  %1423 = vmatprep.subr.mxu0 %v37
  %1424 = vmatpush1.msra.mxu0 %v36
  %1425 = vmatprep.subr.mxu0 %v39
  %1426 = vmatpush1.msra.mxu0 %v38
  %1427 = vmatprep.subr.mxu0 %v41
  %1428 = vmatpush1.msra.mxu0 %v40
  %1429 = vmatprep.subr.mxu0 %v43
  %1430 = vmatpush1.msra.mxu0 %v42
  %1431 = vmatprep.subr.mxu0 %v45
  %1432 = vmatpush1.msra.mxu0 %v44
  %1433 = vmatprep.subr.mxu0 %v47
  %1434 = vmatpush1.msra.mxu0 %v46
  %1435 = vmatprep.subr.mxu0 %v49
  %1436 = vmatpush1.msra.mxu0 %v48
  %1437 = vmatprep.subr.mxu0 %v51
  %1438 = vmatpush1.msra.mxu0 %v50
  %1439 = vmatprep.subr.mxu0 %v53
  %1440 = vmatpush1.msra.mxu0 %v52
  %1441 = vmatprep.subr.mxu0 0.0
  %1442 = vmatpush1.msra.mxu0 0.0
  %1443 = vmatprep.subr.mxu0 0.0
  %1444 = vmatpush1.msra.mxu0 0.0
  %1445 = vmatprep.subr.mxu0 0.0
  %1446 = vmatpush1.msra.mxu0 0.0
  %1447 = vmatprep.subr.mxu0 0.0
  %1448 = vmatpush1.msra.mxu0 0.0
  %1449 = vmatprep.subr.mxu0 0.0
  %1450 = vmatpush1.msra.mxu0 0.0
  %1451 = vmatprep.subr.mxu0 0.0
  %1452 = vmatpush1.msra.mxu0 0.0
  %1453 = vmatprep.subr.mxu0 0.0
  %1454 = vmatpush1.msra.mxu0 0.0
  %1455 = vmatprep.subr.mxu0 0.0
  %1456 = vmatpush1.msra.mxu0 0.0
  %1457 = vmatprep.subr.mxu0 0.0
  %1458 = vmatpush1.msra.mxu0 0.0
  %1459 = vmatprep.subr.mxu0 0.0
  %1460 = vmatpush1.msra.mxu0 0.0
  %1461 = vmatprep.subr.mxu0 0.0
  %1462 = vmatpush1.msra.mxu0 0.0
  %1463 = vmatprep.subr.mxu0 0.0
  %1464 = vmatpush1.msra.mxu0 0.0
  %1465 = vmatprep.subr.mxu0 0.0
  %1466 = vmatpush1.msra.mxu0 0.0
  %1467 = vmatprep.subr.mxu0 0.0
  %1468 = vmatpush1.msra.mxu0 0.0
  %1469 = vmatprep.subr.mxu0 0.0
  %1470 = vmatpush1.msra.mxu0 0.0
  %1471 = vmatprep.subr.mxu0 0.0
  %1472 = vmatpush1.msra.mxu0 0.0
  %1473 = vmatprep.mubr.f32.mxu0 0.0
  %1474 = vmatmul.mubr.f32.gmra.mrb[0].mxu0 %v1407
  %v1475 = vpop.f32.mrb[0].mxu0
  %v1476 = vadd.f32 0.0, %v1475
  %v1477 = vpop.f32.mrb[0].mxu0
  %v1478 = vadd.f32 0.0, %v1477
  %1479 = vdwg.mxu0
  %v1480 = vadd.f32 %v1476, %v1478
  %1481 = vadd.xlane.f32.xlu0 %v1480
  %v1482 = vpop.xlane.xlu0 %1481
  %v1483 = vmul.f32 %v1476, %v1476
  %v1484 = vmul.f32 %v1478, %v1478
  %v1485 = vadd.f32 %v1483, %v1484
  %1486 = vadd.xlane.f32.xlu0 %v1485
  %v1487 = vpop.xlane.xlu0 %1486
  %v1488 = vmul.f32 %v1482, 0.015625
  %v1489 = vmul.f32 %v1487, 0.015625
  %v1490 = vmul.f32 %v1488, %v1488
  %v1491 = vsub.f32 %v1489, %v1490
  %v1492 = vmax.f32 %v1491, 0.0
  %v1493 = vsub.f32 %v1476, %v1488
  %v1494 = vsub.f32 %v1478, %v1488
  %v1495 = vadd.f32 %v1492, 1e-05
  %v1496 = vrsqrt.pop %v1495
  %v1497 = vmul.f32 %v1493, %v1496
  %v1498 = vmul.f32 %v1494, %v1496
  %v1501 = vcombine.low %v1497, %v1498
  %v1502 = vcombine.high %v1497, %v1498
  %v1504 = vunpack.c.l.s4 1966171168
  %v1505 = vunpack.c.0.s8 %v1504
  %v1506 = vlaneseq
  %v1507 = vshrl.u32 %v1506, 7
  %v1508 = vsub.s32 %v1505, %v1507
  %v1509 = vrot.slane %v1501, %v1508
  %v1511 = vunpack.c.l.s4 1966171168
  %v1512 = vunpack.c.0.s8 %v1511
  %v1513 = vlaneseq
  %v1514 = vshrl.u32 %v1513, 7
  %v1515 = vsub.s32 %v1512, %v1514
  %v1516 = vrot.slane %v1502, %v1515
  %v1517 = vcombine.high %v1509, %v1509
  %v1518 = vcombine.high %v1516, %v1516
  %v1520 = vunpack.c.l.s4 1966171168
  %v1521 = vunpack.c.0.s8 %v1520
  %v1522 = vlaneseq
  %v1523 = vshrl.u32 %v1522, 7
  %v1524 = vsub.s32 %v1521, %v1523
  %v1525 = vrot.slane %v1509, %v1524
  %v1527 = vunpack.c.l.s4 1966171168
  %v1528 = vunpack.c.0.s8 %v1527
  %v1529 = vlaneseq
  %v1530 = vshrl.u32 %v1529, 7
  %v1531 = vsub.s32 %v1528, %v1530
  %v1532 = vrot.slane %v1516, %v1531
  %v1534 = vunpack.c.l.s4 1966171168
  %v1535 = vunpack.c.0.s8 %v1534
  %v1536 = vlaneseq
  %v1537 = vshrl.u32 %v1536, 7
  %v1538 = vsub.s32 %v1535, %v1537
  %v1539 = vrot.slane %v1517, %v1538
  %v1541 = vunpack.c.l.s4 1966171168
  %v1542 = vunpack.c.0.s8 %v1541
  %v1543 = vlaneseq
  %v1544 = vshrl.u32 %v1543, 7
  %v1545 = vsub.s32 %v1542, %v1544
  %v1546 = vrot.slane %v1518, %v1545
  %v1547 = vcombine.high %v1525, %v1525
  %v1548 = vcombine.high %v1532, %v1532
  %v1549 = vcombine.high %v1539, %v1539
  %v1550 = vcombine.high %v1546, %v1546
  %v1559 = vadd.f32 %v1343, %v1525
  %v1560 = vadd.f32 %v1344, %v1539
  %v1561 = vadd.f32 %v1345, %v1547
  %v1562 = vadd.f32 %v1346, %v1549
  %v1563 = vadd.f32 %v1347, %v1532
  %v1564 = vadd.f32 %v1348, %v1546
  %v1565 = vadd.f32 %v1349, %v1548
  %v1566 = vadd.f32 %v1350, %v1550
  %v1575 = vrot.slane %v1559, 1
  %v1576 = vrot.slane %v1560, 1
  %v1577 = vrot.slane %v1561, 1
  %v1578 = vrot.slane %v1562, 1
  %v1579 = vrot.slane %v1563, 1
  %v1580 = vrot.slane %v1564, 1
  %v1581 = vrot.slane %v1565, 1
  %v1582 = vrot.slane %v1566, 1
  %v1591 = vxor.u32 %v1575, 2147483648
  %v1592 = vxor.u32 %v1576, 2147483648
  %v1593 = vxor.u32 %v1577, 2147483648
  %v1594 = vxor.u32 %v1578, 2147483648
  %v1595 = vxor.u32 %v1579, 2147483648
  %v1596 = vxor.u32 %v1580, 2147483648
  %v1597 = vxor.u32 %v1581, 2147483648
  %v1598 = vxor.u32 %v1582, 2147483648
  %v1599 = vmul.f32 %v1591, 1.442695
  %v1600 = vpow.pop %v1599
  %v1601 = vmul.f32 %v1592, 1.442695
  %v1602 = vpow.pop %v1601
  %v1603 = vmul.f32 %v1593, 1.442695
  %v1604 = vpow.pop %v1603
  %v1605 = vmul.f32 %v1594, 1.442695
  %v1606 = vpow.pop %v1605
  %v1607 = vmul.f32 %v1595, 1.442695
  %v1608 = vpow.pop %v1607
  %v1609 = vmul.f32 %v1596, 1.442695
  %v1610 = vpow.pop %v1609
  %v1611 = vmul.f32 %v1597, 1.442695
  %v1612 = vpow.pop %v1611
  %v1613 = vmul.f32 %v1598, 1.442695
  %v1614 = vpow.pop %v1613
  %v1615 = vadd.f32 %v1600, 1.0
  %v1616 = vadd.f32 %v1602, 1.0
  %v1617 = vadd.f32 %v1604, 1.0
  %v1618 = vadd.f32 %v1606, 1.0
  %v1619 = vadd.f32 %v1608, 1.0
  %v1620 = vadd.f32 %v1610, 1.0
  %v1621 = vadd.f32 %v1612, 1.0
  %v1622 = vadd.f32 %v1614, 1.0
  %v1623 = vrcp.pop %v1615
  %v1624 = vmul.f32 1.0, %v1623
  %v1625 = vrcp.pop %v1616
  %v1626 = vmul.f32 1.0, %v1625
  %v1627 = vrcp.pop %v1617
  %v1628 = vmul.f32 1.0, %v1627
  %v1629 = vrcp.pop %v1618
  %v1630 = vmul.f32 1.0, %v1629
  %v1631 = vrcp.pop %v1619
  %v1632 = vmul.f32 1.0, %v1631
  %v1633 = vrcp.pop %v1620
  %v1634 = vmul.f32 1.0, %v1633
  %v1635 = vrcp.pop %v1621
  %v1636 = vmul.f32 1.0, %v1635
  %v1637 = vrcp.pop %v1622
  %v1638 = vmul.f32 1.0, %v1637
  %v1639 = vmax.f32 %v1559, 0.0
  %v1640 = vmax.f32 %v1560, 0.0
  %v1641 = vmax.f32 %v1561, 0.0
  %v1642 = vmax.f32 %v1562, 0.0
  %v1643 = vmax.f32 %v1563, 0.0
  %v1644 = vmax.f32 %v1564, 0.0
  %v1645 = vmax.f32 %v1565, 0.0
  %v1646 = vmax.f32 %v1566, 0.0
  %v1647 = vsub.f32 %v1303, %v1639
  %v1648 = vsub.f32 %v1304, %v1640
  %v1649 = vsub.f32 %v1305, %v1641
  %v1650 = vsub.f32 %v1306, %v1642
  %v1651 = vsub.f32 %v1307, %v1643
  %v1652 = vsub.f32 %v1308, %v1644
  %v1653 = vsub.f32 %v1309, %v1645
  %v1654 = vsub.f32 %v1310, %v1646
  %v1655 = vmul.f32 %v1624, %v1647
  %v1656 = vmul.f32 %v1626, %v1648
  %v1657 = vmul.f32 %v1628, %v1649
  %v1658 = vmul.f32 %v1630, %v1650
  %v1659 = vmul.f32 %v1632, %v1651
  %v1660 = vmul.f32 %v1634, %v1652
  %v1661 = vmul.f32 %v1636, %v1653
  %v1662 = vmul.f32 %v1638, %v1654
  %v1663 = vadd.f32 %v1639, %v1655
  %v1664 = vadd.f32 %v1640, %v1656
  %v1665 = vadd.f32 %v1641, %v1657
  %v1666 = vadd.f32 %v1642, %v1658
  %v1667 = vadd.f32 %v1643, %v1659
  %v1668 = vadd.f32 %v1644, %v1660
  %v1669 = vadd.f32 %v1645, %v1661
  %v1670 = vadd.f32 %v1646, %v1662
  %1671 = vst [vmem:[%s3 + $0x3] sm:$0x1] %v1663
  %1672 = vst [vmem:[%s3 + $0xb] sm:$0x1] %v1664
  %1673 = vst [vmem:[%s3 + $0x13] sm:$0x1] %v1665
  %1674 = vst [vmem:[%s3 + $0x1b] sm:$0x1] %v1666
  %1675 = vst [vmem:[%s3 + $0x23] sm:$0x1] %v1667
  %1676 = vst [vmem:[%s3 + $0x2b] sm:$0x1] %v1668
  %1677 = vst [vmem:[%s3 + $0x33] sm:$0x1] %v1669
  %1678 = vst [vmem:[%s3 + $0x3b] sm:$0x1] %v1670
  %s1679 = scalar_lea.vmem %s1, 4
  %v1680 = vld [vmem:[%s1679] ss:$8 sm:$0x3]
  %s1681 = scalar_lea.vmem %s1, 20
  %v1682 = vld [vmem:[%s1681] ss:$8 sm:$0x3]
  %s1683 = scalar_lea.vmem %s1, 36
  %v1684 = vld [vmem:[%s1683] ss:$8 sm:$0x3]
  %s1685 = scalar_lea.vmem %s1, 52
  %v1686 = vld [vmem:[%s1685] ss:$8 sm:$0x3]
  %s1687 = scalar_lea.vmem %s1, 68
  %v1688 = vld [vmem:[%s1687] ss:$8 sm:$0x3]
  %s1689 = scalar_lea.vmem %s1, 84
  %v1690 = vld [vmem:[%s1689] ss:$8 sm:$0x3]
  %s1691 = scalar_lea.vmem %s1, 100
  %v1692 = vld [vmem:[%s1691] ss:$8 sm:$0x3]
  %s1693 = scalar_lea.vmem %s1, 116
  %v1694 = vld [vmem:[%s1693] ss:$8 sm:$0x3]
  %v1695 = vsub.f32 %v1680, %v103
  %v1696 = vsub.f32 %v1682, %v117
  %v1697 = vsub.f32 %v1684, %v125
  %v1698 = vsub.f32 %v1686, %v127
  %v1699 = vsub.f32 %v1688, %v110
  %v1700 = vsub.f32 %v1690, %v124
  %v1701 = vsub.f32 %v1692, %v126
  %v1702 = vsub.f32 %v1694, %v128
  %v1703 = vmul.f32 %v1695, %v178
  %v1704 = vmul.f32 %v1696, %v192
  %v1705 = vmul.f32 %v1697, %v200
  %v1706 = vmul.f32 %v1698, %v202
  %v1707 = vmul.f32 %v1699, %v185
  %v1708 = vmul.f32 %v1700, %v199
  %v1709 = vmul.f32 %v1701, %v201
  %v1710 = vmul.f32 %v1702, %v203
  %v1719 = vcombine.low %v1663, %v1664
  %v1720 = vcombine.low %v1665, %v1666
  %v1721 = vcombine.low %v1667, %v1668
  %v1722 = vcombine.low %v1669, %v1670
  %v1724 = vunpack.c.l.s4 1966171168
  %v1725 = vunpack.c.0.s8 %v1724
  %v1726 = vlaneseq
  %v1727 = vshrl.u32 %v1726, 7
  %v1728 = vsub.s32 %v1725, %v1727
  %v1729 = vrot.slane %v1719, %v1728
  %v1731 = vunpack.c.l.s4 1966171168
  %v1732 = vunpack.c.0.s8 %v1731
  %v1733 = vlaneseq
  %v1734 = vshrl.u32 %v1733, 7
  %v1735 = vsub.s32 %v1732, %v1734
  %v1736 = vrot.slane %v1720, %v1735
  %v1738 = vunpack.c.l.s4 1966171168
  %v1739 = vunpack.c.0.s8 %v1738
  %v1740 = vlaneseq
  %v1741 = vshrl.u32 %v1740, 7
  %v1742 = vsub.s32 %v1739, %v1741
  %v1743 = vrot.slane %v1721, %v1742
  %v1745 = vunpack.c.l.s4 1966171168
  %v1746 = vunpack.c.0.s8 %v1745
  %v1747 = vlaneseq
  %v1748 = vshrl.u32 %v1747, 7
  %v1749 = vsub.s32 %v1746, %v1748
  %v1750 = vrot.slane %v1722, %v1749
  %v1751 = vcombine.low %v1729, %v1736
  %v1752 = vcombine.low %v1743, %v1750
  %v1754 = vunpack.c.l.s4 1966171168
  %v1755 = vunpack.c.0.s8 %v1754
  %v1756 = vlaneseq
  %v1757 = vshrl.u32 %v1756, 7
  %v1758 = vsub.s32 %v1755, %v1757
  %v1759 = vrot.slane %v1751, %v1758
  %v1761 = vunpack.c.l.s4 1966171168
  %v1762 = vunpack.c.0.s8 %v1761
  %v1763 = vlaneseq
  %v1764 = vshrl.u32 %v1763, 7
  %v1765 = vsub.s32 %v1762, %v1764
  %v1766 = vrot.slane %v1752, %v1765
  %v1767 = vcombine.low %v1759, %v1766
  %1769 = vmatprep.subr.mxu0 %v23
  %1770 = vmatpush1.msra.mxu0 %v22
  %1771 = vmatprep.subr.mxu0 %v25
  %1772 = vmatpush1.msra.mxu0 %v24
  %1773 = vmatprep.subr.mxu0 %v27
  %1774 = vmatpush1.msra.mxu0 %v26
  %1775 = vmatprep.subr.mxu0 %v29
  %1776 = vmatpush1.msra.mxu0 %v28
  %1777 = vmatprep.subr.mxu0 %v31
  %1778 = vmatpush1.msra.mxu0 %v30
  %1779 = vmatprep.subr.mxu0 %v33
  %1780 = vmatpush1.msra.mxu0 %v32
  %1781 = vmatprep.subr.mxu0 %v35
  %1782 = vmatpush1.msra.mxu0 %v34
  %1783 = vmatprep.subr.mxu0 %v37
  %1784 = vmatpush1.msra.mxu0 %v36
  %1785 = vmatprep.subr.mxu0 %v39
  %1786 = vmatpush1.msra.mxu0 %v38
  %1787 = vmatprep.subr.mxu0 %v41
  %1788 = vmatpush1.msra.mxu0 %v40
  %1789 = vmatprep.subr.mxu0 %v43
  %1790 = vmatpush1.msra.mxu0 %v42
  %1791 = vmatprep.subr.mxu0 %v45
  %1792 = vmatpush1.msra.mxu0 %v44
  %1793 = vmatprep.subr.mxu0 %v47
  %1794 = vmatpush1.msra.mxu0 %v46
  %1795 = vmatprep.subr.mxu0 %v49
  %1796 = vmatpush1.msra.mxu0 %v48
  %1797 = vmatprep.subr.mxu0 %v51
  %1798 = vmatpush1.msra.mxu0 %v50
  %1799 = vmatprep.subr.mxu0 %v53
  %1800 = vmatpush1.msra.mxu0 %v52
  %1801 = vmatprep.subr.mxu0 0.0
  %1802 = vmatpush1.msra.mxu0 0.0
  %1803 = vmatprep.subr.mxu0 0.0
  %1804 = vmatpush1.msra.mxu0 0.0
  %1805 = vmatprep.subr.mxu0 0.0
  %1806 = vmatpush1.msra.mxu0 0.0
  %1807 = vmatprep.subr.mxu0 0.0
  %1808 = vmatpush1.msra.mxu0 0.0
  %1809 = vmatprep.subr.mxu0 0.0
  %1810 = vmatpush1.msra.mxu0 0.0
  %1811 = vmatprep.subr.mxu0 0.0
  %1812 = vmatpush1.msra.mxu0 0.0
  %1813 = vmatprep.subr.mxu0 0.0
  %1814 = vmatpush1.msra.mxu0 0.0
  %1815 = vmatprep.subr.mxu0 0.0
  %1816 = vmatpush1.msra.mxu0 0.0
  %1817 = vmatprep.subr.mxu0 0.0
  %1818 = vmatpush1.msra.mxu0 0.0
  %1819 = vmatprep.subr.mxu0 0.0
  %1820 = vmatpush1.msra.mxu0 0.0
  %1821 = vmatprep.subr.mxu0 0.0
  %1822 = vmatpush1.msra.mxu0 0.0
  %1823 = vmatprep.subr.mxu0 0.0
  %1824 = vmatpush1.msra.mxu0 0.0
  %1825 = vmatprep.subr.mxu0 0.0
  %1826 = vmatpush1.msra.mxu0 0.0
  %1827 = vmatprep.subr.mxu0 0.0
  %1828 = vmatpush1.msra.mxu0 0.0
  %1829 = vmatprep.subr.mxu0 0.0
  %1830 = vmatpush1.msra.mxu0 0.0
  %1831 = vmatprep.subr.mxu0 0.0
  %1832 = vmatpush1.msra.mxu0 0.0
  %1833 = vmatprep.mubr.f32.mxu0 0.0
  %1834 = vmatmul.mubr.f32.gmra.mrb[0].mxu0 %v1767
  %v1835 = vpop.f32.mrb[0].mxu0
  %v1836 = vadd.f32 0.0, %v1835
  %v1837 = vpop.f32.mrb[0].mxu0
  %v1838 = vadd.f32 0.0, %v1837
  %1839 = vdwg.mxu0
  %v1840 = vadd.f32 %v1836, %v1838
  %1841 = vadd.xlane.f32.xlu0 %v1840
  %v1842 = vpop.xlane.xlu0 %1841
  %v1843 = vmul.f32 %v1836, %v1836
  %v1844 = vmul.f32 %v1838, %v1838
  %v1845 = vadd.f32 %v1843, %v1844
  %1846 = vadd.xlane.f32.xlu0 %v1845
  %v1847 = vpop.xlane.xlu0 %1846
  %v1848 = vmul.f32 %v1842, 0.015625
  %v1849 = vmul.f32 %v1847, 0.015625
  %v1850 = vmul.f32 %v1848, %v1848
  %v1851 = vsub.f32 %v1849, %v1850
  %v1852 = vmax.f32 %v1851, 0.0
  %v1853 = vsub.f32 %v1836, %v1848
  %v1854 = vsub.f32 %v1838, %v1848
  %v1855 = vadd.f32 %v1852, 1e-05
  %v1856 = vrsqrt.pop %v1855
  %v1857 = vmul.f32 %v1853, %v1856
  %v1858 = vmul.f32 %v1854, %v1856
  %v1861 = vcombine.low %v1857, %v1858
  %v1862 = vcombine.high %v1857, %v1858
  %v1864 = vunpack.c.l.s4 1966171168
  %v1865 = vunpack.c.0.s8 %v1864
  %v1866 = vlaneseq
  %v1867 = vshrl.u32 %v1866, 7
  %v1868 = vsub.s32 %v1865, %v1867
  %v1869 = vrot.slane %v1861, %v1868
  %v1871 = vunpack.c.l.s4 1966171168
  %v1872 = vunpack.c.0.s8 %v1871
  %v1873 = vlaneseq
  %v1874 = vshrl.u32 %v1873, 7
  %v1875 = vsub.s32 %v1872, %v1874
  %v1876 = vrot.slane %v1862, %v1875
  %v1877 = vcombine.high %v1869, %v1869
  %v1878 = vcombine.high %v1876, %v1876
  %v1880 = vunpack.c.l.s4 1966171168
  %v1881 = vunpack.c.0.s8 %v1880
  %v1882 = vlaneseq
  %v1883 = vshrl.u32 %v1882, 7
  %v1884 = vsub.s32 %v1881, %v1883
  %v1885 = vrot.slane %v1869, %v1884
  %v1887 = vunpack.c.l.s4 1966171168
  %v1888 = vunpack.c.0.s8 %v1887
  %v1889 = vlaneseq
  %v1890 = vshrl.u32 %v1889, 7
  %v1891 = vsub.s32 %v1888, %v1890
  %v1892 = vrot.slane %v1876, %v1891
  %v1894 = vunpack.c.l.s4 1966171168
  %v1895 = vunpack.c.0.s8 %v1894
  %v1896 = vlaneseq
  %v1897 = vshrl.u32 %v1896, 7
  %v1898 = vsub.s32 %v1895, %v1897
  %v1899 = vrot.slane %v1877, %v1898
  %v1901 = vunpack.c.l.s4 1966171168
  %v1902 = vunpack.c.0.s8 %v1901
  %v1903 = vlaneseq
  %v1904 = vshrl.u32 %v1903, 7
  %v1905 = vsub.s32 %v1902, %v1904
  %v1906 = vrot.slane %v1878, %v1905
  %v1907 = vcombine.high %v1885, %v1885
  %v1908 = vcombine.high %v1892, %v1892
  %v1909 = vcombine.high %v1899, %v1899
  %v1910 = vcombine.high %v1906, %v1906
  %v1919 = vadd.f32 %v1703, %v1885
  %v1920 = vadd.f32 %v1704, %v1899
  %v1921 = vadd.f32 %v1705, %v1907
  %v1922 = vadd.f32 %v1706, %v1909
  %v1923 = vadd.f32 %v1707, %v1892
  %v1924 = vadd.f32 %v1708, %v1906
  %v1925 = vadd.f32 %v1709, %v1908
  %v1926 = vadd.f32 %v1710, %v1910
  %v1935 = vrot.slane %v1919, 1
  %v1936 = vrot.slane %v1920, 1
  %v1937 = vrot.slane %v1921, 1
  %v1938 = vrot.slane %v1922, 1
  %v1939 = vrot.slane %v1923, 1
  %v1940 = vrot.slane %v1924, 1
  %v1941 = vrot.slane %v1925, 1
  %v1942 = vrot.slane %v1926, 1
  %v1951 = vxor.u32 %v1935, 2147483648
  %v1952 = vxor.u32 %v1936, 2147483648
  %v1953 = vxor.u32 %v1937, 2147483648
  %v1954 = vxor.u32 %v1938, 2147483648
  %v1955 = vxor.u32 %v1939, 2147483648
  %v1956 = vxor.u32 %v1940, 2147483648
  %v1957 = vxor.u32 %v1941, 2147483648
  %v1958 = vxor.u32 %v1942, 2147483648
  %v1959 = vmul.f32 %v1951, 1.442695
  %v1960 = vpow.pop %v1959
  %v1961 = vmul.f32 %v1952, 1.442695
  %v1962 = vpow.pop %v1961
  %v1963 = vmul.f32 %v1953, 1.442695
  %v1964 = vpow.pop %v1963
  %v1965 = vmul.f32 %v1954, 1.442695
  %v1966 = vpow.pop %v1965
  %v1967 = vmul.f32 %v1955, 1.442695
  %v1968 = vpow.pop %v1967
  %v1969 = vmul.f32 %v1956, 1.442695
  %v1970 = vpow.pop %v1969
  %v1971 = vmul.f32 %v1957, 1.442695
  %v1972 = vpow.pop %v1971
  %v1973 = vmul.f32 %v1958, 1.442695
  %v1974 = vpow.pop %v1973
  %v1975 = vadd.f32 %v1960, 1.0
  %v1976 = vadd.f32 %v1962, 1.0
  %v1977 = vadd.f32 %v1964, 1.0
  %v1978 = vadd.f32 %v1966, 1.0
  %v1979 = vadd.f32 %v1968, 1.0
  %v1980 = vadd.f32 %v1970, 1.0
  %v1981 = vadd.f32 %v1972, 1.0
  %v1982 = vadd.f32 %v1974, 1.0
  %v1983 = vrcp.pop %v1975
  %v1984 = vmul.f32 1.0, %v1983
  %v1985 = vrcp.pop %v1976
  %v1986 = vmul.f32 1.0, %v1985
  %v1987 = vrcp.pop %v1977
  %v1988 = vmul.f32 1.0, %v1987
  %v1989 = vrcp.pop %v1978
  %v1990 = vmul.f32 1.0, %v1989
  %v1991 = vrcp.pop %v1979
  %v1992 = vmul.f32 1.0, %v1991
  %v1993 = vrcp.pop %v1980
  %v1994 = vmul.f32 1.0, %v1993
  %v1995 = vrcp.pop %v1981
  %v1996 = vmul.f32 1.0, %v1995
  %v1997 = vrcp.pop %v1982
  %v1998 = vmul.f32 1.0, %v1997
  %v1999 = vmax.f32 %v1919, 0.0
  %v2000 = vmax.f32 %v1920, 0.0
  %v2001 = vmax.f32 %v1921, 0.0
  %v2002 = vmax.f32 %v1922, 0.0
  %v2003 = vmax.f32 %v1923, 0.0
  %v2004 = vmax.f32 %v1924, 0.0
  %v2005 = vmax.f32 %v1925, 0.0
  %v2006 = vmax.f32 %v1926, 0.0
  %v2007 = vsub.f32 %v1663, %v1999
  %v2008 = vsub.f32 %v1664, %v2000
  %v2009 = vsub.f32 %v1665, %v2001
  %v2010 = vsub.f32 %v1666, %v2002
  %v2011 = vsub.f32 %v1667, %v2003
  %v2012 = vsub.f32 %v1668, %v2004
  %v2013 = vsub.f32 %v1669, %v2005
  %v2014 = vsub.f32 %v1670, %v2006
  %v2015 = vmul.f32 %v1984, %v2007
  %v2016 = vmul.f32 %v1986, %v2008
  %v2017 = vmul.f32 %v1988, %v2009
  %v2018 = vmul.f32 %v1990, %v2010
  %v2019 = vmul.f32 %v1992, %v2011
  %v2020 = vmul.f32 %v1994, %v2012
  %v2021 = vmul.f32 %v1996, %v2013
  %v2022 = vmul.f32 %v1998, %v2014
  %v2023 = vadd.f32 %v1999, %v2015
  %v2024 = vadd.f32 %v2000, %v2016
  %v2025 = vadd.f32 %v2001, %v2017
  %v2026 = vadd.f32 %v2002, %v2018
  %v2027 = vadd.f32 %v2003, %v2019
  %v2028 = vadd.f32 %v2004, %v2020
  %v2029 = vadd.f32 %v2005, %v2021
  %v2030 = vadd.f32 %v2006, %v2022
  %2031 = vst [vmem:[%s3 + $0x4] sm:$0x1] %v2023
  %2032 = vst [vmem:[%s3 + $0xc] sm:$0x1] %v2024
  %2033 = vst [vmem:[%s3 + $0x14] sm:$0x1] %v2025
  %2034 = vst [vmem:[%s3 + $0x1c] sm:$0x1] %v2026
  %2035 = vst [vmem:[%s3 + $0x24] sm:$0x1] %v2027
  %2036 = vst [vmem:[%s3 + $0x2c] sm:$0x1] %v2028
  %2037 = vst [vmem:[%s3 + $0x34] sm:$0x1] %v2029
  %2038 = vst [vmem:[%s3 + $0x3c] sm:$0x1] %v2030
  %s2039 = scalar_lea.vmem %s1, 5
  %v2040 = vld [vmem:[%s2039] ss:$8 sm:$0x3]
  %s2041 = scalar_lea.vmem %s1, 21
  %v2042 = vld [vmem:[%s2041] ss:$8 sm:$0x3]
  %s2043 = scalar_lea.vmem %s1, 37
  %v2044 = vld [vmem:[%s2043] ss:$8 sm:$0x3]
  %s2045 = scalar_lea.vmem %s1, 53
  %v2046 = vld [vmem:[%s2045] ss:$8 sm:$0x3]
  %s2047 = scalar_lea.vmem %s1, 69
  %v2048 = vld [vmem:[%s2047] ss:$8 sm:$0x3]
  %s2049 = scalar_lea.vmem %s1, 85
  %v2050 = vld [vmem:[%s2049] ss:$8 sm:$0x3]
  %s2051 = scalar_lea.vmem %s1, 101
  %v2052 = vld [vmem:[%s2051] ss:$8 sm:$0x3]
  %s2053 = scalar_lea.vmem %s1, 117
  %v2054 = vld [vmem:[%s2053] ss:$8 sm:$0x3]
  %v2055 = vsub.f32 %v2040, %v103
  %v2056 = vsub.f32 %v2042, %v117
  %v2057 = vsub.f32 %v2044, %v125
  %v2058 = vsub.f32 %v2046, %v127
  %v2059 = vsub.f32 %v2048, %v110
  %v2060 = vsub.f32 %v2050, %v124
  %v2061 = vsub.f32 %v2052, %v126
  %v2062 = vsub.f32 %v2054, %v128
  %v2063 = vmul.f32 %v2055, %v178
  %v2064 = vmul.f32 %v2056, %v192
  %v2065 = vmul.f32 %v2057, %v200
  %v2066 = vmul.f32 %v2058, %v202
  %v2067 = vmul.f32 %v2059, %v185
  %v2068 = vmul.f32 %v2060, %v199
  %v2069 = vmul.f32 %v2061, %v201
  %v2070 = vmul.f32 %v2062, %v203
  %v2079 = vcombine.low %v2023, %v2024
  %v2080 = vcombine.low %v2025, %v2026
  %v2081 = vcombine.low %v2027, %v2028
  %v2082 = vcombine.low %v2029, %v2030
  %v2084 = vunpack.c.l.s4 1966171168
  %v2085 = vunpack.c.0.s8 %v2084
  %v2086 = vlaneseq
  %v2087 = vshrl.u32 %v2086, 7
  %v2088 = vsub.s32 %v2085, %v2087
  %v2089 = vrot.slane %v2079, %v2088
  %v2091 = vunpack.c.l.s4 1966171168
  %v2092 = vunpack.c.0.s8 %v2091
  %v2093 = vlaneseq
  %v2094 = vshrl.u32 %v2093, 7
  %v2095 = vsub.s32 %v2092, %v2094
  %v2096 = vrot.slane %v2080, %v2095
  %v2098 = vunpack.c.l.s4 1966171168
  %v2099 = vunpack.c.0.s8 %v2098
  %v2100 = vlaneseq
  %v2101 = vshrl.u32 %v2100, 7
  %v2102 = vsub.s32 %v2099, %v2101
  %v2103 = vrot.slane %v2081, %v2102
  %v2105 = vunpack.c.l.s4 1966171168
  %v2106 = vunpack.c.0.s8 %v2105
  %v2107 = vlaneseq
  %v2108 = vshrl.u32 %v2107, 7
  %v2109 = vsub.s32 %v2106, %v2108
  %v2110 = vrot.slane %v2082, %v2109
  %v2111 = vcombine.low %v2089, %v2096
  %v2112 = vcombine.low %v2103, %v2110
  %v2114 = vunpack.c.l.s4 1966171168
  %v2115 = vunpack.c.0.s8 %v2114
  %v2116 = vlaneseq
  %v2117 = vshrl.u32 %v2116, 7
  %v2118 = vsub.s32 %v2115, %v2117
  %v2119 = vrot.slane %v2111, %v2118
  %v2121 = vunpack.c.l.s4 1966171168
  %v2122 = vunpack.c.0.s8 %v2121
  %v2123 = vlaneseq
  %v2124 = vshrl.u32 %v2123, 7
  %v2125 = vsub.s32 %v2122, %v2124
  %v2126 = vrot.slane %v2112, %v2125
  %v2127 = vcombine.low %v2119, %v2126
  %2129 = vmatprep.subr.mxu0 %v23
  %2130 = vmatpush1.msra.mxu0 %v22
  %2131 = vmatprep.subr.mxu0 %v25
  %2132 = vmatpush1.msra.mxu0 %v24
  %2133 = vmatprep.subr.mxu0 %v27
  %2134 = vmatpush1.msra.mxu0 %v26
  %2135 = vmatprep.subr.mxu0 %v29
  %2136 = vmatpush1.msra.mxu0 %v28
  %2137 = vmatprep.subr.mxu0 %v31
  %2138 = vmatpush1.msra.mxu0 %v30
  %2139 = vmatprep.subr.mxu0 %v33
  %2140 = vmatpush1.msra.mxu0 %v32
  %2141 = vmatprep.subr.mxu0 %v35
  %2142 = vmatpush1.msra.mxu0 %v34
  %2143 = vmatprep.subr.mxu0 %v37
  %2144 = vmatpush1.msra.mxu0 %v36
  %2145 = vmatprep.subr.mxu0 %v39
  %2146 = vmatpush1.msra.mxu0 %v38
  %2147 = vmatprep.subr.mxu0 %v41
  %2148 = vmatpush1.msra.mxu0 %v40
  %2149 = vmatprep.subr.mxu0 %v43
  %2150 = vmatpush1.msra.mxu0 %v42
  %2151 = vmatprep.subr.mxu0 %v45
  %2152 = vmatpush1.msra.mxu0 %v44
  %2153 = vmatprep.subr.mxu0 %v47
  %2154 = vmatpush1.msra.mxu0 %v46
  %2155 = vmatprep.subr.mxu0 %v49
  %2156 = vmatpush1.msra.mxu0 %v48
  %2157 = vmatprep.subr.mxu0 %v51
  %2158 = vmatpush1.msra.mxu0 %v50
  %2159 = vmatprep.subr.mxu0 %v53
  %2160 = vmatpush1.msra.mxu0 %v52
  %2161 = vmatprep.subr.mxu0 0.0
  %2162 = vmatpush1.msra.mxu0 0.0
  %2163 = vmatprep.subr.mxu0 0.0
  %2164 = vmatpush1.msra.mxu0 0.0
  %2165 = vmatprep.subr.mxu0 0.0
  %2166 = vmatpush1.msra.mxu0 0.0
  %2167 = vmatprep.subr.mxu0 0.0
  %2168 = vmatpush1.msra.mxu0 0.0
  %2169 = vmatprep.subr.mxu0 0.0
  %2170 = vmatpush1.msra.mxu0 0.0
  %2171 = vmatprep.subr.mxu0 0.0
  %2172 = vmatpush1.msra.mxu0 0.0
  %2173 = vmatprep.subr.mxu0 0.0
  %2174 = vmatpush1.msra.mxu0 0.0
  %2175 = vmatprep.subr.mxu0 0.0
  %2176 = vmatpush1.msra.mxu0 0.0
  %2177 = vmatprep.subr.mxu0 0.0
  %2178 = vmatpush1.msra.mxu0 0.0
  %2179 = vmatprep.subr.mxu0 0.0
  %2180 = vmatpush1.msra.mxu0 0.0
  %2181 = vmatprep.subr.mxu0 0.0
  %2182 = vmatpush1.msra.mxu0 0.0
  %2183 = vmatprep.subr.mxu0 0.0
  %2184 = vmatpush1.msra.mxu0 0.0
  %2185 = vmatprep.subr.mxu0 0.0
  %2186 = vmatpush1.msra.mxu0 0.0
  %2187 = vmatprep.subr.mxu0 0.0
  %2188 = vmatpush1.msra.mxu0 0.0
  %2189 = vmatprep.subr.mxu0 0.0
  %2190 = vmatpush1.msra.mxu0 0.0
  %2191 = vmatprep.subr.mxu0 0.0
  %2192 = vmatpush1.msra.mxu0 0.0
  %2193 = vmatprep.mubr.f32.mxu0 0.0
  %2194 = vmatmul.mubr.f32.gmra.mrb[0].mxu0 %v2127
  %v2195 = vpop.f32.mrb[0].mxu0
  %v2196 = vadd.f32 0.0, %v2195
  %v2197 = vpop.f32.mrb[0].mxu0
  %v2198 = vadd.f32 0.0, %v2197
  %2199 = vdwg.mxu0
  %v2200 = vadd.f32 %v2196, %v2198
  %2201 = vadd.xlane.f32.xlu0 %v2200
  %v2202 = vpop.xlane.xlu0 %2201
  %v2203 = vmul.f32 %v2196, %v2196
  %v2204 = vmul.f32 %v2198, %v2198
  %v2205 = vadd.f32 %v2203, %v2204
  %2206 = vadd.xlane.f32.xlu0 %v2205
  %v2207 = vpop.xlane.xlu0 %2206
  %v2208 = vmul.f32 %v2202, 0.015625
  %v2209 = vmul.f32 %v2207, 0.015625
  %v2210 = vmul.f32 %v2208, %v2208
  %v2211 = vsub.f32 %v2209, %v2210
  %v2212 = vmax.f32 %v2211, 0.0
  %v2213 = vsub.f32 %v2196, %v2208
  %v2214 = vsub.f32 %v2198, %v2208
  %v2215 = vadd.f32 %v2212, 1e-05
  %v2216 = vrsqrt.pop %v2215
  %v2217 = vmul.f32 %v2213, %v2216
  %v2218 = vmul.f32 %v2214, %v2216
  %v2221 = vcombine.low %v2217, %v2218
  %v2222 = vcombine.high %v2217, %v2218
  %v2224 = vunpack.c.l.s4 1966171168
  %v2225 = vunpack.c.0.s8 %v2224
  %v2226 = vlaneseq
  %v2227 = vshrl.u32 %v2226, 7
  %v2228 = vsub.s32 %v2225, %v2227
  %v2229 = vrot.slane %v2221, %v2228
  %v2231 = vunpack.c.l.s4 1966171168
  %v2232 = vunpack.c.0.s8 %v2231
  %v2233 = vlaneseq
  %v2234 = vshrl.u32 %v2233, 7
  %v2235 = vsub.s32 %v2232, %v2234
  %v2236 = vrot.slane %v2222, %v2235
  %v2237 = vcombine.high %v2229, %v2229
  %v2238 = vcombine.high %v2236, %v2236
  %v2240 = vunpack.c.l.s4 1966171168
  %v2241 = vunpack.c.0.s8 %v2240
  %v2242 = vlaneseq
  %v2243 = vshrl.u32 %v2242, 7
  %v2244 = vsub.s32 %v2241, %v2243
  %v2245 = vrot.slane %v2229, %v2244
  %v2247 = vunpack.c.l.s4 1966171168
  %v2248 = vunpack.c.0.s8 %v2247
  %v2249 = vlaneseq
  %v2250 = vshrl.u32 %v2249, 7
  %v2251 = vsub.s32 %v2248, %v2250
  %v2252 = vrot.slane %v2236, %v2251
  %v2254 = vunpack.c.l.s4 1966171168
  %v2255 = vunpack.c.0.s8 %v2254
  %v2256 = vlaneseq
  %v2257 = vshrl.u32 %v2256, 7
  %v2258 = vsub.s32 %v2255, %v2257
  %v2259 = vrot.slane %v2237, %v2258
  %v2261 = vunpack.c.l.s4 1966171168
  %v2262 = vunpack.c.0.s8 %v2261
  %v2263 = vlaneseq
  %v2264 = vshrl.u32 %v2263, 7
  %v2265 = vsub.s32 %v2262, %v2264
  %v2266 = vrot.slane %v2238, %v2265
  %v2267 = vcombine.high %v2245, %v2245
  %v2268 = vcombine.high %v2252, %v2252
  %v2269 = vcombine.high %v2259, %v2259
  %v2270 = vcombine.high %v2266, %v2266
  %v2279 = vadd.f32 %v2063, %v2245
  %v2280 = vadd.f32 %v2064, %v2259
  %v2281 = vadd.f32 %v2065, %v2267
  %v2282 = vadd.f32 %v2066, %v2269
  %v2283 = vadd.f32 %v2067, %v2252
  %v2284 = vadd.f32 %v2068, %v2266
  %v2285 = vadd.f32 %v2069, %v2268
  %v2286 = vadd.f32 %v2070, %v2270
  %v2295 = vrot.slane %v2279, 1
  %v2296 = vrot.slane %v2280, 1
  %v2297 = vrot.slane %v2281, 1
  %v2298 = vrot.slane %v2282, 1
  %v2299 = vrot.slane %v2283, 1
  %v2300 = vrot.slane %v2284, 1
  %v2301 = vrot.slane %v2285, 1
  %v2302 = vrot.slane %v2286, 1
  %v2311 = vxor.u32 %v2295, 2147483648
  %v2312 = vxor.u32 %v2296, 2147483648
  %v2313 = vxor.u32 %v2297, 2147483648
  %v2314 = vxor.u32 %v2298, 2147483648
  %v2315 = vxor.u32 %v2299, 2147483648
  %v2316 = vxor.u32 %v2300, 2147483648
  %v2317 = vxor.u32 %v2301, 2147483648
  %v2318 = vxor.u32 %v2302, 2147483648
  %v2319 = vmul.f32 %v2311, 1.442695
  %v2320 = vpow.pop %v2319
  %v2321 = vmul.f32 %v2312, 1.442695
  %v2322 = vpow.pop %v2321
  %v2323 = vmul.f32 %v2313, 1.442695
  %v2324 = vpow.pop %v2323
  %v2325 = vmul.f32 %v2314, 1.442695
  %v2326 = vpow.pop %v2325
  %v2327 = vmul.f32 %v2315, 1.442695
  %v2328 = vpow.pop %v2327
  %v2329 = vmul.f32 %v2316, 1.442695
  %v2330 = vpow.pop %v2329
  %v2331 = vmul.f32 %v2317, 1.442695
  %v2332 = vpow.pop %v2331
  %v2333 = vmul.f32 %v2318, 1.442695
  %v2334 = vpow.pop %v2333
  %v2335 = vadd.f32 %v2320, 1.0
  %v2336 = vadd.f32 %v2322, 1.0
  %v2337 = vadd.f32 %v2324, 1.0
  %v2338 = vadd.f32 %v2326, 1.0
  %v2339 = vadd.f32 %v2328, 1.0
  %v2340 = vadd.f32 %v2330, 1.0
  %v2341 = vadd.f32 %v2332, 1.0
  %v2342 = vadd.f32 %v2334, 1.0
  %v2343 = vrcp.pop %v2335
  %v2344 = vmul.f32 1.0, %v2343
  %v2345 = vrcp.pop %v2336
  %v2346 = vmul.f32 1.0, %v2345
  %v2347 = vrcp.pop %v2337
  %v2348 = vmul.f32 1.0, %v2347
  %v2349 = vrcp.pop %v2338
  %v2350 = vmul.f32 1.0, %v2349
  %v2351 = vrcp.pop %v2339
  %v2352 = vmul.f32 1.0, %v2351
  %v2353 = vrcp.pop %v2340
  %v2354 = vmul.f32 1.0, %v2353
  %v2355 = vrcp.pop %v2341
  %v2356 = vmul.f32 1.0, %v2355
  %v2357 = vrcp.pop %v2342
  %v2358 = vmul.f32 1.0, %v2357
  %v2359 = vmax.f32 %v2279, 0.0
  %v2360 = vmax.f32 %v2280, 0.0
  %v2361 = vmax.f32 %v2281, 0.0
  %v2362 = vmax.f32 %v2282, 0.0
  %v2363 = vmax.f32 %v2283, 0.0
  %v2364 = vmax.f32 %v2284, 0.0
  %v2365 = vmax.f32 %v2285, 0.0
  %v2366 = vmax.f32 %v2286, 0.0
  %v2367 = vsub.f32 %v2023, %v2359
  %v2368 = vsub.f32 %v2024, %v2360
  %v2369 = vsub.f32 %v2025, %v2361
  %v2370 = vsub.f32 %v2026, %v2362
  %v2371 = vsub.f32 %v2027, %v2363
  %v2372 = vsub.f32 %v2028, %v2364
  %v2373 = vsub.f32 %v2029, %v2365
  %v2374 = vsub.f32 %v2030, %v2366
  %v2375 = vmul.f32 %v2344, %v2367
  %v2376 = vmul.f32 %v2346, %v2368
  %v2377 = vmul.f32 %v2348, %v2369
  %v2378 = vmul.f32 %v2350, %v2370
  %v2379 = vmul.f32 %v2352, %v2371
  %v2380 = vmul.f32 %v2354, %v2372
  %v2381 = vmul.f32 %v2356, %v2373
  %v2382 = vmul.f32 %v2358, %v2374
  %v2383 = vadd.f32 %v2359, %v2375
  %v2384 = vadd.f32 %v2360, %v2376
  %v2385 = vadd.f32 %v2361, %v2377
  %v2386 = vadd.f32 %v2362, %v2378
  %v2387 = vadd.f32 %v2363, %v2379
  %v2388 = vadd.f32 %v2364, %v2380
  %v2389 = vadd.f32 %v2365, %v2381
  %v2390 = vadd.f32 %v2366, %v2382
  %2391 = vst [vmem:[%s3 + $0x5] sm:$0x1] %v2383
  %2392 = vst [vmem:[%s3 + $0xd] sm:$0x1] %v2384
  %2393 = vst [vmem:[%s3 + $0x15] sm:$0x1] %v2385
  %2394 = vst [vmem:[%s3 + $0x1d] sm:$0x1] %v2386
  %2395 = vst [vmem:[%s3 + $0x25] sm:$0x1] %v2387
  %2396 = vst [vmem:[%s3 + $0x2d] sm:$0x1] %v2388
  %2397 = vst [vmem:[%s3 + $0x35] sm:$0x1] %v2389
  %2398 = vst [vmem:[%s3 + $0x3d] sm:$0x1] %v2390
  %s2399 = scalar_lea.vmem %s1, 6
  %v2400 = vld [vmem:[%s2399] ss:$8 sm:$0x3]
  %s2401 = scalar_lea.vmem %s1, 22
  %v2402 = vld [vmem:[%s2401] ss:$8 sm:$0x3]
  %s2403 = scalar_lea.vmem %s1, 38
  %v2404 = vld [vmem:[%s2403] ss:$8 sm:$0x3]
  %s2405 = scalar_lea.vmem %s1, 54
  %v2406 = vld [vmem:[%s2405] ss:$8 sm:$0x3]
  %s2407 = scalar_lea.vmem %s1, 70
  %v2408 = vld [vmem:[%s2407] ss:$8 sm:$0x3]
  %s2409 = scalar_lea.vmem %s1, 86
  %v2410 = vld [vmem:[%s2409] ss:$8 sm:$0x3]
  %s2411 = scalar_lea.vmem %s1, 102
  %v2412 = vld [vmem:[%s2411] ss:$8 sm:$0x3]
  %s2413 = scalar_lea.vmem %s1, 118
  %v2414 = vld [vmem:[%s2413] ss:$8 sm:$0x3]
  %v2415 = vsub.f32 %v2400, %v103
  %v2416 = vsub.f32 %v2402, %v117
  %v2417 = vsub.f32 %v2404, %v125
  %v2418 = vsub.f32 %v2406, %v127
  %v2419 = vsub.f32 %v2408, %v110
  %v2420 = vsub.f32 %v2410, %v124
  %v2421 = vsub.f32 %v2412, %v126
  %v2422 = vsub.f32 %v2414, %v128
  %v2423 = vmul.f32 %v2415, %v178
  %v2424 = vmul.f32 %v2416, %v192
  %v2425 = vmul.f32 %v2417, %v200
  %v2426 = vmul.f32 %v2418, %v202
  %v2427 = vmul.f32 %v2419, %v185
  %v2428 = vmul.f32 %v2420, %v199
  %v2429 = vmul.f32 %v2421, %v201
  %v2430 = vmul.f32 %v2422, %v203
  %v2439 = vcombine.low %v2383, %v2384
  %v2440 = vcombine.low %v2385, %v2386
  %v2441 = vcombine.low %v2387, %v2388
  %v2442 = vcombine.low %v2389, %v2390
  %v2444 = vunpack.c.l.s4 1966171168
  %v2445 = vunpack.c.0.s8 %v2444
  %v2446 = vlaneseq
  %v2447 = vshrl.u32 %v2446, 7
  %v2448 = vsub.s32 %v2445, %v2447
  %v2449 = vrot.slane %v2439, %v2448
  %v2451 = vunpack.c.l.s4 1966171168
  %v2452 = vunpack.c.0.s8 %v2451
  %v2453 = vlaneseq
  %v2454 = vshrl.u32 %v2453, 7
  %v2455 = vsub.s32 %v2452, %v2454
  %v2456 = vrot.slane %v2440, %v2455
  %v2458 = vunpack.c.l.s4 1966171168
  %v2459 = vunpack.c.0.s8 %v2458
  %v2460 = vlaneseq
  %v2461 = vshrl.u32 %v2460, 7
  %v2462 = vsub.s32 %v2459, %v2461
  %v2463 = vrot.slane %v2441, %v2462
  %v2465 = vunpack.c.l.s4 1966171168
  %v2466 = vunpack.c.0.s8 %v2465
  %v2467 = vlaneseq
  %v2468 = vshrl.u32 %v2467, 7
  %v2469 = vsub.s32 %v2466, %v2468
  %v2470 = vrot.slane %v2442, %v2469
  %v2471 = vcombine.low %v2449, %v2456
  %v2472 = vcombine.low %v2463, %v2470
  %v2474 = vunpack.c.l.s4 1966171168
  %v2475 = vunpack.c.0.s8 %v2474
  %v2476 = vlaneseq
  %v2477 = vshrl.u32 %v2476, 7
  %v2478 = vsub.s32 %v2475, %v2477
  %v2479 = vrot.slane %v2471, %v2478
  %v2481 = vunpack.c.l.s4 1966171168
  %v2482 = vunpack.c.0.s8 %v2481
  %v2483 = vlaneseq
  %v2484 = vshrl.u32 %v2483, 7
  %v2485 = vsub.s32 %v2482, %v2484
  %v2486 = vrot.slane %v2472, %v2485
  %v2487 = vcombine.low %v2479, %v2486
  %2489 = vmatprep.subr.mxu0 %v23
  %2490 = vmatpush1.msra.mxu0 %v22
  %2491 = vmatprep.subr.mxu0 %v25
  %2492 = vmatpush1.msra.mxu0 %v24
  %2493 = vmatprep.subr.mxu0 %v27
  %2494 = vmatpush1.msra.mxu0 %v26
  %2495 = vmatprep.subr.mxu0 %v29
  %2496 = vmatpush1.msra.mxu0 %v28
  %2497 = vmatprep.subr.mxu0 %v31
  %2498 = vmatpush1.msra.mxu0 %v30
  %2499 = vmatprep.subr.mxu0 %v33
  %2500 = vmatpush1.msra.mxu0 %v32
  %2501 = vmatprep.subr.mxu0 %v35
  %2502 = vmatpush1.msra.mxu0 %v34
  %2503 = vmatprep.subr.mxu0 %v37
  %2504 = vmatpush1.msra.mxu0 %v36
  %2505 = vmatprep.subr.mxu0 %v39
  %2506 = vmatpush1.msra.mxu0 %v38
  %2507 = vmatprep.subr.mxu0 %v41
  %2508 = vmatpush1.msra.mxu0 %v40
  %2509 = vmatprep.subr.mxu0 %v43
  %2510 = vmatpush1.msra.mxu0 %v42
  %2511 = vmatprep.subr.mxu0 %v45
  %2512 = vmatpush1.msra.mxu0 %v44
  %2513 = vmatprep.subr.mxu0 %v47
  %2514 = vmatpush1.msra.mxu0 %v46
  %2515 = vmatprep.subr.mxu0 %v49
  %2516 = vmatpush1.msra.mxu0 %v48
  %2517 = vmatprep.subr.mxu0 %v51
  %2518 = vmatpush1.msra.mxu0 %v50
  %2519 = vmatprep.subr.mxu0 %v53
  %2520 = vmatpush1.msra.mxu0 %v52
  %2521 = vmatprep.subr.mxu0 0.0
  %2522 = vmatpush1.msra.mxu0 0.0
  %2523 = vmatprep.subr.mxu0 0.0
  %2524 = vmatpush1.msra.mxu0 0.0
  %2525 = vmatprep.subr.mxu0 0.0
  %2526 = vmatpush1.msra.mxu0 0.0
  %2527 = vmatprep.subr.mxu0 0.0
  %2528 = vmatpush1.msra.mxu0 0.0
  %2529 = vmatprep.subr.mxu0 0.0
  %2530 = vmatpush1.msra.mxu0 0.0
  %2531 = vmatprep.subr.mxu0 0.0
  %2532 = vmatpush1.msra.mxu0 0.0
  %2533 = vmatprep.subr.mxu0 0.0
  %2534 = vmatpush1.msra.mxu0 0.0
  %2535 = vmatprep.subr.mxu0 0.0
  %2536 = vmatpush1.msra.mxu0 0.0
  %2537 = vmatprep.subr.mxu0 0.0
  %2538 = vmatpush1.msra.mxu0 0.0
  %2539 = vmatprep.subr.mxu0 0.0
  %2540 = vmatpush1.msra.mxu0 0.0
  %2541 = vmatprep.subr.mxu0 0.0
  %2542 = vmatpush1.msra.mxu0 0.0
  %2543 = vmatprep.subr.mxu0 0.0
  %2544 = vmatpush1.msra.mxu0 0.0
  %2545 = vmatprep.subr.mxu0 0.0
  %2546 = vmatpush1.msra.mxu0 0.0
  %2547 = vmatprep.subr.mxu0 0.0
  %2548 = vmatpush1.msra.mxu0 0.0
  %2549 = vmatprep.subr.mxu0 0.0
  %2550 = vmatpush1.msra.mxu0 0.0
  %2551 = vmatprep.subr.mxu0 0.0
  %2552 = vmatpush1.msra.mxu0 0.0
  %2553 = vmatprep.mubr.f32.mxu0 0.0
  %2554 = vmatmul.mubr.f32.gmra.mrb[0].mxu0 %v2487
  %v2555 = vpop.f32.mrb[0].mxu0
  %v2556 = vadd.f32 0.0, %v2555
  %v2557 = vpop.f32.mrb[0].mxu0
  %v2558 = vadd.f32 0.0, %v2557
  %2559 = vdwg.mxu0
  %v2560 = vadd.f32 %v2556, %v2558
  %2561 = vadd.xlane.f32.xlu0 %v2560
  %v2562 = vpop.xlane.xlu0 %2561
  %v2563 = vmul.f32 %v2556, %v2556
  %v2564 = vmul.f32 %v2558, %v2558
  %v2565 = vadd.f32 %v2563, %v2564
  %2566 = vadd.xlane.f32.xlu0 %v2565
  %v2567 = vpop.xlane.xlu0 %2566
  %v2568 = vmul.f32 %v2562, 0.015625
  %v2569 = vmul.f32 %v2567, 0.015625
  %v2570 = vmul.f32 %v2568, %v2568
  %v2571 = vsub.f32 %v2569, %v2570
  %v2572 = vmax.f32 %v2571, 0.0
  %v2573 = vsub.f32 %v2556, %v2568
  %v2574 = vsub.f32 %v2558, %v2568
  %v2575 = vadd.f32 %v2572, 1e-05
  %v2576 = vrsqrt.pop %v2575
  %v2577 = vmul.f32 %v2573, %v2576
  %v2578 = vmul.f32 %v2574, %v2576
  %v2581 = vcombine.low %v2577, %v2578
  %v2582 = vcombine.high %v2577, %v2578
  %v2584 = vunpack.c.l.s4 1966171168
  %v2585 = vunpack.c.0.s8 %v2584
  %v2586 = vlaneseq
  %v2587 = vshrl.u32 %v2586, 7
  %v2588 = vsub.s32 %v2585, %v2587
  %v2589 = vrot.slane %v2581, %v2588
  %v2591 = vunpack.c.l.s4 1966171168
  %v2592 = vunpack.c.0.s8 %v2591
  %v2593 = vlaneseq
  %v2594 = vshrl.u32 %v2593, 7
  %v2595 = vsub.s32 %v2592, %v2594
  %v2596 = vrot.slane %v2582, %v2595
  %v2597 = vcombine.high %v2589, %v2589
  %v2598 = vcombine.high %v2596, %v2596
  %v2600 = vunpack.c.l.s4 1966171168
  %v2601 = vunpack.c.0.s8 %v2600
  %v2602 = vlaneseq
  %v2603 = vshrl.u32 %v2602, 7
  %v2604 = vsub.s32 %v2601, %v2603
  %v2605 = vrot.slane %v2589, %v2604
  %v2607 = vunpack.c.l.s4 1966171168
  %v2608 = vunpack.c.0.s8 %v2607
  %v2609 = vlaneseq
  %v2610 = vshrl.u32 %v2609, 7
  %v2611 = vsub.s32 %v2608, %v2610
  %v2612 = vrot.slane %v2596, %v2611
  %v2614 = vunpack.c.l.s4 1966171168
  %v2615 = vunpack.c.0.s8 %v2614
  %v2616 = vlaneseq
  %v2617 = vshrl.u32 %v2616, 7
  %v2618 = vsub.s32 %v2615, %v2617
  %v2619 = vrot.slane %v2597, %v2618
  %v2621 = vunpack.c.l.s4 1966171168
  %v2622 = vunpack.c.0.s8 %v2621
  %v2623 = vlaneseq
  %v2624 = vshrl.u32 %v2623, 7
  %v2625 = vsub.s32 %v2622, %v2624
  %v2626 = vrot.slane %v2598, %v2625
  %v2627 = vcombine.high %v2605, %v2605
  %v2628 = vcombine.high %v2612, %v2612
  %v2629 = vcombine.high %v2619, %v2619
  %v2630 = vcombine.high %v2626, %v2626
  %v2639 = vadd.f32 %v2423, %v2605
  %v2640 = vadd.f32 %v2424, %v2619
  %v2641 = vadd.f32 %v2425, %v2627
  %v2642 = vadd.f32 %v2426, %v2629
  %v2643 = vadd.f32 %v2427, %v2612
  %v2644 = vadd.f32 %v2428, %v2626
  %v2645 = vadd.f32 %v2429, %v2628
  %v2646 = vadd.f32 %v2430, %v2630
  %v2655 = vrot.slane %v2639, 1
  %v2656 = vrot.slane %v2640, 1
  %v2657 = vrot.slane %v2641, 1
  %v2658 = vrot.slane %v2642, 1
  %v2659 = vrot.slane %v2643, 1
  %v2660 = vrot.slane %v2644, 1
  %v2661 = vrot.slane %v2645, 1
  %v2662 = vrot.slane %v2646, 1
  %v2671 = vxor.u32 %v2655, 2147483648
  %v2672 = vxor.u32 %v2656, 2147483648
  %v2673 = vxor.u32 %v2657, 2147483648
  %v2674 = vxor.u32 %v2658, 2147483648
  %v2675 = vxor.u32 %v2659, 2147483648
  %v2676 = vxor.u32 %v2660, 2147483648
  %v2677 = vxor.u32 %v2661, 2147483648
  %v2678 = vxor.u32 %v2662, 2147483648
  %v2679 = vmul.f32 %v2671, 1.442695
  %v2680 = vpow.pop %v2679
  %v2681 = vmul.f32 %v2672, 1.442695
  %v2682 = vpow.pop %v2681
  %v2683 = vmul.f32 %v2673, 1.442695
  %v2684 = vpow.pop %v2683
  %v2685 = vmul.f32 %v2674, 1.442695
  %v2686 = vpow.pop %v2685
  %v2687 = vmul.f32 %v2675, 1.442695
  %v2688 = vpow.pop %v2687
  %v2689 = vmul.f32 %v2676, 1.442695
  %v2690 = vpow.pop %v2689
  %v2691 = vmul.f32 %v2677, 1.442695
  %v2692 = vpow.pop %v2691
  %v2693 = vmul.f32 %v2678, 1.442695
  %v2694 = vpow.pop %v2693
  %v2695 = vadd.f32 %v2680, 1.0
  %v2696 = vadd.f32 %v2682, 1.0
  %v2697 = vadd.f32 %v2684, 1.0
  %v2698 = vadd.f32 %v2686, 1.0
  %v2699 = vadd.f32 %v2688, 1.0
  %v2700 = vadd.f32 %v2690, 1.0
  %v2701 = vadd.f32 %v2692, 1.0
  %v2702 = vadd.f32 %v2694, 1.0
  %v2703 = vrcp.pop %v2695
  %v2704 = vmul.f32 1.0, %v2703
  %v2705 = vrcp.pop %v2696
  %v2706 = vmul.f32 1.0, %v2705
  %v2707 = vrcp.pop %v2697
  %v2708 = vmul.f32 1.0, %v2707
  %v2709 = vrcp.pop %v2698
  %v2710 = vmul.f32 1.0, %v2709
  %v2711 = vrcp.pop %v2699
  %v2712 = vmul.f32 1.0, %v2711
  %v2713 = vrcp.pop %v2700
  %v2714 = vmul.f32 1.0, %v2713
  %v2715 = vrcp.pop %v2701
  %v2716 = vmul.f32 1.0, %v2715
  %v2717 = vrcp.pop %v2702
  %v2718 = vmul.f32 1.0, %v2717
  %v2719 = vmax.f32 %v2639, 0.0
  %v2720 = vmax.f32 %v2640, 0.0
  %v2721 = vmax.f32 %v2641, 0.0
  %v2722 = vmax.f32 %v2642, 0.0
  %v2723 = vmax.f32 %v2643, 0.0
  %v2724 = vmax.f32 %v2644, 0.0
  %v2725 = vmax.f32 %v2645, 0.0
  %v2726 = vmax.f32 %v2646, 0.0
  %v2727 = vsub.f32 %v2383, %v2719
  %v2728 = vsub.f32 %v2384, %v2720
  %v2729 = vsub.f32 %v2385, %v2721
  %v2730 = vsub.f32 %v2386, %v2722
  %v2731 = vsub.f32 %v2387, %v2723
  %v2732 = vsub.f32 %v2388, %v2724
  %v2733 = vsub.f32 %v2389, %v2725
  %v2734 = vsub.f32 %v2390, %v2726
  %v2735 = vmul.f32 %v2704, %v2727
  %v2736 = vmul.f32 %v2706, %v2728
  %v2737 = vmul.f32 %v2708, %v2729
  %v2738 = vmul.f32 %v2710, %v2730
  %v2739 = vmul.f32 %v2712, %v2731
  %v2740 = vmul.f32 %v2714, %v2732
  %v2741 = vmul.f32 %v2716, %v2733
  %v2742 = vmul.f32 %v2718, %v2734
  %v2743 = vadd.f32 %v2719, %v2735
  %v2744 = vadd.f32 %v2720, %v2736
  %v2745 = vadd.f32 %v2721, %v2737
  %v2746 = vadd.f32 %v2722, %v2738
  %v2747 = vadd.f32 %v2723, %v2739
  %v2748 = vadd.f32 %v2724, %v2740
  %v2749 = vadd.f32 %v2725, %v2741
  %v2750 = vadd.f32 %v2726, %v2742
  %2751 = vst [vmem:[%s3 + $0x6] sm:$0x1] %v2743
  %2752 = vst [vmem:[%s3 + $0xe] sm:$0x1] %v2744
  %2753 = vst [vmem:[%s3 + $0x16] sm:$0x1] %v2745
  %2754 = vst [vmem:[%s3 + $0x1e] sm:$0x1] %v2746
  %2755 = vst [vmem:[%s3 + $0x26] sm:$0x1] %v2747
  %2756 = vst [vmem:[%s3 + $0x2e] sm:$0x1] %v2748
  %2757 = vst [vmem:[%s3 + $0x36] sm:$0x1] %v2749
  %2758 = vst [vmem:[%s3 + $0x3e] sm:$0x1] %v2750
  %s2759 = scalar_lea.vmem %s1, 7
  %v2760 = vld [vmem:[%s2759] ss:$8 sm:$0x3]
  %s2761 = scalar_lea.vmem %s1, 23
  %v2762 = vld [vmem:[%s2761] ss:$8 sm:$0x3]
  %s2763 = scalar_lea.vmem %s1, 39
  %v2764 = vld [vmem:[%s2763] ss:$8 sm:$0x3]
  %s2765 = scalar_lea.vmem %s1, 55
  %v2766 = vld [vmem:[%s2765] ss:$8 sm:$0x3]
  %s2767 = scalar_lea.vmem %s1, 71
  %v2768 = vld [vmem:[%s2767] ss:$8 sm:$0x3]
  %s2769 = scalar_lea.vmem %s1, 87
  %v2770 = vld [vmem:[%s2769] ss:$8 sm:$0x3]
  %s2771 = scalar_lea.vmem %s1, 103
  %v2772 = vld [vmem:[%s2771] ss:$8 sm:$0x3]
  %s2773 = scalar_lea.vmem %s1, 119
  %v2774 = vld [vmem:[%s2773] ss:$8 sm:$0x3]
  %v2775 = vsub.f32 %v2760, %v103
  %v2776 = vsub.f32 %v2762, %v117
  %v2777 = vsub.f32 %v2764, %v125
  %v2778 = vsub.f32 %v2766, %v127
  %v2779 = vsub.f32 %v2768, %v110
  %v2780 = vsub.f32 %v2770, %v124
  %v2781 = vsub.f32 %v2772, %v126
  %v2782 = vsub.f32 %v2774, %v128
  %v2783 = vmul.f32 %v2775, %v178
  %v2784 = vmul.f32 %v2776, %v192
  %v2785 = vmul.f32 %v2777, %v200
  %v2786 = vmul.f32 %v2778, %v202
  %v2787 = vmul.f32 %v2779, %v185
  %v2788 = vmul.f32 %v2780, %v199
  %v2789 = vmul.f32 %v2781, %v201
  %v2790 = vmul.f32 %v2782, %v203
  %v2799 = vcombine.low %v2743, %v2744
  %v2800 = vcombine.low %v2745, %v2746
  %v2801 = vcombine.low %v2747, %v2748
  %v2802 = vcombine.low %v2749, %v2750
  %v2804 = vunpack.c.l.s4 1966171168
  %v2805 = vunpack.c.0.s8 %v2804
  %v2806 = vlaneseq
  %v2807 = vshrl.u32 %v2806, 7
  %v2808 = vsub.s32 %v2805, %v2807
  %v2809 = vrot.slane %v2799, %v2808
  %v2811 = vunpack.c.l.s4 1966171168
  %v2812 = vunpack.c.0.s8 %v2811
  %v2813 = vlaneseq
  %v2814 = vshrl.u32 %v2813, 7
  %v2815 = vsub.s32 %v2812, %v2814
  %v2816 = vrot.slane %v2800, %v2815
  %v2818 = vunpack.c.l.s4 1966171168
  %v2819 = vunpack.c.0.s8 %v2818
  %v2820 = vlaneseq
  %v2821 = vshrl.u32 %v2820, 7
  %v2822 = vsub.s32 %v2819, %v2821
  %v2823 = vrot.slane %v2801, %v2822
  %v2825 = vunpack.c.l.s4 1966171168
  %v2826 = vunpack.c.0.s8 %v2825
  %v2827 = vlaneseq
  %v2828 = vshrl.u32 %v2827, 7
  %v2829 = vsub.s32 %v2826, %v2828
  %v2830 = vrot.slane %v2802, %v2829
  %v2831 = vcombine.low %v2809, %v2816
  %v2832 = vcombine.low %v2823, %v2830
  %v2834 = vunpack.c.l.s4 1966171168
  %v2835 = vunpack.c.0.s8 %v2834
  %v2836 = vlaneseq
  %v2837 = vshrl.u32 %v2836, 7
  %v2838 = vsub.s32 %v2835, %v2837
  %v2839 = vrot.slane %v2831, %v2838
  %v2841 = vunpack.c.l.s4 1966171168
  %v2842 = vunpack.c.0.s8 %v2841
  %v2843 = vlaneseq
  %v2844 = vshrl.u32 %v2843, 7
  %v2845 = vsub.s32 %v2842, %v2844
  %v2846 = vrot.slane %v2832, %v2845
  %v2847 = vcombine.low %v2839, %v2846
  %2849 = vmatprep.subr.mxu0 %v23
  %2850 = vmatpush1.msra.mxu0 %v22
  %2851 = vmatprep.subr.mxu0 %v25
  %2852 = vmatpush1.msra.mxu0 %v24
  %2853 = vmatprep.subr.mxu0 %v27
  %2854 = vmatpush1.msra.mxu0 %v26
  %2855 = vmatprep.subr.mxu0 %v29
  %2856 = vmatpush1.msra.mxu0 %v28
  %2857 = vmatprep.subr.mxu0 %v31
  %2858 = vmatpush1.msra.mxu0 %v30
  %2859 = vmatprep.subr.mxu0 %v33
  %2860 = vmatpush1.msra.mxu0 %v32
  %2861 = vmatprep.subr.mxu0 %v35
  %2862 = vmatpush1.msra.mxu0 %v34
  %2863 = vmatprep.subr.mxu0 %v37
  %2864 = vmatpush1.msra.mxu0 %v36
  %2865 = vmatprep.subr.mxu0 %v39
  %2866 = vmatpush1.msra.mxu0 %v38
  %2867 = vmatprep.subr.mxu0 %v41
  %2868 = vmatpush1.msra.mxu0 %v40
  %2869 = vmatprep.subr.mxu0 %v43
  %2870 = vmatpush1.msra.mxu0 %v42
  %2871 = vmatprep.subr.mxu0 %v45
  %2872 = vmatpush1.msra.mxu0 %v44
  %2873 = vmatprep.subr.mxu0 %v47
  %2874 = vmatpush1.msra.mxu0 %v46
  %2875 = vmatprep.subr.mxu0 %v49
  %2876 = vmatpush1.msra.mxu0 %v48
  %2877 = vmatprep.subr.mxu0 %v51
  %2878 = vmatpush1.msra.mxu0 %v50
  %2879 = vmatprep.subr.mxu0 %v53
  %2880 = vmatpush1.msra.mxu0 %v52
  %2881 = vmatprep.subr.mxu0 0.0
  %2882 = vmatpush1.msra.mxu0 0.0
  %2883 = vmatprep.subr.mxu0 0.0
  %2884 = vmatpush1.msra.mxu0 0.0
  %2885 = vmatprep.subr.mxu0 0.0
  %2886 = vmatpush1.msra.mxu0 0.0
  %2887 = vmatprep.subr.mxu0 0.0
  %2888 = vmatpush1.msra.mxu0 0.0
  %2889 = vmatprep.subr.mxu0 0.0
  %2890 = vmatpush1.msra.mxu0 0.0
  %2891 = vmatprep.subr.mxu0 0.0
  %2892 = vmatpush1.msra.mxu0 0.0
  %2893 = vmatprep.subr.mxu0 0.0
  %2894 = vmatpush1.msra.mxu0 0.0
  %2895 = vmatprep.subr.mxu0 0.0
  %2896 = vmatpush1.msra.mxu0 0.0
  %2897 = vmatprep.subr.mxu0 0.0
  %2898 = vmatpush1.msra.mxu0 0.0
  %2899 = vmatprep.subr.mxu0 0.0
  %2900 = vmatpush1.msra.mxu0 0.0
  %2901 = vmatprep.subr.mxu0 0.0
  %2902 = vmatpush1.msra.mxu0 0.0
  %2903 = vmatprep.subr.mxu0 0.0
  %2904 = vmatpush1.msra.mxu0 0.0
  %2905 = vmatprep.subr.mxu0 0.0
  %2906 = vmatpush1.msra.mxu0 0.0
  %2907 = vmatprep.subr.mxu0 0.0
  %2908 = vmatpush1.msra.mxu0 0.0
  %2909 = vmatprep.subr.mxu0 0.0
  %2910 = vmatpush1.msra.mxu0 0.0
  %2911 = vmatprep.subr.mxu0 0.0
  %2912 = vmatpush1.msra.mxu0 0.0
  %2913 = vmatprep.mubr.f32.mxu0 0.0
  %2914 = vmatmul.mubr.f32.gmra.mrb[0].mxu0 %v2847
  %v2915 = vpop.f32.mrb[0].mxu0
  %v2916 = vadd.f32 0.0, %v2915
  %v2917 = vpop.f32.mrb[0].mxu0
  %v2918 = vadd.f32 0.0, %v2917
  %2919 = vdwg.mxu0
  %v2920 = vadd.f32 %v2916, %v2918
  %2921 = vadd.xlane.f32.xlu0 %v2920
  %v2922 = vpop.xlane.xlu0 %2921
  %v2923 = vmul.f32 %v2916, %v2916
  %v2924 = vmul.f32 %v2918, %v2918
  %v2925 = vadd.f32 %v2923, %v2924
  %2926 = vadd.xlane.f32.xlu0 %v2925
  %v2927 = vpop.xlane.xlu0 %2926
  %v2928 = vmul.f32 %v2922, 0.015625
  %v2929 = vmul.f32 %v2927, 0.015625
  %v2930 = vmul.f32 %v2928, %v2928
  %v2931 = vsub.f32 %v2929, %v2930
  %v2932 = vmax.f32 %v2931, 0.0
  %v2933 = vsub.f32 %v2916, %v2928
  %v2934 = vsub.f32 %v2918, %v2928
  %v2935 = vadd.f32 %v2932, 1e-05
  %v2936 = vrsqrt.pop %v2935
  %v2937 = vmul.f32 %v2933, %v2936
  %v2938 = vmul.f32 %v2934, %v2936
  %v2941 = vcombine.low %v2937, %v2938
  %v2942 = vcombine.high %v2937, %v2938
  %v2944 = vunpack.c.l.s4 1966171168
  %v2945 = vunpack.c.0.s8 %v2944
  %v2946 = vlaneseq
  %v2947 = vshrl.u32 %v2946, 7
  %v2948 = vsub.s32 %v2945, %v2947
  %v2949 = vrot.slane %v2941, %v2948
  %v2951 = vunpack.c.l.s4 1966171168
  %v2952 = vunpack.c.0.s8 %v2951
  %v2953 = vlaneseq
  %v2954 = vshrl.u32 %v2953, 7
  %v2955 = vsub.s32 %v2952, %v2954
  %v2956 = vrot.slane %v2942, %v2955
  %v2957 = vcombine.high %v2949, %v2949
  %v2958 = vcombine.high %v2956, %v2956
  %v2960 = vunpack.c.l.s4 1966171168
  %v2961 = vunpack.c.0.s8 %v2960
  %v2962 = vlaneseq
  %v2963 = vshrl.u32 %v2962, 7
  %v2964 = vsub.s32 %v2961, %v2963
  %v2965 = vrot.slane %v2949, %v2964
  %v2967 = vunpack.c.l.s4 1966171168
  %v2968 = vunpack.c.0.s8 %v2967
  %v2969 = vlaneseq
  %v2970 = vshrl.u32 %v2969, 7
  %v2971 = vsub.s32 %v2968, %v2970
  %v2972 = vrot.slane %v2956, %v2971
  %v2974 = vunpack.c.l.s4 1966171168
  %v2975 = vunpack.c.0.s8 %v2974
  %v2976 = vlaneseq
  %v2977 = vshrl.u32 %v2976, 7
  %v2978 = vsub.s32 %v2975, %v2977
  %v2979 = vrot.slane %v2957, %v2978
  %v2981 = vunpack.c.l.s4 1966171168
  %v2982 = vunpack.c.0.s8 %v2981
  %v2983 = vlaneseq
  %v2984 = vshrl.u32 %v2983, 7
  %v2985 = vsub.s32 %v2982, %v2984
  %v2986 = vrot.slane %v2958, %v2985
  %v2987 = vcombine.high %v2965, %v2965
  %v2988 = vcombine.high %v2972, %v2972
  %v2989 = vcombine.high %v2979, %v2979
  %v2990 = vcombine.high %v2986, %v2986
  %v2999 = vadd.f32 %v2783, %v2965
  %v3000 = vadd.f32 %v2784, %v2979
  %v3001 = vadd.f32 %v2785, %v2987
  %v3002 = vadd.f32 %v2786, %v2989
  %v3003 = vadd.f32 %v2787, %v2972
  %v3004 = vadd.f32 %v2788, %v2986
  %v3005 = vadd.f32 %v2789, %v2988
  %v3006 = vadd.f32 %v2790, %v2990
  %v3015 = vrot.slane %v2999, 1
  %v3016 = vrot.slane %v3000, 1
  %v3017 = vrot.slane %v3001, 1
  %v3018 = vrot.slane %v3002, 1
  %v3019 = vrot.slane %v3003, 1
  %v3020 = vrot.slane %v3004, 1
  %v3021 = vrot.slane %v3005, 1
  %v3022 = vrot.slane %v3006, 1
  %v3031 = vxor.u32 %v3015, 2147483648
  %v3032 = vxor.u32 %v3016, 2147483648
  %v3033 = vxor.u32 %v3017, 2147483648
  %v3034 = vxor.u32 %v3018, 2147483648
  %v3035 = vxor.u32 %v3019, 2147483648
  %v3036 = vxor.u32 %v3020, 2147483648
  %v3037 = vxor.u32 %v3021, 2147483648
  %v3038 = vxor.u32 %v3022, 2147483648
  %v3039 = vmul.f32 %v3031, 1.442695
  %v3040 = vpow.pop %v3039
  %v3041 = vmul.f32 %v3032, 1.442695
  %v3042 = vpow.pop %v3041
  %v3043 = vmul.f32 %v3033, 1.442695
  %v3044 = vpow.pop %v3043
  %v3045 = vmul.f32 %v3034, 1.442695
  %v3046 = vpow.pop %v3045
  %v3047 = vmul.f32 %v3035, 1.442695
  %v3048 = vpow.pop %v3047
  %v3049 = vmul.f32 %v3036, 1.442695
  %v3050 = vpow.pop %v3049
  %v3051 = vmul.f32 %v3037, 1.442695
  %v3052 = vpow.pop %v3051
  %v3053 = vmul.f32 %v3038, 1.442695
  %v3054 = vpow.pop %v3053
  %v3055 = vadd.f32 %v3040, 1.0
  %v3056 = vadd.f32 %v3042, 1.0
  %v3057 = vadd.f32 %v3044, 1.0
  %v3058 = vadd.f32 %v3046, 1.0
  %v3059 = vadd.f32 %v3048, 1.0
  %v3060 = vadd.f32 %v3050, 1.0
  %v3061 = vadd.f32 %v3052, 1.0
  %v3062 = vadd.f32 %v3054, 1.0
  %v3063 = vrcp.pop %v3055
  %v3064 = vmul.f32 1.0, %v3063
  %v3065 = vrcp.pop %v3056
  %v3066 = vmul.f32 1.0, %v3065
  %v3067 = vrcp.pop %v3057
  %v3068 = vmul.f32 1.0, %v3067
  %v3069 = vrcp.pop %v3058
  %v3070 = vmul.f32 1.0, %v3069
  %v3071 = vrcp.pop %v3059
  %v3072 = vmul.f32 1.0, %v3071
  %v3073 = vrcp.pop %v3060
  %v3074 = vmul.f32 1.0, %v3073
  %v3075 = vrcp.pop %v3061
  %v3076 = vmul.f32 1.0, %v3075
  %v3077 = vrcp.pop %v3062
  %v3078 = vmul.f32 1.0, %v3077
  %v3079 = vmax.f32 %v2999, 0.0
  %v3080 = vmax.f32 %v3000, 0.0
  %v3081 = vmax.f32 %v3001, 0.0
  %v3082 = vmax.f32 %v3002, 0.0
  %v3083 = vmax.f32 %v3003, 0.0
  %v3084 = vmax.f32 %v3004, 0.0
  %v3085 = vmax.f32 %v3005, 0.0
  %v3086 = vmax.f32 %v3006, 0.0
  %v3087 = vsub.f32 %v2743, %v3079
  %v3088 = vsub.f32 %v2744, %v3080
  %v3089 = vsub.f32 %v2745, %v3081
  %v3090 = vsub.f32 %v2746, %v3082
  %v3091 = vsub.f32 %v2747, %v3083
  %v3092 = vsub.f32 %v2748, %v3084
  %v3093 = vsub.f32 %v2749, %v3085
  %v3094 = vsub.f32 %v2750, %v3086
  %v3095 = vmul.f32 %v3064, %v3087
  %v3096 = vmul.f32 %v3066, %v3088
  %v3097 = vmul.f32 %v3068, %v3089
  %v3098 = vmul.f32 %v3070, %v3090
  %v3099 = vmul.f32 %v3072, %v3091
  %v3100 = vmul.f32 %v3074, %v3092
  %v3101 = vmul.f32 %v3076, %v3093
  %v3102 = vmul.f32 %v3078, %v3094
  %v3103 = vadd.f32 %v3079, %v3095
  %v3104 = vadd.f32 %v3080, %v3096
  %v3105 = vadd.f32 %v3081, %v3097
  %v3106 = vadd.f32 %v3082, %v3098
  %v3107 = vadd.f32 %v3083, %v3099
  %v3108 = vadd.f32 %v3084, %v3100
  %v3109 = vadd.f32 %v3085, %v3101
  %v3110 = vadd.f32 %v3086, %v3102
  %3111 = vst [vmem:[%s3 + $0x7] sm:$0x1] %v3103
  %3112 = vst [vmem:[%s3 + $0xf] sm:$0x1] %v3104
  %3113 = vst [vmem:[%s3 + $0x17] sm:$0x1] %v3105
  %3114 = vst [vmem:[%s3 + $0x1f] sm:$0x1] %v3106
  %3115 = vst [vmem:[%s3 + $0x27] sm:$0x1] %v3107
  %3116 = vst [vmem:[%s3 + $0x2f] sm:$0x1] %v3108
  %3117 = vst [vmem:[%s3 + $0x37] sm:$0x1] %v3109
  %3118 = vst [vmem:[%s3 + $0x3f] sm:$0x1] %v3110
  %v3127 = vcombine.low %v3103, %v3104
  %v3128 = vcombine.low %v3105, %v3106
  %v3129 = vcombine.low %v3107, %v3108
  %v3130 = vcombine.low %v3109, %v3110
  %v3132 = vunpack.c.l.s4 1966171168
  %v3133 = vunpack.c.0.s8 %v3132
  %v3134 = vlaneseq
  %v3135 = vshrl.u32 %v3134, 7
  %v3136 = vsub.s32 %v3133, %v3135
  %v3137 = vrot.slane %v3127, %v3136
  %v3139 = vunpack.c.l.s4 1966171168
  %v3140 = vunpack.c.0.s8 %v3139
  %v3141 = vlaneseq
  %v3142 = vshrl.u32 %v3141, 7
  %v3143 = vsub.s32 %v3140, %v3142
  %v3144 = vrot.slane %v3128, %v3143
  %v3146 = vunpack.c.l.s4 1966171168
  %v3147 = vunpack.c.0.s8 %v3146
  %v3148 = vlaneseq
  %v3149 = vshrl.u32 %v3148, 7
  %v3150 = vsub.s32 %v3147, %v3149
  %v3151 = vrot.slane %v3129, %v3150
  %v3153 = vunpack.c.l.s4 1966171168
  %v3154 = vunpack.c.0.s8 %v3153
  %v3155 = vlaneseq
  %v3156 = vshrl.u32 %v3155, 7
  %v3157 = vsub.s32 %v3154, %v3156
  %v3158 = vrot.slane %v3130, %v3157
  %v3159 = vcombine.low %v3137, %v3144
  %v3160 = vcombine.low %v3151, %v3158
  %v3162 = vunpack.c.l.s4 1966171168
  %v3163 = vunpack.c.0.s8 %v3162
  %v3164 = vlaneseq
  %v3165 = vshrl.u32 %v3164, 7
  %v3166 = vsub.s32 %v3163, %v3165
  %v3167 = vrot.slane %v3159, %v3166
  %v3169 = vunpack.c.l.s4 1966171168
  %v3170 = vunpack.c.0.s8 %v3169
  %v3171 = vlaneseq
  %v3172 = vshrl.u32 %v3171, 7
  %v3173 = vsub.s32 %v3170, %v3172
  %v3174 = vrot.slane %v3160, %v3173
  %v3175 = vcombine.low %v3167, %v3174
  %3177 = vst [vmem:[#allocation2] sm:$0xff] %v3175
  // Predicated region
  $region18: #{ligru_layer_forward.3} parent=0 // pred_check
    _
  $region19: #{ligru_layer_forward.3} parent=0 // pred_check_branch
    %3179 = sbr.rel (0) target = $region21
  $region20: #{ligru_layer_forward.3} parent=0 // pred_region
    _
  $region21: #{ligru_layer_forward.3} parent=0 // pred_fallthru
    _
  // Predicated region
  $region22: #{ligru_layer_forward.3} parent=0 // pred_check
    _
  $region23: #{ligru_layer_forward.3} parent=0 // pred_check_branch
    %3181 = sbr.rel (0) target = $region25
  $region24: #{ligru_layer_forward.3} parent=0 // pred_region
    _
  $region25: #{ligru_layer_forward.3} parent=0 // pred_fallthru
    _

</llo_original>
